<compile_context>
chip_gen: v5e
topology: v5e:2x2
jax: 0.10.0
libtpu: 0.0.40
codegen_flags: <defaults>
</compile_context>

<pallas_src>
import functools

import jax
import jax.numpy as jnp
from jax.experimental import pallas as pl
from jax.experimental.pallas import tpu as pltpu

EPS = 1e-5
LANE = 128
SUB = 8


def _round_up(x, m):
    return (x + m - 1) // m * m


def _vmem_limit(bytes_needed):
    # 2x headroom, clamped to [8 MiB, 50 MiB] (safely below v7x's 64 MiB physical VMEM).
    return int(min(50 * 2**20, max(2 * bytes_needed, 8 * 2**20)))


def _pick_row_block(n_batch, m_im, target=512):
    """Largest row block = d*m_im (d | n_batch) that is sublane-aligned and <= ~target."""
    best = None
    for d in range(1, n_batch + 1):
        if n_batch % d == 0 and (d * m_im) % SUB == 0 and d * m_im <= max(target, m_im):
            best = d * m_im
    return best if best is not None else n_batch * m_im


# ---------------------------------------------------------------------------
# Kernel A: in-kernel shifted-tap conv (k*k MXU matmuls, f32 acc) + BN partial stats
# ---------------------------------------------------------------------------
def _conv_tap_stats_kernel(*refs, taps, ho, wo, nphase):
    phase_refs = refs[:nphase]
    w_ref = refs[nphase]
    o_ref, s_ref = refs[nphase + 1], refs[nphase + 2]
    cout = o_ref.shape[-1]

    acc = jnp.zeros((ho * wo, cout), jnp.float32)
    for t, (p, r0, c0) in enumerate(taps):
        # Static, contiguous slice of this image's phase tile -> (ho, wo, cin) bf16.
        xa = phase_refs[p][0, r0:r0 + ho, c0:c0 + wo, :]
        # Collapse leading dims (minor dim unchanged).  Trivial when wo % 8 == 0.
        xa = xa.reshape(ho * wo, xa.shape[-1])
        acc = acc + jnp.dot(xa, w_ref[t], preferred_element_type=jnp.float32)

    # bf16 writeback halves HBM traffic; BN statistics come from the f32 accumulator.
    o_ref[0] = acc.astype(o_ref.dtype)

    @pl.when(pl.program_id(0) == 0)
    def _():
        s_ref[...] = jnp.zeros_like(s_ref)

    ssum = jnp.sum(acc, axis=0, keepdims=True)
    ssq = jnp.sum(acc * acc, axis=0, keepdims=True)
    s_ref[...] += jnp.concatenate(
        [ssum, ssq, jnp.zeros((6, cout), jnp.float32)], axis=0)


def conv_bn_raw_stats(x, w_taps, k, stride, pad):
    """x: (N, H, W, Cin_pad) bf16; w_taps: (k*k, Cin_pad, Cout_pad) bf16.

    Returns raw conv output (N, Ho*Wo, Cout_pad) bf16, accumulated stats (8, Cout_pad)
    f32 (row 0 = sum, row 1 = sum of squares over all N*Ho*Wo positions), and (N,Ho,Wo).
    """
    n, h, w, cin = x.shape
    assert w_taps.shape[0] == k * k and w_taps.shape[1] == cin
    cout = w_taps.shape[-1]
    ho = (h + 2 * pad - k) // stride + 1
    wo = (w + 2 * pad - k) // stride + 1

    xp = x
    if pad:
        xp = jnp.pad(xp, ((0, 0), (pad, pad), (pad, pad), (0, 0)))
    # Phase-decompose by stride so every tap is a contiguous static slice in the kernel.
    if stride > 1:
        hp, wp = xp.shape[1], xp.shape[2]
        hr, wr = _round_up(hp, stride), _round_up(wp, stride)
        if (hr, wr) != (hp, wp):
            xp = jnp.pad(xp, ((0, 0), (0, hr - hp), (0, wr - wp), (0, 0)))
        phases = [xp[:, i::stride, j::stride, :]
                  for i in range(stride) for j in range(stride)]
    else:
        phases = [xp]

    taps, used, order = [], {}, []
    for kh in range(k):
        for kw in range(k):
            pidx = (kh % stride) * stride + (kw % stride)
            if pidx not in used:
                used[pidx] = len(used)
                order.append(pidx)
            taps.append((used[pidx], kh // stride, kw // stride))
    phase_in = [phases[p] for p in order]          # only phases actually referenced

    kernel = functools.partial(_conv_tap_stats_kernel,
                               taps=tuple(taps), ho=ho, wo=wo, nphase=len(phase_in))

    in_specs = [pl.BlockSpec((1,) + p.shape[1:], lambda i: (i, 0, 0, 0))
                for p in phase_in]
    in_specs.append(pl.BlockSpec(w_taps.shape, lambda i: (0, 0, 0)))

    # VMEM footprint estimate (double-buffered inputs/outputs + f32 accumulator temps).
    blk_in = sum(p.shape[1] * p.shape[2] * p.shape[3] * 2 for p in phase_in)
    blk_w = int(w_taps.size) * 2
    blk_out = ho * wo * cout * 2
    acc_b = ho * wo * cout * 4
    need = 2 * blk_in + 2 * blk_w + 2 * blk_out + 3 * acc_b + 2 * 8 * cout * 4

    flops = 2 * n * ho * wo * k * k * cin * cout
    bytes_acc = int(x.size) * 2 + blk_w + n * blk_out + 8 * cout * 4

    raw, stats = pl.pallas_call(
        kernel,
        grid=(n,),
        in_specs=in_specs,
        out_specs=[pl.BlockSpec((1, ho * wo, cout), lambda i: (i, 0, 0)),
                   pl.BlockSpec((8, cout), lambda i: (0, 0))],
        out_shape=[jax.ShapeDtypeStruct((n, ho * wo, cout), jnp.bfloat16),
                   jax.ShapeDtypeStruct((8, cout), jnp.float32)],
        compiler_params=pltpu.CompilerParams(
            # stats output is a cross-step accumulator -> batch axis must be "arbitrary"
            dimension_semantics=("arbitrary",),
            vmem_limit_bytes=_vmem_limit(need)),
        cost_estimate=pl.CostEstimate(flops=flops, transcendentals=0,
                                      bytes_accessed=bytes_acc),
    )(*phase_in, w_taps)
    return raw, stats, (n, ho, wo)


# ---------------------------------------------------------------------------
# Kernel B: fused BN-normalize (+ residual add / residual-BN) (+ ReLU), f32 VPU math
# ---------------------------------------------------------------------------
def _finalize_kernel(*refs, residual, relu):
    if residual == "bn":
        x_ref, s_ref, b_ref, r_ref, rs_ref, rb_ref, o_ref = refs
    elif residual == "identity":
        x_ref, s_ref, b_ref, r_ref, o_ref = refs
    else:
        x_ref, s_ref, b_ref, o_ref = refs
    y = x_ref[...].astype(jnp.float32) * s_ref[...] + b_ref[...]
    if residual == "identity":
        y = y + r_ref[...].astype(jnp.float32)
    elif residual == "bn":
        y = y + (r_ref[...].astype(jnp.float32) * rs_ref[...] + rb_ref[...])
    if relu:
        y = jnp.maximum(y, 0.0)
    o_ref[...] = y.astype(o_ref.dtype)


def bn_finalize(raw2d, scale, bias, row_block, *, residual=None, r_scale=None,
                r_bias=None, relu=False, out_dtype=jnp.float32, residual_mode="none"):
    rows, cp = raw2d.shape
    inputs = [raw2d, scale, bias]
    in_specs = [pl.BlockSpec((row_block, cp), lambda i: (i, 0)),
                pl.BlockSpec((1, cp), lambda i: (0, 0)),
                pl.BlockSpec((1, cp), lambda i: (0, 0))]
    if residual_mode != "none":
        inputs.append(residual)
        in_specs.append(pl.BlockSpec((row_block, cp), lambda i: (i, 0)))
    if residual_mode == "bn":
        inputs += [r_scale, r_bias]
        in_specs += [pl.BlockSpec((1, cp), lambda i: (0, 0)),
                     pl.BlockSpec((1, cp), lambda i: (0, 0))]
    kernel = functools.partial(_finalize_kernel, residual=residual_mode, relu=relu)
    return pl.pallas_call(
        kernel,
        grid=(rows // row_block,),
        in_specs=in_specs,
        out_specs=pl.BlockSpec((row_block, cp), lambda i: (i, 0)),
        out_shape=jax.ShapeDtypeStruct((rows, cp), out_dtype),
        compiler_params=pltpu.CompilerParams(
            dimension_semantics=("parallel",),
            vmem_limit_bytes=_vmem_limit(row_block * cp * 32)),
    )(*inputs)


# ---------------------------------------------------------------------------
# Plain-JAX glue
# ---------------------------------------------------------------------------
def fold_bn_stats(stats, gamma_pad, beta_pad, m_true):
    """(sum, sum_sq) -> per-channel (scale, bias) for y = x*scale + bias (training BN)."""
    # TODO(synk): E[x^2]-E[x]^2 in f32 can cancel for very large M; a centered second
    # pass (Welford) would be safer for huge batches.
    mean = stats[0] / m_true
    var = jnp.maximum(stats[1] / m_true - mean * mean, 0.0)
    scale = gamma_pad * jax.lax.rsqrt(var + EPS)
    bias = beta_pad - mean * scale
    return scale[None, :], bias[None, :]


def _prep_conv_weights(w_oihw, gamma, beta, cin_pad, cout_pad):
    cout, cin, kh, kw = w_oihw.shape
    taps = jnp.transpose(w_oihw, (2, 3, 1, 0)).reshape(kh * kw, cin, cout)
    taps = jnp.pad(taps, ((0, 0), (0, cin_pad - cin), (0, cout_pad - cout)))
    taps = taps.astype(jnp.bfloat16)
    g = jnp.pad(gamma.astype(jnp.float32), (0, cout_pad - cout))
    b = jnp.pad(beta.astype(jnp.float32), (0, cout_pad - cout))
    return taps, g, b


def prepare_block_params(params, in_planes, planes, stride):
    """One-time packing: weights -> (k*k, Cin_pad, Cout_pad) bf16 taps, padded gamma/beta."""
    cin_x = _round_up(in_planes, 16)   # bf16 sublane-friendly input-channel pad
    cp = _round_up(planes, LANE)       # lane-dense output channels
    prep = {}
    prep["w1"], prep["g1"], prep["b1"] = _prep_conv_weights(
        params["w1"], params["g1"], params["b1"], cin_x, cp)
    # conv2 consumes o1 directly at its padded width cp (padded channels are exact zeros).
    prep["w2"], prep["g2"], prep["b2"] = _prep_conv_weights(
        params["w2"], params["g2"], params["b2"], cp, cp)
    if stride != 1 or in_planes != planes:
        prep["ws"], prep["gs"], prep["bs"] = _prep_conv_weights(
            params["ws"], params["gs"], params["bs"], cin_x, cp)
    return prep


def basic_private_block(x_nchw, prep, in_planes, planes, stride):
    n = x_nchw.shape[0]
    cin_x = _round_up(in_planes, 16)
    cp = _round_up(planes, LANE)

    x_nhwc = jnp.transpose(x_nchw, (0, 2, 3, 1)).astype(jnp.float32)   # NCHW -> NHWC
    x_pad = x_nhwc
    if cin_x != in_planes:
        x_pad = jnp.pad(x_nhwc, ((0, 0), (0, 0), (0, 0), (0, cin_x - in_planes)))
    x_bf16 = x_pad.astype(jnp.bfloat16)   # cast once; feeds conv1 and the conv shortcut

    # --- convbnrelu_1: 3x3, stride s, pad 1, BN + ReLU ---------------------------------
    raw1, st1, (_, ho1, wo1) = conv_bn_raw_stats(x_bf16, prep["w1"], 3, stride, 1)
    m1 = n * ho1 * wo1
    sc1, bi1 = fold_bn_stats(st1, prep["g1"], prep["b1"], m1)
    rb1 = _pick_row_block(n, ho1 * wo1)
    o1_flat = bn_finalize(raw1.reshape(m1, cp), sc1, bi1, rb1,
                          relu=True, out_dtype=jnp.bfloat16)
    o1 = o1_flat.reshape(n, ho1, wo1, cp)          # bf16, padded channels are exact zero

    # --- convbn_2: 3x3, stride 1, pad 1, BN (residual + final ReLU fused below) --------
    raw2, st2, (_, ho2, wo2) = conv_bn_raw_stats(o1, prep["w2"], 3, 1, 1)
    m2 = n * ho2 * wo2
    sc2, bi2 = fold_bn_stats(st2, prep["g2"], prep["b2"], m2)

    # --- shortcut: conv1x1-BN (raw, normalized inside kernel B) or identity ------------
    if stride != 1 or in_planes != planes:
        raws, sts, (_, hos, wos) = conv_bn_raw_stats(x_bf16, prep["ws"], 1, stride, 0)
        assert (hos, wos) == (ho2, wo2), ((hos, wos), (ho2, wo2))
        rsc, rbi = fold_bn_stats(sts, prep["gs"], prep["bs"], m2)
        residual, rmode = raws.reshape(m2, cp), "bn"
    else:
        # identity: feed x directly (f32, no scale/bias work); pad channels only if the
        # channel count is not already lane-dense (only tiny toy configs).
        res = x_nhwc.reshape(m2, in_planes)
        if in_planes != cp:
            res = jnp.pad(res, ((0, 0), (0, cp - in_planes)))
        residual, rsc, rbi, rmode = res, None, None, "identity"

    rb2 = _pick_row_block(n, ho2 * wo2)
    out_flat = bn_finalize(raw2.reshape(m2, cp), sc2, bi2, rb2,
                           residual=residual, r_scale=rsc, r_bias=rbi,
                           relu=True, out_dtype=jnp.float32, residual_mode=rmode)
    out = out_flat[:, :planes].reshape(n, ho2, wo2, planes)
    return jnp.transpose(out, (0, 3, 1, 2))                            # NHWC -> NCHW


# ---------------------------------------------------------------------------
# Pure-JAX reference for verification
# ---------------------------------------------------------------------------
def _ref_conv_bn(x_nchw, w, gamma, beta, stride, pad, relu):
    y = jax.lax.conv_general_dilated(
        x_nchw, w, (stride, stride), [(pad, pad), (pad, pad)],
        dimension_numbers=("NCHW", "OIHW", "NCHW"),
        precision=jax.lax.Precision.HIGHEST)
    mu = y.mean(axis=(0, 2, 3), keepdims=True)
    var = jnp.square(y - mu).mean(axis=(0, 2, 3), keepdims=True)
    y = (y - mu) * gamma.reshape(1, -1, 1, 1) * jax.lax.rsqrt(var + EPS) \
        + beta.reshape(1, -1, 1, 1)
    return jnp.maximum(y, 0.0) if relu else y


def ref_block(x, p, in_planes, planes, stride):
    o1 = _ref_conv_bn(x, p["w1"], p["g1"], p["b1"], stride, 1, True)
    o2 = _ref_conv_bn(o1, p["w2"], p["g2"], p["b2"], 1, 1, False)
    if stride != 1 or in_planes != planes:
        sc = _ref_conv_bn(x, p["ws"], p["gs"], p["bs"], stride, 0, False)
    else:
        sc = x
    return jnp.maximum(o2 + sc, 0.0)


if __name__ == "__main__":
    import numpy as np

    def make_params(key, in_planes, planes, with_shortcut):
        ks = jax.random.split(key, 9)
        params = dict(
            w1=0.1 * jax.random.normal(ks[0], (planes, in_planes, 3, 3), jnp.float32),
            g1=1.0 + 0.1 * jax.random.normal(ks[1], (planes,), jnp.float32),
            b1=0.1 * jax.random.normal(ks[2], (planes,), jnp.float32),
            w2=0.1 * jax.random.normal(ks[3], (planes, planes, 3, 3), jnp.float32),
            g2=1.0 + 0.1 * jax.random.normal(ks[4], (planes,), jnp.float32),
            b2=0.1 * jax.random.normal(ks[5], (planes,), jnp.float32),
        )
        if with_shortcut:
            params.update(
                ws=0.1 * jax.random.normal(ks[6], (planes, in_planes, 1, 1), jnp.float32),
                gs=1.0 + 0.1 * jax.random.normal(ks[7], (planes,), jnp.float32),
                bs=0.1 * jax.random.normal(ks[8], (planes,), jnp.float32),
            )
        return params

    key = jax.random.PRNGKey(0)
    k1, k2, k3, k4 = jax.random.split(key, 4)

    # Config A: downsampling block (stride 2, channel change) -> conv1x1-BN shortcut.
    N, Cin, H, W, planes, stride = 2, 4, 16, 16, 8, 2
    x = jax.random.normal(k1, (N, Cin, H, W), jnp.float32)
    params = make_params(k2, Cin, planes, True)
    prep = prepare_block_params(params, Cin, planes, stride)     # one-time weight packing
    fwd = jax.jit(functools.partial(basic_private_block,
                                    in_planes=Cin, planes=planes, stride=stride))
    out = jax.block_until_ready(fwd(x, prep))
    assert out.shape == (N, planes, H // stride, W // stride), out.shape
    ref = ref_block(x, params, Cin, planes, stride)
    # bf16 MXU inputs + bf16 intermediates (f32 acc / f32 BN stats) vs f32 HIGHEST ref.
    np.testing.assert_allclose(np.asarray(out), np.asarray(ref), rtol=5e-2, atol=5e-2)

    # Config B: identity-shortcut block (stride 1, same channels).
    N2, C2, H2, W2 = 2, 8, 16, 16
    x2 = jax.random.normal(k3, (N2, C2, H2, W2), jnp.float32)
    params2 = make_params(k4, C2, C2, False)
    prep2 = prepare_block_params(params2, C2, C2, 1)
    fwd2 = jax.jit(functools.partial(basic_private_block,
                                     in_planes=C2, planes=C2, stride=1))
    out2 = jax.block_until_ready(fwd2(x2, prep2))
    assert out2.shape == (N2, C2, H2, W2), out2.shape
    ref2 = ref_block(x2, params2, C2, C2, 1)
    np.testing.assert_allclose(np.asarray(out2), np.asarray(ref2), rtol=5e-2, atol=5e-2)

    print("KERNEL_OK")
</pallas_src>

<mosaic_0001>
module attributes {stable_mosaic.version = 11 : i64} {
  func.func @_conv_tap_stats_kernel(%arg0: i32, %arg1: memref<1x8x8x16xbf16, #tpu.memory_space<vmem>>, %arg2: memref<1x16x128xbf16, #tpu.memory_space<vmem>>, %arg3: memref<1x64x128xbf16, #tpu.memory_space<vmem>>, %arg4: memref<8x128xf32, #tpu.memory_space<vmem>>) attributes {dimension_semantics = [#tpu.dimension_semantics<arbitrary>], iteration_bounds = array<i64: 2>, scalar_prefetch = 0 : i64, scratch_operands = 0 : i64, tpu.core_type = #tpu.core_type<tc>, window_params = [{transform_indices = @transform_0, window_bounds = array<i64: 1, 8, 8, 16>}, {pipeline_mode = #tpu.pipeline_mode<synchronous>, transform_indices = @transform_1, window_bounds = array<i64: 1, 16, 128>}, {transform_indices = @transform_2, window_bounds = array<i64: 1, 64, 128>}, {pipeline_mode = #tpu.pipeline_mode<synchronous>, transform_indices = @transform_3, window_bounds = array<i64: 8, 128>}]} {
    %cst = arith.constant 0.000000e+00 : f32
    %0 = vector.broadcast %cst : f32 to vector<64x128xf32>
    %c0 = arith.constant 0 : index
    %c0_0 = arith.constant 0 : index
    %c0_1 = arith.constant 0 : index
    %c0_2 = arith.constant 0 : index
    %1 = vector.load %arg1[%c0, %c0_0, %c0_1, %c0_2] : memref<1x8x8x16xbf16, #tpu.memory_space<vmem>>, vector<1x8x8x16xbf16>
    %2 = vector.shape_cast %1 : vector<1x8x8x16xbf16> to vector<8x8x16xbf16>
    %3 = vector.shape_cast %2 : vector<8x8x16xbf16> to vector<64x16xbf16>
    %c0_3 = arith.constant 0 : index
    %c0_4 = arith.constant 0 : index
    %c0_5 = arith.constant 0 : index
    %4 = vector.load %arg2[%c0_3, %c0_4, %c0_5] : memref<1x16x128xbf16, #tpu.memory_space<vmem>>, vector<1x16x128xbf16>
    %5 = vector.shape_cast %4 : vector<1x16x128xbf16> to vector<16x128xbf16>
    %cst_6 = arith.constant dense<0.000000e+00> : vector<64x128xf32>
    %6 = tpu.matmul %3, %5, %cst_6 {dimension_numbers = #tpu.dot_dimension_numbers<[1], [0], [0], [1], [0, 0, 1, 1], [], []>} : vector<64x16xbf16>, vector<16x128xbf16>, vector<64x128xf32> -> vector<64x128xf32>
    %7 = arith.addf %0, %6 : vector<64x128xf32>
    %8 = arith.truncf %7 : vector<64x128xf32> to vector<64x128xbf16>
    %c0_7 = arith.constant 0 : index
    %c0_8 = arith.constant 0 : index
    %c0_9 = arith.constant 0 : index
    %9 = vector.load %arg3[%c0_7, %c0_8, %c0_9] : memref<1x64x128xbf16, #tpu.memory_space<vmem>>, vector<1x64x128xbf16>
    %10 = vector.shape_cast %9 : vector<1x64x128xbf16> to vector<64x128xbf16>
    %11 = vector.shape_cast %8 : vector<64x128xbf16> to vector<1x64x128xbf16>
    tpu.vector_store %arg3[%c0_7, %c0_8, %c0_9], %11 {strides = array<i32>} : memref<1x64x128xbf16, #tpu.memory_space<vmem>>, vector<1x64x128xbf16>,
    %c0_i32 = arith.constant 0 : i32
    %12 = arith.cmpi eq, %arg0, %c0_i32 : i32
    %13 = arith.extui %12 : i1 to i32
    %c0_i32_10 = arith.constant 0 : i32
    %14 = arith.cmpi ne, %13, %c0_i32_10 : i32
    scf.if %14 {
      %cst_18 = arith.constant 0.000000e+00 : f32
      %25 = vector.broadcast %cst_18 : f32 to vector<8x128xf32>
      %c0_19 = arith.constant 0 : index
      %c0_20 = arith.constant 0 : index
      %26 = vector.load %arg4[%c0_19, %c0_20] : memref<8x128xf32, #tpu.memory_space<vmem>>, vector<8x128xf32>
      tpu.vector_store %arg4[%c0_19, %c0_20], %25 {strides = array<i32>} : memref<8x128xf32, #tpu.memory_space<vmem>>, vector<8x128xf32>,
    } else {
    }
    %cst_11 = arith.constant dense<0.000000e+00> : vector<128xf32>
    %15 = vector.multi_reduction <add>, %7, %cst_11 [0] : vector<64x128xf32> to vector<128xf32>
    %16 = vector.shape_cast %15 : vector<128xf32> to vector<1x128xf32>
    %17 = arith.mulf %7, %7 : vector<64x128xf32>
    %cst_12 = arith.constant dense<0.000000e+00> : vector<128xf32>
    %18 = vector.multi_reduction <add>, %17, %cst_12 [0] : vector<64x128xf32> to vector<128xf32>
    %19 = vector.shape_cast %18 : vector<128xf32> to vector<1x128xf32>
    %c0_13 = arith.constant 0 : index
    %c0_14 = arith.constant 0 : index
    %20 = vector.load %arg4[%c0_13, %c0_14] : memref<8x128xf32, #tpu.memory_space<vmem>>, vector<8x128xf32>
    %cst_15 = arith.constant 0.000000e+00 : f32
    %21 = vector.broadcast %cst_15 : f32 to vector<6x128xf32>
    %22 = tpu.concatenate %16, %19, %21 in 0 : vector<1x128xf32>, vector<1x128xf32>, vector<6x128xf32> -> vector<8x128xf32>
    %23 = arith.addf %20, %22 : vector<8x128xf32>
    %c0_16 = arith.constant 0 : index
    %c0_17 = arith.constant 0 : index
    %24 = vector.load %arg4[%c0_16, %c0_17] : memref<8x128xf32, #tpu.memory_space<vmem>>, vector<8x128xf32>
    tpu.vector_store %arg4[%c0_16, %c0_17], %23 {strides = array<i32>} : memref<8x128xf32, #tpu.memory_space<vmem>>, vector<8x128xf32>,
    return
  }
  func.func @transform_0(%arg0: i32) -> (i32, i32, i32, i32) {
    %c0_i32 = arith.constant 0 : i32
    %c0_i32_0 = arith.constant 0 : i32
    %c0_i32_1 = arith.constant 0 : i32
    %c0_i32_2 = arith.constant 0 : i32
    return %arg0, %c0_i32, %c0_i32_0, %c0_i32_1 : i32, i32, i32, i32
  }
  func.func @transform_1(%arg0: i32) -> (i32, i32, i32) {
    %c0_i32 = arith.constant 0 : i32
    %c0_i32_0 = arith.constant 0 : i32
    %c0_i32_1 = arith.constant 0 : i32
    %c0_i32_2 = arith.constant 0 : i32
    return %c0_i32, %c0_i32_0, %c0_i32_1 : i32, i32, i32
  }
  func.func @transform_2(%arg0: i32) -> (i32, i32, i32) {
    %c0_i32 = arith.constant 0 : i32
    %c0_i32_0 = arith.constant 0 : i32
    %c0_i32_1 = arith.constant 0 : i32
    return %arg0, %c0_i32, %c0_i32_0 : i32, i32, i32
  }
  func.func @transform_3(%arg0: i32) -> (i32, i32) {
    %c0_i32 = arith.constant 0 : i32
    %c0_i32_0 = arith.constant 0 : i32
    %c0_i32_1 = arith.constant 0 : i32
    return %c0_i32, %c0_i32_0 : i32, i32
  }
}

module attributes {stable_mosaic.version = 11 : i64} {
  func.func @_finalize_kernel(%arg0: i32, %arg1: memref<128x128xbf16, #tpu.memory_space<vmem>>, %arg2: memref<1x128xf32, #tpu.memory_space<vmem>>, %arg3: memref<1x128xf32, #tpu.memory_space<vmem>>, %arg4: memref<128x128xbf16, #tpu.memory_space<vmem>>) attributes {dimension_semantics = [#tpu.dimension_semantics<parallel>], iteration_bounds = array<i64: 1>, scalar_prefetch = 0 : i64, scratch_operands = 0 : i64, tpu.core_type = #tpu.core_type<tc>, window_params = [{transform_indices = @transform_0, window_bounds = array<i64: 128, 128>}, {pipeline_mode = #tpu.pipeline_mode<synchronous>, transform_indices = @transform_1, window_bounds = array<i64: 1, 128>}, {pipeline_mode = #tpu.pipeline_mode<synchronous>, transform_indices = @transform_2, window_bounds = array<i64: 1, 128>}, {transform_indices = @transform_3, window_bounds = array<i64: 128, 128>}]} {
    %c0 = arith.constant 0 : index
    %c0_0 = arith.constant 0 : index
    %0 = vector.load %arg1[%c0, %c0_0] : memref<128x128xbf16, #tpu.memory_space<vmem>>, vector<128x128xbf16>
    %1 = arith.extf %0 : vector<128x128xbf16> to vector<128x128xf32>
    %c0_1 = arith.constant 0 : index
    %c0_2 = arith.constant 0 : index
    %2 = vector.load %arg2[%c0_1, %c0_2] : memref<1x128xf32, #tpu.memory_space<vmem>>, vector<1x128xf32>
    %3 = vector.broadcast %2 : vector<1x128xf32> to vector<128x128xf32>
    %4 = arith.mulf %1, %3 : vector<128x128xf32>
    %c0_3 = arith.constant 0 : index
    %c0_4 = arith.constant 0 : index
    %5 = vector.load %arg3[%c0_3, %c0_4] : memref<1x128xf32, #tpu.memory_space<vmem>>, vector<1x128xf32>
    %6 = vector.broadcast %5 : vector<1x128xf32> to vector<128x128xf32>
    %7 = arith.addf %4, %6 : vector<128x128xf32>
    %cst = arith.constant 0.000000e+00 : f32
    %8 = vector.broadcast %cst : f32 to vector<128x128xf32>
    %9 = arith.maximumf %7, %8 : vector<128x128xf32>
    %10 = arith.truncf %9 : vector<128x128xf32> to vector<128x128xbf16>
    %c0_5 = arith.constant 0 : index
    %c0_6 = arith.constant 0 : index
    %11 = vector.load %arg4[%c0_5, %c0_6] : memref<128x128xbf16, #tpu.memory_space<vmem>>, vector<128x128xbf16>
    tpu.vector_store %arg4[%c0_5, %c0_6], %10 {strides = array<i32>} : memref<128x128xbf16, #tpu.memory_space<vmem>>, vector<128x128xbf16>,
    return
  }
  func.func @transform_0(%arg0: i32) -> (i32, i32) {
    %c0_i32 = arith.constant 0 : i32
    %c0_i32_0 = arith.constant 0 : i32
    return %arg0, %c0_i32 : i32, i32
  }
  func.func @transform_1(%arg0: i32) -> (i32, i32) {
    %c0_i32 = arith.constant 0 : i32
    %c0_i32_0 = arith.constant 0 : i32
    %c0_i32_1 = arith.constant 0 : i32
    return %c0_i32, %c0_i32_0 : i32, i32
  }
  func.func @transform_2(%arg0: i32) -> (i32, i32) {
    %c0_i32 = arith.constant 0 : i32
    %c0_i32_0 = arith.constant 0 : i32
    %c0_i32_1 = arith.constant 0 : i32
    return %c0_i32, %c0_i32_0 : i32, i32
  }
  func.func @transform_3(%arg0: i32) -> (i32, i32) {
    %c0_i32 = arith.constant 0 : i32
    %c0_i32_0 = arith.constant 0 : i32
    return %arg0, %c0_i32 : i32, i32
  }
}

module attributes {stable_mosaic.version = 11 : i64} {
  func.func @_conv_tap_stats_kernel(%arg0: i32, %arg1: memref<1x9x9x16xbf16, #tpu.memory_space<vmem>>, %arg2: memref<1x9x9x16xbf16, #tpu.memory_space<vmem>>, %arg3: memref<1x9x9x16xbf16, #tpu.memory_space<vmem>>, %arg4: memref<1x9x9x16xbf16, #tpu.memory_space<vmem>>, %arg5: memref<9x16x128xbf16, #tpu.memory_space<vmem>>, %arg6: memref<1x64x128xbf16, #tpu.memory_space<vmem>>, %arg7: memref<8x128xf32, #tpu.memory_space<vmem>>) attributes {dimension_semantics = [#tpu.dimension_semantics<arbitrary>], iteration_bounds = array<i64: 2>, scalar_prefetch = 0 : i64, scratch_operands = 0 : i64, tpu.core_type = #tpu.core_type<tc>, window_params = [{transform_indices = @transform_0, window_bounds = array<i64: 1, 9, 9, 16>}, {transform_indices = @transform_1, window_bounds = array<i64: 1, 9, 9, 16>}, {transform_indices = @transform_2, window_bounds = array<i64: 1, 9, 9, 16>}, {transform_indices = @transform_3, window_bounds = array<i64: 1, 9, 9, 16>}, {pipeline_mode = #tpu.pipeline_mode<synchronous>, transform_indices = @transform_4, window_bounds = array<i64: 9, 16, 128>}, {transform_indices = @transform_5, window_bounds = array<i64: 1, 64, 128>}, {pipeline_mode = #tpu.pipeline_mode<synchronous>, transform_indices = @transform_6, window_bounds = array<i64: 8, 128>}]} {
    %cst = arith.constant 0.000000e+00 : f32
    %0 = vector.broadcast %cst : f32 to vector<64x128xf32>
    %c0 = arith.constant 0 : index
    %c0_0 = arith.constant 0 : index
    %c0_1 = arith.constant 0 : index
    %c0_2 = arith.constant 0 : index
    %1 = vector.load %arg1[%c0, %c0_0, %c0_1, %c0_2] : memref<1x9x9x16xbf16, #tpu.memory_space<vmem>>, vector<1x8x8x16xbf16>
    %2 = vector.shape_cast %1 : vector<1x8x8x16xbf16> to vector<8x8x16xbf16>
    %3 = vector.shape_cast %2 : vector<8x8x16xbf16> to vector<64x16xbf16>
    %c0_3 = arith.constant 0 : index
    %c0_4 = arith.constant 0 : index
    %c0_5 = arith.constant 0 : index
    %4 = vector.load %arg5[%c0_3, %c0_4, %c0_5] : memref<9x16x128xbf16, #tpu.memory_space<vmem>>, vector<1x16x128xbf16>
    %5 = vector.shape_cast %4 : vector<1x16x128xbf16> to vector<16x128xbf16>
    %cst_6 = arith.constant dense<0.000000e+00> : vector<64x128xf32>
    %6 = tpu.matmul %3, %5, %cst_6 {dimension_numbers = #tpu.dot_dimension_numbers<[1], [0], [0], [1], [0, 0, 1, 1], [], []>} : vector<64x16xbf16>, vector<16x128xbf16>, vector<64x128xf32> -> vector<64x128xf32>
    %7 = arith.addf %0, %6 : vector<64x128xf32>
    %c0_7 = arith.constant 0 : index
    %c0_8 = arith.constant 0 : index
    %c0_9 = arith.constant 0 : index
    %c0_10 = arith.constant 0 : index
    %8 = vector.load %arg2[%c0_7, %c0_8, %c0_9, %c0_10] : memref<1x9x9x16xbf16, #tpu.memory_space<vmem>>, vector<1x8x8x16xbf16>
    %9 = vector.shape_cast %8 : vector<1x8x8x16xbf16> to vector<8x8x16xbf16>
    %10 = vector.shape_cast %9 : vector<8x8x16xbf16> to vector<64x16xbf16>
    %c1 = arith.constant 1 : index
    %c0_11 = arith.constant 0 : index
    %c0_12 = arith.constant 0 : index
    %11 = vector.load %arg5[%c1, %c0_11, %c0_12] : memref<9x16x128xbf16, #tpu.memory_space<vmem>>, vector<1x16x128xbf16>
    %12 = vector.shape_cast %11 : vector<1x16x128xbf16> to vector<16x128xbf16>
    %cst_13 = arith.constant dense<0.000000e+00> : vector<64x128xf32>
    %13 = tpu.matmul %10, %12, %cst_13 {dimension_numbers = #tpu.dot_dimension_numbers<[1], [0], [0], [1], [0, 0, 1, 1], [], []>} : vector<64x16xbf16>, vector<16x128xbf16>, vector<64x128xf32> -> vector<64x128xf32>
    %14 = arith.addf %7, %13 : vector<64x128xf32>
    %c0_14 = arith.constant 0 : index
    %c0_15 = arith.constant 0 : index
    %c1_16 = arith.constant 1 : index
    %c0_17 = arith.constant 0 : index
    %15 = vector.load %arg1[%c0_14, %c0_15, %c1_16, %c0_17] : memref<1x9x9x16xbf16, #tpu.memory_space<vmem>>, vector<1x8x8x16xbf16>
    %16 = vector.shape_cast %15 : vector<1x8x8x16xbf16> to vector<8x8x16xbf16>
    %17 = vector.shape_cast %16 : vector<8x8x16xbf16> to vector<64x16xbf16>
    %c2 = arith.constant 2 : index
    %c0_18 = arith.constant 0 : index
    %c0_19 = arith.constant 0 : index
    %18 = vector.load %arg5[%c2, %c0_18, %c0_19] : memref<9x16x128xbf16, #tpu.memory_space<vmem>>, vector<1x16x128xbf16>
    %19 = vector.shape_cast %18 : vector<1x16x128xbf16> to vector<16x128xbf16>
    %cst_20 = arith.constant dense<0.000000e+00> : vector<64x128xf32>
    %20 = tpu.matmul %17, %19, %cst_20 {dimension_numbers = #tpu.dot_dimension_numbers<[1], [0], [0], [1], [0, 0, 1, 1], [], []>} : vector<64x16xbf16>, vector<16x128xbf16>, vector<64x128xf32> -> vector<64x128xf32>
    %21 = arith.addf %14, %20 : vector<64x128xf32>
    %c0_21 = arith.constant 0 : index
    %c0_22 = arith.constant 0 : index
    %c0_23 = arith.constant 0 : index
    %c0_24 = arith.constant 0 : index
    %22 = vector.load %arg3[%c0_21, %c0_22, %c0_23, %c0_24] : memref<1x9x9x16xbf16, #tpu.memory_space<vmem>>, vector<1x8x8x16xbf16>
    %23 = vector.shape_cast %22 : vector<1x8x8x16xbf16> to vector<8x8x16xbf16>
    %24 = vector.shape_cast %23 : vector<8x8x16xbf16> to vector<64x16xbf16>
    %c3 = arith.constant 3 : index
    %c0_25 = arith.constant 0 : index
    %c0_26 = arith.constant 0 : index
    %25 = vector.load %arg5[%c3, %c0_25, %c0_26] : memref<9x16x128xbf16, #tpu.memory_space<vmem>>, vector<1x16x128xbf16>
    %26 = vector.shape_cast %25 : vector<1x16x128xbf16> to vector<16x128xbf16>
    %cst_27 = arith.constant dense<0.000000e+00> : vector<64x128xf32>
    %27 = tpu.matmul %24, %26, %cst_27 {dimension_numbers = #tpu.dot_dimension_numbers<[1], [0], [0], [1], [0, 0, 1, 1], [], []>} : vector<64x16xbf16>, vector<16x128xbf16>, vector<64x128xf32> -> vector<64x128xf32>
    %28 = arith.addf %21, %27 : vector<64x128xf32>
    %c0_28 = arith.constant 0 : index
    %c0_29 = arith.constant 0 : index
    %c0_30 = arith.constant 0 : index
    %c0_31 = arith.constant 0 : index
    %29 = vector.load %arg4[%c0_28, %c0_29, %c0_30, %c0_31] : memref<1x9x9x16xbf16, #tpu.memory_space<vmem>>, vector<1x8x8x16xbf16>
    %30 = vector.shape_cast %29 : vector<1x8x8x16xbf16> to vector<8x8x16xbf16>
    %31 = vector.shape_cast %30 : vector<8x8x16xbf16> to vector<64x16xbf16>
    %c4 = arith.constant 4 : index
    %c0_32 = arith.constant 0 : index
    %c0_33 = arith.constant 0 : index
    %32 = vector.load %arg5[%c4, %c0_32, %c0_33] : memref<9x16x128xbf16, #tpu.memory_space<vmem>>, vector<1x16x128xbf16>
    %33 = vector.shape_cast %32 : vector<1x16x128xbf16> to vector<16x128xbf16>
    %cst_34 = arith.constant dense<0.000000e+00> : vector<64x128xf32>
    %34 = tpu.matmul %31, %33, %cst_34 {dimension_numbers = #tpu.dot_dimension_numbers<[1], [0], [0], [1], [0, 0, 1, 1], [], []>} : vector<64x16xbf16>, vector<16x128xbf16>, vector<64x128xf32> -> vector<64x128xf32>
    %35 = arith.addf %28, %34 : vector<64x128xf32>
    %c0_35 = arith.constant 0 : index
    %c0_36 = arith.constant 0 : index
    %c1_37 = arith.constant 1 : index
    %c0_38 = arith.constant 0 : index
    %36 = vector.load %arg3[%c0_35, %c0_36, %c1_37, %c0_38] : memref<1x9x9x16xbf16, #tpu.memory_space<vmem>>, vector<1x8x8x16xbf16>
    %37 = vector.shape_cast %36 : vector<1x8x8x16xbf16> to vector<8x8x16xbf16>
    %38 = vector.shape_cast %37 : vector<8x8x16xbf16> to vector<64x16xbf16>
    %c5 = arith.constant 5 : index
    %c0_39 = arith.constant 0 : index
    %c0_40 = arith.constant 0 : index
    %39 = vector.load %arg5[%c5, %c0_39, %c0_40] : memref<9x16x128xbf16, #tpu.memory_space<vmem>>, vector<1x16x128xbf16>
    %40 = vector.shape_cast %39 : vector<1x16x128xbf16> to vector<16x128xbf16>
    %cst_41 = arith.constant dense<0.000000e+00> : vector<64x128xf32>
    %41 = tpu.matmul %38, %40, %cst_41 {dimension_numbers = #tpu.dot_dimension_numbers<[1], [0], [0], [1], [0, 0, 1, 1], [], []>} : vector<64x16xbf16>, vector<16x128xbf16>, vector<64x128xf32> -> vector<64x128xf32>
    %42 = arith.addf %35, %41 : vector<64x128xf32>
    %c0_42 = arith.constant 0 : index
    %c1_43 = arith.constant 1 : index
    %c0_44 = arith.constant 0 : index
    %c0_45 = arith.constant 0 : index
    %43 = vector.load %arg1[%c0_42, %c1_43, %c0_44, %c0_45] : memref<1x9x9x16xbf16, #tpu.memory_space<vmem>>, vector<1x8x8x16xbf16>
    %44 = vector.shape_cast %43 : vector<1x8x8x16xbf16> to vector<8x8x16xbf16>
    %45 = vector.shape_cast %44 : vector<8x8x16xbf16> to vector<64x16xbf16>
    %c6 = arith.constant 6 : index
    %c0_46 = arith.constant 0 : index
    %c0_47 = arith.constant 0 : index
    %46 = vector.load %arg5[%c6, %c0_46, %c0_47] : memref<9x16x128xbf16, #tpu.memory_space<vmem>>, vector<1x16x128xbf16>
    %47 = vector.shape_cast %46 : vector<1x16x128xbf16> to vector<16x128xbf16>
    %cst_48 = arith.constant dense<0.000000e+00> : vector<64x128xf32>
    %48 = tpu.matmul %45, %47, %cst_48 {dimension_numbers = #tpu.dot_dimension_numbers<[1], [0], [0], [1], [0, 0, 1, 1], [], []>} : vector<64x16xbf16>, vector<16x128xbf16>, vector<64x128xf32> -> vector<64x128xf32>
    %49 = arith.addf %42, %48 : vector<64x128xf32>
    %c0_49 = arith.constant 0 : index
    %c1_50 = arith.constant 1 : index
    %c0_51 = arith.constant 0 : index
    %c0_52 = arith.constant 0 : index
    %50 = vector.load %arg2[%c0_49, %c1_50, %c0_51, %c0_52] : memref<1x9x9x16xbf16, #tpu.memory_space<vmem>>, vector<1x8x8x16xbf16>
    %51 = vector.shape_cast %50 : vector<1x8x8x16xbf16> to vector<8x8x16xbf16>
    %52 = vector.shape_cast %51 : vector<8x8x16xbf16> to vector<64x16xbf16>
    %c7 = arith.constant 7 : index
    %c0_53 = arith.constant 0 : index
    %c0_54 = arith.constant 0 : index
    %53 = vector.load %arg5[%c7, %c0_53, %c0_54] : memref<9x16x128xbf16, #tpu.memory_space<vmem>>, vector<1x16x128xbf16>
    %54 = vector.shape_cast %53 : vector<1x16x128xbf16> to vector<16x128xbf16>
    %cst_55 = arith.constant dense<0.000000e+00> : vector<64x128xf32>
    %55 = tpu.matmul %52, %54, %cst_55 {dimension_numbers = #tpu.dot_dimension_numbers<[1], [0], [0], [1], [0, 0, 1, 1], [], []>} : vector<64x16xbf16>, vector<16x128xbf16>, vector<64x128xf32> -> vector<64x128xf32>
    %56 = arith.addf %49, %55 : vector<64x128xf32>
    %c0_56 = arith.constant 0 : index
    %c1_57 = arith.constant 1 : index
    %c1_58 = arith.constant 1 : index
    %c0_59 = arith.constant 0 : index
    %57 = vector.load %arg1[%c0_56, %c1_57, %c1_58, %c0_59] : memref<1x9x9x16xbf16, #tpu.memory_space<vmem>>, vector<1x8x8x16xbf16>
    %58 = vector.shape_cast %57 : vector<1x8x8x16xbf16> to vector<8x8x16xbf16>
    %59 = vector.shape_cast %58 : vector<8x8x16xbf16> to vector<64x16xbf16>
    %c8 = arith.constant 8 : index
    %c0_60 = arith.constant 0 : index
    %c0_61 = arith.constant 0 : index
    %60 = vector.load %arg5[%c8, %c0_60, %c0_61] : memref<9x16x128xbf16, #tpu.memory_space<vmem>>, vector<1x16x128xbf16>
    %61 = vector.shape_cast %60 : vector<1x16x128xbf16> to vector<16x128xbf16>
    %cst_62 = arith.constant dense<0.000000e+00> : vector<64x128xf32>
    %62 = tpu.matmul %59, %61, %cst_62 {dimension_numbers = #tpu.dot_dimension_numbers<[1], [0], [0], [1], [0, 0, 1, 1], [], []>} : vector<64x16xbf16>, vector<16x128xbf16>, vector<64x128xf32> -> vector<64x128xf32>
    %63 = arith.addf %56, %62 : vector<64x128xf32>
    %64 = arith.truncf %63 : vector<64x128xf32> to vector<64x128xbf16>
    %c0_63 = arith.constant 0 : index
    %c0_64 = arith.constant 0 : index
    %c0_65 = arith.constant 0 : index
    %65 = vector.load %arg6[%c0_63, %c0_64, %c0_65] : memref<1x64x128xbf16, #tpu.memory_space<vmem>>, vector<1x64x128xbf16>
    %66 = vector.shape_cast %65 : vector<1x64x128xbf16> to vector<64x128xbf16>
    %67 = vector.shape_cast %64 : vector<64x128xbf16> to vector<1x64x128xbf16>
    tpu.vector_store %arg6[%c0_63, %c0_64, %c0_65], %67 {strides = array<i32>} : memref<1x64x128xbf16, #tpu.memory_space<vmem>>, vector<1x64x128xbf16>,
    %c0_i32 = arith.constant 0 : i32
    %68 = arith.cmpi eq, %arg0, %c0_i32 : i32
    %69 = arith.extui %68 : i1 to i32
    %c0_i32_66 = arith.constant 0 : i32
    %70 = arith.cmpi ne, %69, %c0_i32_66 : i32
    scf.if %70 {
      %cst_74 = arith.constant 0.000000e+00 : f32
      %81 = vector.broadcast %cst_74 : f32 to vector<8x128xf32>
      %c0_75 = arith.constant 0 : index
      %c0_76 = arith.constant 0 : index
      %82 = vector.load %arg7[%c0_75, %c0_76] : memref<8x128xf32, #tpu.memory_space<vmem>>, vector<8x128xf32>
      tpu.vector_store %arg7[%c0_75, %c0_76], %81 {strides = array<i32>} : memref<8x128xf32, #tpu.memory_space<vmem>>, vector<8x128xf32>,
    } else {
    }
    %cst_67 = arith.constant dense<0.000000e+00> : vector<128xf32>
    %71 = vector.multi_reduction <add>, %63, %cst_67 [0] : vector<64x128xf32> to vector<128xf32>
    %72 = vector.shape_cast %71 : vector<128xf32> to vector<1x128xf32>
    %73 = arith.mulf %63, %63 : vector<64x128xf32>
    %cst_68 = arith.constant dense<0.000000e+00> : vector<128xf32>
    %74 = vector.multi_reduction <add>, %73, %cst_68 [0] : vector<64x128xf32> to vector<128xf32>
    %75 = vector.shape_cast %74 : vector<128xf32> to vector<1x128xf32>
    %c0_69 = arith.constant 0 : index
    %c0_70 = arith.constant 0 : index
    %76 = vector.load %arg7[%c0_69, %c0_70] : memref<8x128xf32, #tpu.memory_space<vmem>>, vector<8x128xf32>
    %cst_71 = arith.constant 0.000000e+00 : f32
    %77 = vector.broadcast %cst_71 : f32 to vector<6x128xf32>
    %78 = tpu.concatenate %72, %75, %77 in 0 : vector<1x128xf32>, vector<1x128xf32>, vector<6x128xf32> -> vector<8x128xf32>
    %79 = arith.addf %76, %78 : vector<8x128xf32>
    %c0_72 = arith.constant 0 : index
    %c0_73 = arith.constant 0 : index
    %80 = vector.load %arg7[%c0_72, %c0_73] : memref<8x128xf32, #tpu.memory_space<vmem>>, vector<8x128xf32>
    tpu.vector_store %arg7[%c0_72, %c0_73], %79 {strides = array<i32>} : memref<8x128xf32, #tpu.memory_space<vmem>>, vector<8x128xf32>,
    return
  }
  func.func @transform_0(%arg0: i32) -> (i32, i32, i32, i32) {
    %c0_i32 = arith.constant 0 : i32
    %c0_i32_0 = arith.constant 0 : i32
    %c0_i32_1 = arith.constant 0 : i32
    %c0_i32_2 = arith.constant 0 : i32
    return %arg0, %c0_i32, %c0_i32_0, %c0_i32_1 : i32, i32, i32, i32
  }
  func.func @transform_1(%arg0: i32) -> (i32, i32, i32, i32) {
    %c0_i32 = arith.constant 0 : i32
    %c0_i32_0 = arith.constant 0 : i32
    %c0_i32_1 = arith.constant 0 : i32
    %c0_i32_2 = arith.constant 0 : i32
    return %arg0, %c0_i32, %c0_i32_0, %c0_i32_1 : i32, i32, i32, i32
  }
  func.func @transform_2(%arg0: i32) -> (i32, i32, i32, i32) {
    %c0_i32 = arith.constant 0 : i32
    %c0_i32_0 = arith.constant 0 : i32
    %c0_i32_1 = arith.constant 0 : i32
    %c0_i32_2 = arith.constant 0 : i32
    return %arg0, %c0_i32, %c0_i32_0, %c0_i32_1 : i32, i32, i32, i32
  }
  func.func @transform_3(%arg0: i32) -> (i32, i32, i32, i32) {
    %c0_i32 = arith.constant 0 : i32
    %c0_i32_0 = arith.constant 0 : i32
    %c0_i32_1 = arith.constant 0 : i32
    %c0_i32_2 = arith.constant 0 : i32
    return %arg0, %c0_i32, %c0_i32_0, %c0_i32_1 : i32, i32, i32, i32
  }
  func.func @transform_4(%arg0: i32) -> (i32, i32, i32) {
    %c0_i32 = arith.constant 0 : i32
    %c0_i32_0 = arith.constant 0 : i32
    %c0_i32_1 = arith.constant 0 : i32
    %c0_i32_2 = arith.constant 0 : i32
    return %c0_i32, %c0_i32_0, %c0_i32_1 : i32, i32, i32
  }
  func.func @transform_5(%arg0: i32) -> (i32, i32, i32) {
    %c0_i32 = arith.constant 0 : i32
    %c0_i32_0 = arith.constant 0 : i32
    %c0_i32_1 = arith.constant 0 : i32
    return %arg0, %c0_i32, %c0_i32_0 : i32, i32, i32
  }
  func.func @transform_6(%arg0: i32) -> (i32, i32) {
    %c0_i32 = arith.constant 0 : i32
    %c0_i32_0 = arith.constant 0 : i32
    %c0_i32_1 = arith.constant 0 : i32
    return %c0_i32, %c0_i32_0 : i32, i32
  }
}

module attributes {stable_mosaic.version = 11 : i64} {
  func.func @_conv_tap_stats_kernel(%arg0: i32, %arg1: memref<1x10x10x128xbf16, #tpu.memory_space<vmem>>, %arg2: memref<9x128x128xbf16, #tpu.memory_space<vmem>>, %arg3: memref<1x64x128xbf16, #tpu.memory_space<vmem>>, %arg4: memref<8x128xf32, #tpu.memory_space<vmem>>) attributes {dimension_semantics = [#tpu.dimension_semantics<arbitrary>], iteration_bounds = array<i64: 2>, scalar_prefetch = 0 : i64, scratch_operands = 0 : i64, tpu.core_type = #tpu.core_type<tc>, window_params = [{transform_indices = @transform_0, window_bounds = array<i64: 1, 10, 10, 128>}, {pipeline_mode = #tpu.pipeline_mode<synchronous>, transform_indices = @transform_1, window_bounds = array<i64: 9, 128, 128>}, {transform_indices = @transform_2, window_bounds = array<i64: 1, 64, 128>}, {pipeline_mode = #tpu.pipeline_mode<synchronous>, transform_indices = @transform_3, window_bounds = array<i64: 8, 128>}]} {
    %cst = arith.constant 0.000000e+00 : f32
    %0 = vector.broadcast %cst : f32 to vector<64x128xf32>
    %c0 = arith.constant 0 : index
    %c0_0 = arith.constant 0 : index
    %c0_1 = arith.constant 0 : index
    %c0_2 = arith.constant 0 : index
    %1 = vector.load %arg1[%c0, %c0_0, %c0_1, %c0_2] : memref<1x10x10x128xbf16, #tpu.memory_space<vmem>>, vector<1x8x8x128xbf16>
    %2 = vector.shape_cast %1 : vector<1x8x8x128xbf16> to vector<8x8x128xbf16>
    %3 = vector.shape_cast %2 : vector<8x8x128xbf16> to vector<64x128xbf16>
    %c0_3 = arith.constant 0 : index
    %c0_4 = arith.constant 0 : index
    %c0_5 = arith.constant 0 : index
    %4 = vector.load %arg2[%c0_3, %c0_4, %c0_5] : memref<9x128x128xbf16, #tpu.memory_space<vmem>>, vector<1x128x128xbf16>
    %5 = vector.shape_cast %4 : vector<1x128x128xbf16> to vector<128x128xbf16>
    %cst_6 = arith.constant dense<0.000000e+00> : vector<64x128xf32>
    %6 = tpu.matmul %3, %5, %cst_6 {dimension_numbers = #tpu.dot_dimension_numbers<[1], [0], [0], [1], [0, 0, 1, 1], [], []>} : vector<64x128xbf16>, vector<128x128xbf16>, vector<64x128xf32> -> vector<64x128xf32>
    %7 = arith.addf %0, %6 : vector<64x128xf32>
    %c0_7 = arith.constant 0 : index
    %c0_8 = arith.constant 0 : index
    %c1 = arith.constant 1 : index
    %c0_9 = arith.constant 0 : index
    %8 = vector.load %arg1[%c0_7, %c0_8, %c1, %c0_9] : memref<1x10x10x128xbf16, #tpu.memory_space<vmem>>, vector<1x8x8x128xbf16>
    %9 = vector.shape_cast %8 : vector<1x8x8x128xbf16> to vector<8x8x128xbf16>
    %10 = vector.shape_cast %9 : vector<8x8x128xbf16> to vector<64x128xbf16>
    %c1_10 = arith.constant 1 : index
    %c0_11 = arith.constant 0 : index
    %c0_12 = arith.constant 0 : index
    %11 = vector.load %arg2[%c1_10, %c0_11, %c0_12] : memref<9x128x128xbf16, #tpu.memory_space<vmem>>, vector<1x128x128xbf16>
    %12 = vector.shape_cast %11 : vector<1x128x128xbf16> to vector<128x128xbf16>
    %cst_13 = arith.constant dense<0.000000e+00> : vector<64x128xf32>
    %13 = tpu.matmul %10, %12, %cst_13 {dimension_numbers = #tpu.dot_dimension_numbers<[1], [0], [0], [1], [0, 0, 1, 1], [], []>} : vector<64x128xbf16>, vector<128x128xbf16>, vector<64x128xf32> -> vector<64x128xf32>
    %14 = arith.addf %7, %13 : vector<64x128xf32>
    %c0_14 = arith.constant 0 : index
    %c0_15 = arith.constant 0 : index
    %c2 = arith.constant 2 : index
    %c0_16 = arith.constant 0 : index
    %15 = vector.load %arg1[%c0_14, %c0_15, %c2, %c0_16] : memref<1x10x10x128xbf16, #tpu.memory_space<vmem>>, vector<1x8x8x128xbf16>
    %16 = vector.shape_cast %15 : vector<1x8x8x128xbf16> to vector<8x8x128xbf16>
    %17 = vector.shape_cast %16 : vector<8x8x128xbf16> to vector<64x128xbf16>
    %c2_17 = arith.constant 2 : index
    %c0_18 = arith.constant 0 : index
    %c0_19 = arith.constant 0 : index
    %18 = vector.load %arg2[%c2_17, %c0_18, %c0_19] : memref<9x128x128xbf16, #tpu.memory_space<vmem>>, vector<1x128x128xbf16>
    %19 = vector.shape_cast %18 : vector<1x128x128xbf16> to vector<128x128xbf16>
    %cst_20 = arith.constant dense<0.000000e+00> : vector<64x128xf32>
    %20 = tpu.matmul %17, %19, %cst_20 {dimension_numbers = #tpu.dot_dimension_numbers<[1], [0], [0], [1], [0, 0, 1, 1], [], []>} : vector<64x128xbf16>, vector<128x128xbf16>, vector<64x128xf32> -> vector<64x128xf32>
    %21 = arith.addf %14, %20 : vector<64x128xf32>
    %c0_21 = arith.constant 0 : index
    %c1_22 = arith.constant 1 : index
    %c0_23 = arith.constant 0 : index
    %c0_24 = arith.constant 0 : index
    %22 = vector.load %arg1[%c0_21, %c1_22, %c0_23, %c0_24] : memref<1x10x10x128xbf16, #tpu.memory_space<vmem>>, vector<1x8x8x128xbf16>
    %23 = vector.shape_cast %22 : vector<1x8x8x128xbf16> to vector<8x8x128xbf16>
    %24 = vector.shape_cast %23 : vector<8x8x128xbf16> to vector<64x128xbf16>
    %c3 = arith.constant 3 : index
    %c0_25 = arith.constant 0 : index
    %c0_26 = arith.constant 0 : index
    %25 = vector.load %arg2[%c3, %c0_25, %c0_26] : memref<9x128x128xbf16, #tpu.memory_space<vmem>>, vector<1x128x128xbf16>
    %26 = vector.shape_cast %25 : vector<1x128x128xbf16> to vector<128x128xbf16>
    %cst_27 = arith.constant dense<0.000000e+00> : vector<64x128xf32>
    %27 = tpu.matmul %24, %26, %cst_27 {dimension_numbers = #tpu.dot_dimension_numbers<[1], [0], [0], [1], [0, 0, 1, 1], [], []>} : vector<64x128xbf16>, vector<128x128xbf16>, vector<64x128xf32> -> vector<64x128xf32>
    %28 = arith.addf %21, %27 : vector<64x128xf32>
    %c0_28 = arith.constant 0 : index
    %c1_29 = arith.constant 1 : index
    %c1_30 = arith.constant 1 : index
    %c0_31 = arith.constant 0 : index
    %29 = vector.load %arg1[%c0_28, %c1_29, %c1_30, %c0_31] : memref<1x10x10x128xbf16, #tpu.memory_space<vmem>>, vector<1x8x8x128xbf16>
    %30 = vector.shape_cast %29 : vector<1x8x8x128xbf16> to vector<8x8x128xbf16>
    %31 = vector.shape_cast %30 : vector<8x8x128xbf16> to vector<64x128xbf16>
    %c4 = arith.constant 4 : index
    %c0_32 = arith.constant 0 : index
    %c0_33 = arith.constant 0 : index
    %32 = vector.load %arg2[%c4, %c0_32, %c0_33] : memref<9x128x128xbf16, #tpu.memory_space<vmem>>, vector<1x128x128xbf16>
    %33 = vector.shape_cast %32 : vector<1x128x128xbf16> to vector<128x128xbf16>
    %cst_34 = arith.constant dense<0.000000e+00> : vector<64x128xf32>
    %34 = tpu.matmul %31, %33, %cst_34 {dimension_numbers = #tpu.dot_dimension_numbers<[1], [0], [0], [1], [0, 0, 1, 1], [], []>} : vector<64x128xbf16>, vector<128x128xbf16>, vector<64x128xf32> -> vector<64x128xf32>
    %35 = arith.addf %28, %34 : vector<64x128xf32>
    %c0_35 = arith.constant 0 : index
    %c1_36 = arith.constant 1 : index
    %c2_37 = arith.constant 2 : index
    %c0_38 = arith.constant 0 : index
    %36 = vector.load %arg1[%c0_35, %c1_36, %c2_37, %c0_38] : memref<1x10x10x128xbf16, #tpu.memory_space<vmem>>, vector<1x8x8x128xbf16>
    %37 = vector.shape_cast %36 : vector<1x8x8x128xbf16> to vector<8x8x128xbf16>
    %38 = vector.shape_cast %37 : vector<8x8x128xbf16> to vector<64x128xbf16>
    %c5 = arith.constant 5 : index
    %c0_39 = arith.constant 0 : index
    %c0_40 = arith.constant 0 : index
    %39 = vector.load %arg2[%c5, %c0_39, %c0_40] : memref<9x128x128xbf16, #tpu.memory_space<vmem>>, vector<1x128x128xbf16>
    %40 = vector.shape_cast %39 : vector<1x128x128xbf16> to vector<128x128xbf16>
    %cst_41 = arith.constant dense<0.000000e+00> : vector<64x128xf32>
    %41 = tpu.matmul %38, %40, %cst_41 {dimension_numbers = #tpu.dot_dimension_numbers<[1], [0], [0], [1], [0, 0, 1, 1], [], []>} : vector<64x128xbf16>, vector<128x128xbf16>, vector<64x128xf32> -> vector<64x128xf32>
    %42 = arith.addf %35, %41 : vector<64x128xf32>
    %c0_42 = arith.constant 0 : index
    %c2_43 = arith.constant 2 : index
    %c0_44 = arith.constant 0 : index
    %c0_45 = arith.constant 0 : index
    %43 = vector.load %arg1[%c0_42, %c2_43, %c0_44, %c0_45] : memref<1x10x10x128xbf16, #tpu.memory_space<vmem>>, vector<1x8x8x128xbf16>
    %44 = vector.shape_cast %43 : vector<1x8x8x128xbf16> to vector<8x8x128xbf16>
    %45 = vector.shape_cast %44 : vector<8x8x128xbf16> to vector<64x128xbf16>
    %c6 = arith.constant 6 : index
    %c0_46 = arith.constant 0 : index
    %c0_47 = arith.constant 0 : index
    %46 = vector.load %arg2[%c6, %c0_46, %c0_47] : memref<9x128x128xbf16, #tpu.memory_space<vmem>>, vector<1x128x128xbf16>
    %47 = vector.shape_cast %46 : vector<1x128x128xbf16> to vector<128x128xbf16>
    %cst_48 = arith.constant dense<0.000000e+00> : vector<64x128xf32>
    %48 = tpu.matmul %45, %47, %cst_48 {dimension_numbers = #tpu.dot_dimension_numbers<[1], [0], [0], [1], [0, 0, 1, 1], [], []>} : vector<64x128xbf16>, vector<128x128xbf16>, vector<64x128xf32> -> vector<64x128xf32>
    %49 = arith.addf %42, %48 : vector<64x128xf32>
    %c0_49 = arith.constant 0 : index
    %c2_50 = arith.constant 2 : index
    %c1_51 = arith.constant 1 : index
    %c0_52 = arith.constant 0 : index
    %50 = vector.load %arg1[%c0_49, %c2_50, %c1_51, %c0_52] : memref<1x10x10x128xbf16, #tpu.memory_space<vmem>>, vector<1x8x8x128xbf16>
    %51 = vector.shape_cast %50 : vector<1x8x8x128xbf16> to vector<8x8x128xbf16>
    %52 = vector.shape_cast %51 : vector<8x8x128xbf16> to vector<64x128xbf16>
    %c7 = arith.constant 7 : index
    %c0_53 = arith.constant 0 : index
    %c0_54 = arith.constant 0 : index
    %53 = vector.load %arg2[%c7, %c0_53, %c0_54] : memref<9x128x128xbf16, #tpu.memory_space<vmem>>, vector<1x128x128xbf16>
    %54 = vector.shape_cast %53 : vector<1x128x128xbf16> to vector<128x128xbf16>
    %cst_55 = arith.constant dense<0.000000e+00> : vector<64x128xf32>
    %55 = tpu.matmul %52, %54, %cst_55 {dimension_numbers = #tpu.dot_dimension_numbers<[1], [0], [0], [1], [0, 0, 1, 1], [], []>} : vector<64x128xbf16>, vector<128x128xbf16>, vector<64x128xf32> -> vector<64x128xf32>
    %56 = arith.addf %49, %55 : vector<64x128xf32>
    %c0_56 = arith.constant 0 : index
    %c2_57 = arith.constant 2 : index
    %c2_58 = arith.constant 2 : index
    %c0_59 = arith.constant 0 : index
    %57 = vector.load %arg1[%c0_56, %c2_57, %c2_58, %c0_59] : memref<1x10x10x128xbf16, #tpu.memory_space<vmem>>, vector<1x8x8x128xbf16>
    %58 = vector.shape_cast %57 : vector<1x8x8x128xbf16> to vector<8x8x128xbf16>
    %59 = vector.shape_cast %58 : vector<8x8x128xbf16> to vector<64x128xbf16>
    %c8 = arith.constant 8 : index
    %c0_60 = arith.constant 0 : index
    %c0_61 = arith.constant 0 : index
    %60 = vector.load %arg2[%c8, %c0_60, %c0_61] : memref<9x128x128xbf16, #tpu.memory_space<vmem>>, vector<1x128x128xbf16>
    %61 = vector.shape_cast %60 : vector<1x128x128xbf16> to vector<128x128xbf16>
    %cst_62 = arith.constant dense<0.000000e+00> : vector<64x128xf32>
    %62 = tpu.matmul %59, %61, %cst_62 {dimension_numbers = #tpu.dot_dimension_numbers<[1], [0], [0], [1], [0, 0, 1, 1], [], []>} : vector<64x128xbf16>, vector<128x128xbf16>, vector<64x128xf32> -> vector<64x128xf32>
    %63 = arith.addf %56, %62 : vector<64x128xf32>
    %64 = arith.truncf %63 : vector<64x128xf32> to vector<64x128xbf16>
    %c0_63 = arith.constant 0 : index
    %c0_64 = arith.constant 0 : index
    %c0_65 = arith.constant 0 : index
    %65 = vector.load %arg3[%c0_63, %c0_64, %c0_65] : memref<1x64x128xbf16, #tpu.memory_space<vmem>>, vector<1x64x128xbf16>
    %66 = vector.shape_cast %65 : vector<1x64x128xbf16> to vector<64x128xbf16>
    %67 = vector.shape_cast %64 : vector<64x128xbf16> to vector<1x64x128xbf16>
    tpu.vector_store %arg3[%c0_63, %c0_64, %c0_65], %67 {strides = array<i32>} : memref<1x64x128xbf16, #tpu.memory_space<vmem>>, vector<1x64x128xbf16>,
    %c0_i32 = arith.constant 0 : i32
    %68 = arith.cmpi eq, %arg0, %c0_i32 : i32
    %69 = arith.extui %68 : i1 to i32
    %c0_i32_66 = arith.constant 0 : i32
    %70 = arith.cmpi ne, %69, %c0_i32_66 : i32
    scf.if %70 {
      %cst_74 = arith.constant 0.000000e+00 : f32
      %81 = vector.broadcast %cst_74 : f32 to vector<8x128xf32>
      %c0_75 = arith.constant 0 : index
      %c0_76 = arith.constant 0 : index
      %82 = vector.load %arg4[%c0_75, %c0_76] : memref<8x128xf32, #tpu.memory_space<vmem>>, vector<8x128xf32>
      tpu.vector_store %arg4[%c0_75, %c0_76], %81 {strides = array<i32>} : memref<8x128xf32, #tpu.memory_space<vmem>>, vector<8x128xf32>,
    } else {
    }
    %cst_67 = arith.constant dense<0.000000e+00> : vector<128xf32>
    %71 = vector.multi_reduction <add>, %63, %cst_67 [0] : vector<64x128xf32> to vector<128xf32>
    %72 = vector.shape_cast %71 : vector<128xf32> to vector<1x128xf32>
    %73 = arith.mulf %63, %63 : vector<64x128xf32>
    %cst_68 = arith.constant dense<0.000000e+00> : vector<128xf32>
    %74 = vector.multi_reduction <add>, %73, %cst_68 [0] : vector<64x128xf32> to vector<128xf32>
    %75 = vector.shape_cast %74 : vector<128xf32> to vector<1x128xf32>
    %c0_69 = arith.constant 0 : index
    %c0_70 = arith.constant 0 : index
    %76 = vector.load %arg4[%c0_69, %c0_70] : memref<8x128xf32, #tpu.memory_space<vmem>>, vector<8x128xf32>
    %cst_71 = arith.constant 0.000000e+00 : f32
    %77 = vector.broadcast %cst_71 : f32 to vector<6x128xf32>
    %78 = tpu.concatenate %72, %75, %77 in 0 : vector<1x128xf32>, vector<1x128xf32>, vector<6x128xf32> -> vector<8x128xf32>
    %79 = arith.addf %76, %78 : vector<8x128xf32>
    %c0_72 = arith.constant 0 : index
    %c0_73 = arith.constant 0 : index
    %80 = vector.load %arg4[%c0_72, %c0_73] : memref<8x128xf32, #tpu.memory_space<vmem>>, vector<8x128xf32>
    tpu.vector_store %arg4[%c0_72, %c0_73], %79 {strides = array<i32>} : memref<8x128xf32, #tpu.memory_space<vmem>>, vector<8x128xf32>,
    return
  }
  func.func @transform_0(%arg0: i32) -> (i32, i32, i32, i32) {
    %c0_i32 = arith.constant 0 : i32
    %c0_i32_0 = arith.constant 0 : i32
    %c0_i32_1 = arith.constant 0 : i32
    %c0_i32_2 = arith.constant 0 : i32
    return %arg0, %c0_i32, %c0_i32_0, %c0_i32_1 : i32, i32, i32, i32
  }
  func.func @transform_1(%arg0: i32) -> (i32, i32, i32) {
    %c0_i32 = arith.constant 0 : i32
    %c0_i32_0 = arith.constant 0 : i32
    %c0_i32_1 = arith.constant 0 : i32
    %c0_i32_2 = arith.constant 0 : i32
    return %c0_i32, %c0_i32_0, %c0_i32_1 : i32, i32, i32
  }
  func.func @transform_2(%arg0: i32) -> (i32, i32, i32) {
    %c0_i32 = arith.constant 0 : i32
    %c0_i32_0 = arith.constant 0 : i32
    %c0_i32_1 = arith.constant 0 : i32
    return %arg0, %c0_i32, %c0_i32_0 : i32, i32, i32
  }
  func.func @transform_3(%arg0: i32) -> (i32, i32) {
    %c0_i32 = arith.constant 0 : i32
    %c0_i32_0 = arith.constant 0 : i32
    %c0_i32_1 = arith.constant 0 : i32
    return %c0_i32, %c0_i32_0 : i32, i32
  }
}

module attributes {stable_mosaic.version = 11 : i64} {
  func.func @_finalize_kernel(%arg0: i32, %arg1: memref<128x128xbf16, #tpu.memory_space<vmem>>, %arg2: memref<1x128xf32, #tpu.memory_space<vmem>>, %arg3: memref<1x128xf32, #tpu.memory_space<vmem>>, %arg4: memref<128x128xbf16, #tpu.memory_space<vmem>>, %arg5: memref<1x128xf32, #tpu.memory_space<vmem>>, %arg6: memref<1x128xf32, #tpu.memory_space<vmem>>, %arg7: memref<128x128xf32, #tpu.memory_space<vmem>>) attributes {dimension_semantics = [#tpu.dimension_semantics<parallel>], iteration_bounds = array<i64: 1>, scalar_prefetch = 0 : i64, scratch_operands = 0 : i64, tpu.core_type = #tpu.core_type<tc>, window_params = [{transform_indices = @transform_0, window_bounds = array<i64: 128, 128>}, {pipeline_mode = #tpu.pipeline_mode<synchronous>, transform_indices = @transform_1, window_bounds = array<i64: 1, 128>}, {pipeline_mode = #tpu.pipeline_mode<synchronous>, transform_indices = @transform_2, window_bounds = array<i64: 1, 128>}, {transform_indices = @transform_3, window_bounds = array<i64: 128, 128>}, {pipeline_mode = #tpu.pipeline_mode<synchronous>, transform_indices = @transform_4, window_bounds = array<i64: 1, 128>}, {pipeline_mode = #tpu.pipeline_mode<synchronous>, transform_indices = @transform_5, window_bounds = array<i64: 1, 128>}, {transform_indices = @transform_6, window_bounds = array<i64: 128, 128>}]} {
    %c0 = arith.constant 0 : index
    %c0_0 = arith.constant 0 : index
    %0 = vector.load %arg1[%c0, %c0_0] : memref<128x128xbf16, #tpu.memory_space<vmem>>, vector<128x128xbf16>
    %1 = arith.extf %0 : vector<128x128xbf16> to vector<128x128xf32>
    %c0_1 = arith.constant 0 : index
    %c0_2 = arith.constant 0 : index
    %2 = vector.load %arg2[%c0_1, %c0_2] : memref<1x128xf32, #tpu.memory_space<vmem>>, vector<1x128xf32>
    %3 = vector.broadcast %2 : vector<1x128xf32> to vector<128x128xf32>
    %4 = arith.mulf %1, %3 : vector<128x128xf32>
    %c0_3 = arith.constant 0 : index
    %c0_4 = arith.constant 0 : index
    %5 = vector.load %arg3[%c0_3, %c0_4] : memref<1x128xf32, #tpu.memory_space<vmem>>, vector<1x128xf32>
    %6 = vector.broadcast %5 : vector<1x128xf32> to vector<128x128xf32>
    %7 = arith.addf %4, %6 : vector<128x128xf32>
    %c0_5 = arith.constant 0 : index
    %c0_6 = arith.constant 0 : index
    %8 = vector.load %arg4[%c0_5, %c0_6] : memref<128x128xbf16, #tpu.memory_space<vmem>>, vector<128x128xbf16>
    %9 = arith.extf %8 : vector<128x128xbf16> to vector<128x128xf32>
    %c0_7 = arith.constant 0 : index
    %c0_8 = arith.constant 0 : index
    %10 = vector.load %arg5[%c0_7, %c0_8] : memref<1x128xf32, #tpu.memory_space<vmem>>, vector<1x128xf32>
    %11 = vector.broadcast %10 : vector<1x128xf32> to vector<128x128xf32>
    %12 = arith.mulf %9, %11 : vector<128x128xf32>
    %c0_9 = arith.constant 0 : index
    %c0_10 = arith.constant 0 : index
    %13 = vector.load %arg6[%c0_9, %c0_10] : memref<1x128xf32, #tpu.memory_space<vmem>>, vector<1x128xf32>
    %14 = vector.broadcast %13 : vector<1x128xf32> to vector<128x128xf32>
    %15 = arith.addf %12, %14 : vector<128x128xf32>
    %16 = arith.addf %7, %15 : vector<128x128xf32>
    %cst = arith.constant 0.000000e+00 : f32
    %17 = vector.broadcast %cst : f32 to vector<128x128xf32>
    %18 = arith.maximumf %16, %17 : vector<128x128xf32>
    %c0_11 = arith.constant 0 : index
    %c0_12 = arith.constant 0 : index
    %19 = vector.load %arg7[%c0_11, %c0_12] : memref<128x128xf32, #tpu.memory_space<vmem>>, vector<128x128xf32>
    tpu.vector_store %arg7[%c0_11, %c0_12], %18 {strides = array<i32>} : memref<128x128xf32, #tpu.memory_space<vmem>>, vector<128x128xf32>,
    return
  }
  func.func @transform_0(%arg0: i32) -> (i32, i32) {
    %c0_i32 = arith.constant 0 : i32
    %c0_i32_0 = arith.constant 0 : i32
    return %arg0, %c0_i32 : i32, i32
  }
  func.func @transform_1(%arg0: i32) -> (i32, i32) {
    %c0_i32 = arith.constant 0 : i32
    %c0_i32_0 = arith.constant 0 : i32
    %c0_i32_1 = arith.constant 0 : i32
    return %c0_i32, %c0_i32_0 : i32, i32
  }
  func.func @transform_2(%arg0: i32) -> (i32, i32) {
    %c0_i32 = arith.constant 0 : i32
    %c0_i32_0 = arith.constant 0 : i32
    %c0_i32_1 = arith.constant 0 : i32
    return %c0_i32, %c0_i32_0 : i32, i32
  }
  func.func @transform_3(%arg0: i32) -> (i32, i32) {
    %c0_i32 = arith.constant 0 : i32
    %c0_i32_0 = arith.constant 0 : i32
    return %arg0, %c0_i32 : i32, i32
  }
  func.func @transform_4(%arg0: i32) -> (i32, i32) {
    %c0_i32 = arith.constant 0 : i32
    %c0_i32_0 = arith.constant 0 : i32
    %c0_i32_1 = arith.constant 0 : i32
    return %c0_i32, %c0_i32_0 : i32, i32
  }
  func.func @transform_5(%arg0: i32) -> (i32, i32) {
    %c0_i32 = arith.constant 0 : i32
    %c0_i32_0 = arith.constant 0 : i32
    %c0_i32_1 = arith.constant 0 : i32
    return %c0_i32, %c0_i32_0 : i32, i32
  }
  func.func @transform_6(%arg0: i32) -> (i32, i32) {
    %c0_i32 = arith.constant 0 : i32
    %c0_i32_0 = arith.constant 0 : i32
    return %arg0, %c0_i32 : i32, i32
  }
}

</mosaic_0001>

<llo_original>
// kernel: basic_private_block.8
$region0: #{basic_private_block.8}
  #allocation0 [shape = 'u32[]', space=smem, size = 0x4, offset = 0x4, fixed_abs, tag = 'smem constant byte address 0x4 - core index']
  #allocation1 [shape = 'u32[72,128]{1,0:T(1,128)}', space=vmem, size = 0x9000, scoped, tag = 'internal scratch']
  %s0 = inlined_call_operand.vmem [shape: bf16[2,8,8,16], index: 0, kind: input, shape index: {}]
  %s1 = inlined_call_operand.vmem [shape: bf16[1,16,128], index: 1, kind: input, shape index: {}]
  %s2 = inlined_call_operand.vmem [shape: bf16[2,64,128], index: 2, kind: output, shape index: {0}]
  %s3 = inlined_call_operand.vmem [shape: f32[8,128], index: 3, kind: output, shape index: {1}]
  %4 = xla_tuple %s2, %s3
  %s5 = sld [smem:[#allocation0]]
  $region53: #{basic_private_block.8} parent=0
    _
  %s7 = ssub.s32 1, %s5
  %s8 = scalar_select 0, %s7, %s5
  loop: start=0, step=1, limit=4
  $region2: #{basic_private_block.8} parent=0 // loop_pre_header
    _
  $region3: #{basic_private_block.8} parent=0 // loop_header
    %s10 = sphi 0, %s14
    %p11 = scmp.ge.s32.totalorder %s10, 4
    %s20 = sphi 0, %s22
    %s23 = sphi 0, %s20
    %s24 = sphi 0, %s23
    %s40 = sphi 0, %s24
    %s44 = sphi 0, %s44
    %s46 = sphi 0, %s44
    %s47 = sphi 0, %s46
    %s61 = sphi 0, %s47
    %s67 = sphi 0, %s69
    %s70 = sphi 0, %s67
    %s71 = sphi 0, %s70
    %s87 = sphi 0, %s71
    %s91 = sphi 0, %s91
    %s93 = sphi 0, %s91
    %s94 = sphi 0, %s93
    %s108 = sphi 0, %s94
  $region4: #{basic_private_block.8} parent=0 // loop_header_branch
    %13 = sbr.rel (%p11) target = $region8
  $region5: #{basic_private_block.8} parent=0 // loop_body
    %s15 = ssub.s32 %s10, 1
    %s16 = ssub.s32 %s10, 2
    %s17 = sadd.s32 %s10, 1
    %s18 = ssub.s32 %s10, %s17
    %p19 = scmp.eq.s32.totalorder %s18, 0
    %s21 = sadd.s32 %s20, 1
    %s22 = scalar_select %p19, %s20, %s21
    %p25 = pneg %p19
    %p26 = scmp.eq.s32.totalorder %s10, 1
    %p27 = por %p25, %p26
    %p28 = scmp.ne.s32.totalorder %s20, %s23
    %p29 = scmp.eq.s32.totalorder %s10, 0
    %p30 = por %p28, %p29
    %p31 = scmp.ne.s32.totalorder %s20, %s23
    %p32 = scmp.eq.s32.totalorder %s15, 1
    %p33 = por %p31, %p32
    %p34 = scmp.ne.s32.totalorder %s23, %s24
    %p35 = scmp.eq.s32.totalorder %s15, 0
    %p36 = por %p34, %p35
    %p37 = scmp.ne.s32.totalorder %s23, %s24
    %p38 = scmp.eq.s32.totalorder %s16, 1
    %p39 = por %p37, %p38
    %p41 = scmp.ne.s32.totalorder %s24, %s40
    %p42 = scmp.eq.s32.totalorder %s16, 0
    %p43 = por %p41, %p42
    %s45 = sadd.s32 %s44, 1
    %p48 = scmp.eq.s32.totalorder %s10, 1
    %p49 = scmp.ne.s32.totalorder %s44, %s46
    %p50 = scmp.eq.s32.totalorder %s10, 0
    %p51 = por %p49, %p50
    %p52 = scmp.ne.s32.totalorder %s44, %s46
    %p53 = scmp.eq.s32.totalorder %s15, 1
    %p54 = por %p52, %p53
    %p55 = scmp.ne.s32.totalorder %s46, %s47
    %p56 = scmp.eq.s32.totalorder %s15, 0
    %p57 = por %p55, %p56
    %p58 = scmp.ne.s32.totalorder %s46, %s47
    %p59 = scmp.eq.s32.totalorder %s16, 1
    %p60 = por %p58, %p59
    %p62 = scmp.ne.s32.totalorder %s47, %s61
    %p63 = scmp.eq.s32.totalorder %s16, 0
    %p64 = por %p62, %p63
    %s65 = ssub.s32 %s10, %s17
    %p66 = scmp.eq.s32.totalorder %s65, 0
    %s68 = sadd.s32 %s67, 1
    %s69 = scalar_select %p66, %s67, %s68
    %p72 = pneg %p66
    %p73 = scmp.eq.s32.totalorder %s10, 1
    %p74 = por %p72, %p73
    %p75 = scmp.ne.s32.totalorder %s67, %s70
    %p76 = scmp.eq.s32.totalorder %s10, 0
    %p77 = por %p75, %p76
    %p78 = scmp.ne.s32.totalorder %s67, %s70
    %p79 = scmp.eq.s32.totalorder %s15, 1
    %p80 = por %p78, %p79
    %p81 = scmp.ne.s32.totalorder %s70, %s71
    %p82 = scmp.eq.s32.totalorder %s15, 0
    %p83 = por %p81, %p82
    %p84 = scmp.ne.s32.totalorder %s70, %s71
    %p85 = scmp.eq.s32.totalorder %s16, 1
    %p86 = por %p84, %p85
    %p88 = scmp.ne.s32.totalorder %s71, %s87
    %p89 = scmp.eq.s32.totalorder %s16, 0
    %p90 = por %p88, %p89
    %s92 = sadd.s32 %s91, 1
    %p95 = scmp.eq.s32.totalorder %s10, 1
    %p96 = scmp.ne.s32.totalorder %s91, %s93
    %p97 = scmp.eq.s32.totalorder %s10, 0
    %p98 = por %p96, %p97
    %p99 = scmp.ne.s32.totalorder %s91, %s93
    %p100 = scmp.eq.s32.totalorder %s15, 1
    %p101 = por %p99, %p100
    %p102 = scmp.ne.s32.totalorder %s93, %s94
    %p103 = scmp.eq.s32.totalorder %s15, 0
    %p104 = por %p102, %p103
    %p105 = scmp.ne.s32.totalorder %s93, %s94
    %p106 = scmp.eq.s32.totalorder %s16, 1
    %p107 = por %p105, %p106
    %p109 = scmp.ne.s32.totalorder %s94, %s108
    %p110 = scmp.eq.s32.totalorder %s16, 0
    %p111 = por %p109, %p110
    %p112 = scmp.le.s32.totalorder 1, %s10
    %p113 = scmp.lt.s32.totalorder %s10, 3
    %p114 = pnand %p112, %p113
    %p115 = pneg %p114
    // Predicated region
    $region9: #{basic_private_block.8} parent=5 // pred_check
      _
    $region10: #{basic_private_block.8} parent=5 // pred_check_branch
      %117 = sbr.rel (%p114) target = $region12
    $region11: #{basic_private_block.8} parent=5 // pred_region
      %s118 = ssub.s32 %s10, 1
      // Predicated region
      $region13: #{basic_private_block.8} parent=11 // pred_check
        %p119 = pneg %p57
      $region14: #{basic_private_block.8} parent=11 // pred_check_branch
        %121 = sbr.rel (%p119) target = $region16
      $region15: #{basic_private_block.8} parent=11 // pred_region
        _
      $region16: #{basic_private_block.8} parent=11 // pred_fallthru
        _
    $region12: #{basic_private_block.8} parent=5 // pred_fallthru
      _
    %p122 = scmp.lt.s32.totalorder %s10, 2
    // Predicated region
    $region17: #{basic_private_block.8} parent=5 // pred_check
      %p123 = pneg %p122
    $region18: #{basic_private_block.8} parent=5 // pred_check_branch
      %125 = sbr.rel (%p123) target = $region20
    $region19: #{basic_private_block.8} parent=5 // pred_region
      // Predicated region
      $region21: #{basic_private_block.8} parent=19 // pred_check
        %p126 = pneg %p30
      $region22: #{basic_private_block.8} parent=19 // pred_check_branch
        %128 = sbr.rel (%p126) target = $region24
      $region23: #{basic_private_block.8} parent=19 // pred_region
        %p129 = scmp.lt.s32.totalorder %s10, 1
        %s130 = scalar_select %p129, %s10, 1
        %s131 = smul.addr %s130, 8
        %s132 = smul.addr %s131, 4
        %s133 = scalar_lea.vmem %s0, %s132
      $region24: #{basic_private_block.8} parent=19 // pred_fallthru
        _
    $region20: #{basic_private_block.8} parent=5 // pred_fallthru
      _
    %p134 = scmp.le.s32.totalorder 1, %s10
    %p135 = scmp.lt.s32.totalorder %s10, 3
    %p136 = pnand %p134, %p135
    %p137 = pneg %p136
    // Predicated region
    $region25: #{basic_private_block.8} parent=5 // pred_check
      _
    $region26: #{basic_private_block.8} parent=5 // pred_check_branch
      %139 = sbr.rel (%p136) target = $region28
    $region27: #{basic_private_block.8} parent=5 // pred_region
      %s140 = ssub.s32 %s10, 1
      %p141 = scmp.lt.s32.totalorder %s15, 1
      %s142 = scalar_select %p141, %s15, 1
      %s143 = smul.addr %s142, 8
      %s144 = smul.addr %s143, 4
      %s145 = scalar_lea.vmem %s0, %s144
      %p146 = pneg %p36
      %p147 = pneg %p33
      %p148 = pneg %p57
      %p149 = pneg %p54
      %p150 = pneg %p83
      %p151 = pneg %p80
      %p152 = scmp.lt.s32.totalorder %s15, 1
      %s153 = scalar_select %p152, %s15, 1
      %s154 = smul.addr %s153, 8
      %s155 = smul.addr %s154, 4
      %s156 = scalar_lea.vmem %s2, %s155
      %p157 = pneg %p104
      %p158 = pneg %p101
      %p159 = scmp.lt.s32.totalorder %s15, 1
      %s160 = scalar_select %p159, %s15, 1
      %s161 = smul.addr %s160, 8
      %s162 = smul.addr %s161, 4
      %s163 = scalar_lea.vmem %s0, %s162
      %p164 = scmp.lt.s32.totalorder %s15, 1
      %s165 = scalar_select %p164, %s15, 1
      %s166 = smul.addr %s165, 8
      %s167 = smul.addr %s166, 4
      %s168 = scalar_lea.vmem %s2, %s167
      %v170 = vld [vmem:[%s163] sm:$0xf]
      %v171 = vld [vmem:[%s163 + $0x4] sm:$0xf]
      %v172 = vld [vmem:[%s163 + $0x8] sm:$0xf]
      %v173 = vld [vmem:[%s163 + $0xc] sm:$0xf]
      %v174 = vld [vmem:[%s163 + $0x10] sm:$0xf]
      %v175 = vld [vmem:[%s163 + $0x14] sm:$0xf]
      %v176 = vld [vmem:[%s163 + $0x18] sm:$0xf]
      %v177 = vld [vmem:[%s163 + $0x1c] sm:$0xf]
      %v178 = vld [vmem:[%s1] sm:$0xf]
      %v179 = vld [vmem:[%s1 + $0x4] sm:$0xf]
      %v188 = vunpack.c.l.b16 %v170
      %v189 = vunpack.c.l.b16 %v171
      %v190 = vunpack.c.l.b16 %v172
      %v191 = vunpack.c.l.b16 %v173
      %v192 = vunpack.c.l.b16 %v174
      %v193 = vunpack.c.l.b16 %v175
      %v194 = vunpack.c.l.b16 %v176
      %v195 = vunpack.c.l.b16 %v177
      %v196 = vpack.c.b16 %v189, %v188
      %v197 = vpack.c.b16 %v191, %v190
      %v198 = vpack.c.b16 %v193, %v192
      %v199 = vpack.c.b16 %v195, %v194
      %v202 = vunpack.c.l.b16 %v178
      %v203 = vunpack.c.l.b16 %v179
      %v204 = vpack.c.b16 %v203, %v202
      %vm206 = vcmask 130048
      %v208 = vsel %vm206, %v196, 0
      %v211 = vsel %vm206, %v197, 0
      %v214 = vsel %vm206, %v198, 0
      %v217 = vsel %vm206, %v199, 0
      %219 = vmatpush.bf16.msra.mxu0 0
      %220 = vmatpush.bf16.msra.mxu0 0
      %221 = vmatpush.bf16.msra.mxu0 0
      %222 = vmatpush.bf16.msra.mxu0 0
      %223 = vmatpush.bf16.msra.mxu0 0
      %224 = vmatpush.bf16.msra.mxu0 0
      %225 = vmatpush.bf16.msra.mxu0 0
      %226 = vmatpush.bf16.msra.mxu0 %v204
      %227 = vmatmul.bf16.gmra.mxu0 %v208
      %v228 = vpop.f32.mrf.mxu0
      %v229 = vadd.f32 0.0, %v228
      %v230 = vpop.f32.mrf.mxu0
      %v231 = vadd.f32 0.0, %v230
      %232 = vmatmul.bf16.gmra.mxu0 %v211
      %v233 = vpop.f32.mrf.mxu0
      %v234 = vadd.f32 0.0, %v233
      %v235 = vpop.f32.mrf.mxu0
      %v236 = vadd.f32 0.0, %v235
      %237 = vmatmul.bf16.gmra.mxu0 %v214
      %v238 = vpop.f32.mrf.mxu0
      %v239 = vadd.f32 0.0, %v238
      %v240 = vpop.f32.mrf.mxu0
      %v241 = vadd.f32 0.0, %v240
      %242 = vmatmul.bf16.gmra.mxu0 %v217
      %v243 = vpop.f32.mrf.mxu0
      %v244 = vadd.f32 0.0, %v243
      %v245 = vpop.f32.mrf.mxu0
      %v246 = vadd.f32 0.0, %v245
      %247 = vdwg.mxu0
      %v248 = vpack.c.bf16 %v229, %v229
      %v249 = vpack.c.bf16 %v231, %v231
      %v250 = vpack.c.bf16 %v234, %v234
      %v251 = vpack.c.bf16 %v236, %v236
      %v252 = vpack.c.bf16 %v239, %v239
      %v253 = vpack.c.bf16 %v241, %v241
      %v254 = vpack.c.bf16 %v244, %v244
      %v255 = vpack.c.bf16 %v246, %v246
      %256 = vst [vmem:[%s168] sm:$0xf] %v248
      %257 = vst [vmem:[%s168 + $0x4] sm:$0xf] %v249
      %258 = vst [vmem:[%s168 + $0x8] sm:$0xf] %v250
      %259 = vst [vmem:[%s168 + $0xc] sm:$0xf] %v251
      %260 = vst [vmem:[%s168 + $0x10] sm:$0xf] %v252
      %261 = vst [vmem:[%s168 + $0x14] sm:$0xf] %v253
      %262 = vst [vmem:[%s168 + $0x18] sm:$0xf] %v254
      %263 = vst [vmem:[%s168 + $0x1c] sm:$0xf] %v255
      %p264 = scmp.eq.s32.totalorder %s15, 0
      // Predicated region
      $region29: #{basic_private_block.8} parent=27 // pred_check
        %p265 = pneg %p264
      $region30: #{basic_private_block.8} parent=27 // pred_check_branch
        %267 = sbr.rel (%p265) target = $region32
      $region31: #{basic_private_block.8} parent=27 // pred_region
        %268 = vst [vmem:[%s3] sm:$0xff] 0.0
      $region32: #{basic_private_block.8} parent=27 // pred_fallthru
        _
      %v269 = vadd.f32 %v229, %v231
      %v270 = vadd.f32 %v269, %v234
      %v271 = vadd.f32 %v270, %v236
      %v272 = vadd.f32 %v271, %v239
      %v273 = vadd.f32 %v272, %v241
      %v274 = vadd.f32 %v273, %v244
      %v275 = vadd.f32 %v274, %v246
      %v276 = vrot.slane %v275, 4
      %v277 = vadd.f32 %v275, %v276
      %v278 = vrot.slane %v277, 2
      %v279 = vadd.f32 %v277, %v278
      %v280 = vrot.slane %v279, 1
      %v281 = vadd.f32 %v279, %v280
      %v282 = vmul.f32 %v229, %v229
      %v283 = vmul.f32 %v231, %v231
      %v284 = vmul.f32 %v234, %v234
      %v285 = vmul.f32 %v236, %v236
      %v286 = vmul.f32 %v239, %v239
      %v287 = vmul.f32 %v241, %v241
      %v288 = vmul.f32 %v244, %v244
      %v289 = vmul.f32 %v246, %v246
      %v290 = vadd.f32 %v282, %v283
      %v291 = vadd.f32 %v290, %v284
      %v292 = vadd.f32 %v291, %v285
      %v293 = vadd.f32 %v292, %v286
      %v294 = vadd.f32 %v293, %v287
      %v295 = vadd.f32 %v294, %v288
      %v296 = vadd.f32 %v295, %v289
      %v297 = vrot.slane %v296, 4
      %v298 = vadd.f32 %v296, %v297
      %v299 = vrot.slane %v298, 2
      %v300 = vadd.f32 %v298, %v299
      %v301 = vrot.slane %v300, 1
      %v302 = vadd.f32 %v300, %v301
      %v303 = vld [vmem:[%s3] sm:$0xff]
      %vm304 = vcmask 1040384
      %v305 = vsel %vm304, %v281, %v302
      %vm306 = vcmask 1041408
      %v307 = vsel %vm306, %v305, 0.0
      %v308 = vadd.f32 %v303, %v307
      %309 = vst [vmem:[%s3] sm:$0xff] %v308
      %p310 = scmp.lt.s32.totalorder %s15, 1
      %s311 = scalar_select %p310, %s15, 1
      %s312 = smul.addr %s311, 8
      %s313 = smul.addr %s312, 4
      %s314 = scalar_lea.vmem %s2, %s313
      // Predicated region
      $region33: #{basic_private_block.8} parent=27 // pred_check
        %p315 = pneg %p80
      $region34: #{basic_private_block.8} parent=27 // pred_check_branch
        %317 = sbr.rel (%p315) target = $region36
      $region35: #{basic_private_block.8} parent=27 // pred_region
        _
      $region36: #{basic_private_block.8} parent=27 // pred_fallthru
        _
      // Predicated region
      $region37: #{basic_private_block.8} parent=27 // pred_check
        %p318 = pneg %p101
      $region38: #{basic_private_block.8} parent=27 // pred_check_branch
        %320 = sbr.rel (%p318) target = $region40
      $region39: #{basic_private_block.8} parent=27 // pred_region
        _
      $region40: #{basic_private_block.8} parent=27 // pred_fallthru
        _
      // Predicated region
      $region41: #{basic_private_block.8} parent=27 // pred_check
        %p321 = pneg %p101
      $region42: #{basic_private_block.8} parent=27 // pred_check_branch
        %323 = sbr.rel (%p321) target = $region44
      $region43: #{basic_private_block.8} parent=27 // pred_region
        _
      $region44: #{basic_private_block.8} parent=27 // pred_fallthru
        _
    $region28: #{basic_private_block.8} parent=5 // pred_fallthru
      _
    %p324 = scmp.le.s32.totalorder 2, %s10
    // Predicated region
    $region45: #{basic_private_block.8} parent=5 // pred_check
      %p325 = pneg %p324
    $region46: #{basic_private_block.8} parent=5 // pred_check_branch
      %327 = sbr.rel (%p325) target = $region48
    $region47: #{basic_private_block.8} parent=5 // pred_region
      %s328 = ssub.s32 %s10, 2
      // Predicated region
      $region49: #{basic_private_block.8} parent=47 // pred_check
        %p329 = pneg %p86
      $region50: #{basic_private_block.8} parent=47 // pred_check_branch
        %331 = sbr.rel (%p329) target = $region52
      $region51: #{basic_private_block.8} parent=47 // pred_region
        %p332 = scmp.lt.s32.totalorder %s16, 1
        %s333 = scalar_select %p332, %s16, 1
        %s334 = smul.addr %s333, 8
        %s335 = smul.addr %s334, 4
        %s336 = scalar_lea.vmem %s2, %s335
      $region52: #{basic_private_block.8} parent=47 // pred_fallthru
        _
    $region48: #{basic_private_block.8} parent=5 // pred_fallthru
      _
  $region6: #{basic_private_block.8} parent=0 // loop_footer
    %s14 = sadd.s32 1, %s10
  $region7: #{basic_private_block.8} parent=0 // loop_footer_branch
    %9 = sbr.rel target = $region3
  $region8: #{basic_private_block.8} parent=0 // loop_exit
    _

// kernel: basic_private_block.6
$region0: #{basic_private_block.6}
  #allocation0 [shape = 'u32[]', space=smem, size = 0x4, offset = 0x4, fixed_abs, tag = 'smem constant byte address 0x4 - core index']
  #allocation1 [shape = 'u32[72,128]{1,0:T(1,128)}', space=vmem, size = 0x9000, scoped, tag = 'internal scratch']
  %s0 = inlined_call_operand.vmem [shape: bf16[128,128], index: 0, kind: input, shape index: {}]
  %s1 = inlined_call_operand.vmem [shape: f32[1,128], index: 1, kind: input, shape index: {}]
  %s2 = inlined_call_operand.vmem [shape: f32[1,128], index: 2, kind: input, shape index: {}]
  %s3 = inlined_call_operand.vmem [shape: bf16[128,128], index: 3, kind: output, shape index: {}]
  %s4 = sld [smem:[#allocation0]]
  $region22: #{basic_private_block.6} parent=0
    _
  %s6 = ssub.s32 1, %s4
  %s7 = scalar_select 0, %s6, %s4
  // Predicated region
  $region2: #{basic_private_block.6} parent=0 // pred_check
    _
  $region3: #{basic_private_block.6} parent=0 // pred_check_branch
    %9 = sbr.rel (0) target = $region5
  $region4: #{basic_private_block.6} parent=0 // pred_region
    _
  $region5: #{basic_private_block.6} parent=0 // pred_fallthru
    _
  // Predicated region
  $region6: #{basic_private_block.6} parent=0 // pred_check
    _
  $region7: #{basic_private_block.6} parent=0 // pred_check_branch
    %11 = sbr.rel (0) target = $region9
  $region8: #{basic_private_block.6} parent=0 // pred_region
    _
  $region9: #{basic_private_block.6} parent=0 // pred_fallthru
    _
  // Predicated region
  $region10: #{basic_private_block.6} parent=0 // pred_check
    _
  $region11: #{basic_private_block.6} parent=0 // pred_check_branch
    %13 = sbr.rel (0) target = $region13
  $region12: #{basic_private_block.6} parent=0 // pred_region
    _
  $region13: #{basic_private_block.6} parent=0 // pred_fallthru
    _
  %v14 = vld [vmem:[%s0] sm:$0xf]
  %v15 = vld [vmem:[%s0 + $0x4] sm:$0xf]
  %v16 = vld [vmem:[%s0 + $0x8] sm:$0xf]
  %v17 = vld [vmem:[%s0 + $0xc] sm:$0xf]
  %v18 = vld [vmem:[%s0 + $0x10] sm:$0xf]
  %v19 = vld [vmem:[%s0 + $0x14] sm:$0xf]
  %v20 = vld [vmem:[%s0 + $0x18] sm:$0xf]
  %v21 = vld [vmem:[%s0 + $0x1c] sm:$0xf]
  %v22 = vld [vmem:[%s0 + $0x20] sm:$0xf]
  %v23 = vld [vmem:[%s0 + $0x24] sm:$0xf]
  %v24 = vld [vmem:[%s0 + $0x28] sm:$0xf]
  %v25 = vld [vmem:[%s0 + $0x2c] sm:$0xf]
  %v26 = vld [vmem:[%s0 + $0x30] sm:$0xf]
  %v27 = vld [vmem:[%s0 + $0x34] sm:$0xf]
  %v28 = vld [vmem:[%s0 + $0x38] sm:$0xf]
  %v29 = vld [vmem:[%s0 + $0x3c] sm:$0xf]
  %v30 = vunpack.c.l.bf16 %v14
  %v31 = vunpack.c.l.bf16 %v15
  %v32 = vunpack.c.l.bf16 %v16
  %v33 = vunpack.c.l.bf16 %v17
  %v34 = vunpack.c.l.bf16 %v18
  %v35 = vunpack.c.l.bf16 %v19
  %v36 = vunpack.c.l.bf16 %v20
  %v37 = vunpack.c.l.bf16 %v21
  %v38 = vunpack.c.l.bf16 %v22
  %v39 = vunpack.c.l.bf16 %v23
  %v40 = vunpack.c.l.bf16 %v24
  %v41 = vunpack.c.l.bf16 %v25
  %v42 = vunpack.c.l.bf16 %v26
  %v43 = vunpack.c.l.bf16 %v27
  %v44 = vunpack.c.l.bf16 %v28
  %v45 = vunpack.c.l.bf16 %v29
  %v46 = vld [vmem:[%s1] sm:$0x1]
  %v48 = vperm.slane %v46, 0
  %v50 = vmul.f32 %v30, %v48
  %v51 = vmul.f32 %v31, %v48
  %v52 = vmul.f32 %v32, %v48
  %v53 = vmul.f32 %v33, %v48
  %v54 = vmul.f32 %v34, %v48
  %v55 = vmul.f32 %v35, %v48
  %v56 = vmul.f32 %v36, %v48
  %v57 = vmul.f32 %v37, %v48
  %v58 = vmul.f32 %v38, %v48
  %v59 = vmul.f32 %v39, %v48
  %v60 = vmul.f32 %v40, %v48
  %v61 = vmul.f32 %v41, %v48
  %v62 = vmul.f32 %v42, %v48
  %v63 = vmul.f32 %v43, %v48
  %v64 = vmul.f32 %v44, %v48
  %v65 = vmul.f32 %v45, %v48
  %v66 = vld [vmem:[%s2] sm:$0x1]
  %v68 = vperm.slane %v66, 0
  %v70 = vadd.f32 %v50, %v68
  %v71 = vadd.f32 %v51, %v68
  %v72 = vadd.f32 %v52, %v68
  %v73 = vadd.f32 %v53, %v68
  %v74 = vadd.f32 %v54, %v68
  %v75 = vadd.f32 %v55, %v68
  %v76 = vadd.f32 %v56, %v68
  %v77 = vadd.f32 %v57, %v68
  %v78 = vadd.f32 %v58, %v68
  %v79 = vadd.f32 %v59, %v68
  %v80 = vadd.f32 %v60, %v68
  %v81 = vadd.f32 %v61, %v68
  %v82 = vadd.f32 %v62, %v68
  %v83 = vadd.f32 %v63, %v68
  %v84 = vadd.f32 %v64, %v68
  %v85 = vadd.f32 %v65, %v68
  %v86 = vmax.f32 %v70, 0.0
  %v87 = vmax.f32 %v71, 0.0
  %v88 = vmax.f32 %v72, 0.0
  %v89 = vmax.f32 %v73, 0.0
  %v90 = vmax.f32 %v74, 0.0
  %v91 = vmax.f32 %v75, 0.0
  %v92 = vmax.f32 %v76, 0.0
  %v93 = vmax.f32 %v77, 0.0
  %v94 = vmax.f32 %v78, 0.0
  %v95 = vmax.f32 %v79, 0.0
  %v96 = vmax.f32 %v80, 0.0
  %v97 = vmax.f32 %v81, 0.0
  %v98 = vmax.f32 %v82, 0.0
  %v99 = vmax.f32 %v83, 0.0
  %v100 = vmax.f32 %v84, 0.0
  %v101 = vmax.f32 %v85, 0.0
  %v102 = vpack.c.bf16 %v86, %v86
  %v103 = vpack.c.bf16 %v87, %v87
  %v104 = vpack.c.bf16 %v88, %v88
  %v105 = vpack.c.bf16 %v89, %v89
  %v106 = vpack.c.bf16 %v90, %v90
  %v107 = vpack.c.bf16 %v91, %v91
  %v108 = vpack.c.bf16 %v92, %v92
  %v109 = vpack.c.bf16 %v93, %v93
  %v110 = vpack.c.bf16 %v94, %v94
  %v111 = vpack.c.bf16 %v95, %v95
  %v112 = vpack.c.bf16 %v96, %v96
  %v113 = vpack.c.bf16 %v97, %v97
  %v114 = vpack.c.bf16 %v98, %v98
  %v115 = vpack.c.bf16 %v99, %v99
  %v116 = vpack.c.bf16 %v100, %v100
  %v117 = vpack.c.bf16 %v101, %v101
  %118 = vst [vmem:[%s3] sm:$0xf] %v102
  %119 = vst [vmem:[%s3 + $0x4] sm:$0xf] %v103
  %120 = vst [vmem:[%s3 + $0x8] sm:$0xf] %v104
  %121 = vst [vmem:[%s3 + $0xc] sm:$0xf] %v105
  %122 = vst [vmem:[%s3 + $0x10] sm:$0xf] %v106
  %123 = vst [vmem:[%s3 + $0x14] sm:$0xf] %v107
  %124 = vst [vmem:[%s3 + $0x18] sm:$0xf] %v108
  %125 = vst [vmem:[%s3 + $0x1c] sm:$0xf] %v109
  %126 = vst [vmem:[%s3 + $0x20] sm:$0xf] %v110
  %127 = vst [vmem:[%s3 + $0x24] sm:$0xf] %v111
  %128 = vst [vmem:[%s3 + $0x28] sm:$0xf] %v112
  %129 = vst [vmem:[%s3 + $0x2c] sm:$0xf] %v113
  %130 = vst [vmem:[%s3 + $0x30] sm:$0xf] %v114
  %131 = vst [vmem:[%s3 + $0x34] sm:$0xf] %v115
  %132 = vst [vmem:[%s3 + $0x38] sm:$0xf] %v116
  %133 = vst [vmem:[%s3 + $0x3c] sm:$0xf] %v117
  // Predicated region
  $region14: #{basic_private_block.6} parent=0 // pred_check
    _
  $region15: #{basic_private_block.6} parent=0 // pred_check_branch
    %135 = sbr.rel (0) target = $region17
  $region16: #{basic_private_block.6} parent=0 // pred_region
    _
  $region17: #{basic_private_block.6} parent=0 // pred_fallthru
    _
  // Predicated region
  $region18: #{basic_private_block.6} parent=0 // pred_check
    _
  $region19: #{basic_private_block.6} parent=0 // pred_check_branch
    %137 = sbr.rel (0) target = $region21
  $region20: #{basic_private_block.6} parent=0 // pred_region
    _
  $region21: #{basic_private_block.6} parent=0 // pred_fallthru
    _

// kernel: basic_private_block.5
$region0: #{basic_private_block.5}
  #allocation0 [shape = 'u32[]', space=smem, size = 0x4, offset = 0x4, fixed_abs, tag = 'smem constant byte address 0x4 - core index']
  #allocation1 [shape = 'u32[72,128]{1,0:T(1,128)}', space=vmem, size = 0x9000, scoped, tag = 'internal scratch']
  %s0 = inlined_call_operand.vmem [shape: bf16[2,9,9,16], index: 0, kind: input, shape index: {}]
  %s1 = inlined_call_operand.vmem [shape: bf16[2,9,9,16], index: 1, kind: input, shape index: {}]
  %s2 = inlined_call_operand.vmem [shape: bf16[2,9,9,16], index: 2, kind: input, shape index: {}]
  %s3 = inlined_call_operand.vmem [shape: bf16[2,9,9,16], index: 3, kind: input, shape index: {}]
  %s4 = inlined_call_operand.vmem [shape: bf16[9,16,128], index: 4, kind: input, shape index: {}]
  %s5 = inlined_call_operand.vmem [shape: bf16[2,64,128], index: 5, kind: output, shape index: {0}]
  %s6 = inlined_call_operand.vmem [shape: f32[8,128], index: 6, kind: output, shape index: {1}]
  %7 = xla_tuple %s5, %s6
  %s8 = sld [smem:[#allocation0]]
  $region65: #{basic_private_block.5} parent=0
    _
  %s10 = ssub.s32 1, %s8
  %s11 = scalar_select 0, %s10, %s8
  loop: start=0, step=1, limit=4
  $region2: #{basic_private_block.5} parent=0 // loop_pre_header
    _
  $region3: #{basic_private_block.5} parent=0 // loop_header
    %s13 = sphi 0, %s17
    %p14 = scmp.ge.s32.totalorder %s13, 4
    %s23 = sphi 0, %s25
    %s26 = sphi 0, %s23
    %s27 = sphi 0, %s26
    %s43 = sphi 0, %s27
    %s49 = sphi 0, %s51
    %s52 = sphi 0, %s49
    %s53 = sphi 0, %s52
    %s69 = sphi 0, %s53
    %s75 = sphi 0, %s77
    %s78 = sphi 0, %s75
    %s79 = sphi 0, %s78
    %s95 = sphi 0, %s79
    %s101 = sphi 0, %s103
    %s104 = sphi 0, %s101
    %s105 = sphi 0, %s104
    %s121 = sphi 0, %s105
    %s125 = sphi 0, %s125
    %s127 = sphi 0, %s125
    %s128 = sphi 0, %s127
    %s142 = sphi 0, %s128
    %s148 = sphi 0, %s150
    %s151 = sphi 0, %s148
    %s152 = sphi 0, %s151
    %s168 = sphi 0, %s152
    %s172 = sphi 0, %s172
    %s174 = sphi 0, %s172
    %s175 = sphi 0, %s174
    %s189 = sphi 0, %s175
  $region4: #{basic_private_block.5} parent=0 // loop_header_branch
    %16 = sbr.rel (%p14) target = $region8
  $region5: #{basic_private_block.5} parent=0 // loop_body
    %s18 = ssub.s32 %s13, 1
    %s19 = ssub.s32 %s13, 2
    %s20 = sadd.s32 %s13, 1
    %s21 = ssub.s32 %s13, %s20
    %p22 = scmp.eq.s32.totalorder %s21, 0
    %s24 = sadd.s32 %s23, 1
    %s25 = scalar_select %p22, %s23, %s24
    %p28 = pneg %p22
    %p29 = scmp.eq.s32.totalorder %s13, 1
    %p30 = por %p28, %p29
    %p31 = scmp.ne.s32.totalorder %s23, %s26
    %p32 = scmp.eq.s32.totalorder %s13, 0
    %p33 = por %p31, %p32
    %p34 = scmp.ne.s32.totalorder %s23, %s26
    %p35 = scmp.eq.s32.totalorder %s18, 1
    %p36 = por %p34, %p35
    %p37 = scmp.ne.s32.totalorder %s26, %s27
    %p38 = scmp.eq.s32.totalorder %s18, 0
    %p39 = por %p37, %p38
    %p40 = scmp.ne.s32.totalorder %s26, %s27
    %p41 = scmp.eq.s32.totalorder %s19, 1
    %p42 = por %p40, %p41
    %p44 = scmp.ne.s32.totalorder %s27, %s43
    %p45 = scmp.eq.s32.totalorder %s19, 0
    %p46 = por %p44, %p45
    %s47 = ssub.s32 %s13, %s20
    %p48 = scmp.eq.s32.totalorder %s47, 0
    %s50 = sadd.s32 %s49, 1
    %s51 = scalar_select %p48, %s49, %s50
    %p54 = pneg %p48
    %p55 = scmp.eq.s32.totalorder %s13, 1
    %p56 = por %p54, %p55
    %p57 = scmp.ne.s32.totalorder %s49, %s52
    %p58 = scmp.eq.s32.totalorder %s13, 0
    %p59 = por %p57, %p58
    %p60 = scmp.ne.s32.totalorder %s49, %s52
    %p61 = scmp.eq.s32.totalorder %s18, 1
    %p62 = por %p60, %p61
    %p63 = scmp.ne.s32.totalorder %s52, %s53
    %p64 = scmp.eq.s32.totalorder %s18, 0
    %p65 = por %p63, %p64
    %p66 = scmp.ne.s32.totalorder %s52, %s53
    %p67 = scmp.eq.s32.totalorder %s19, 1
    %p68 = por %p66, %p67
    %p70 = scmp.ne.s32.totalorder %s53, %s69
    %p71 = scmp.eq.s32.totalorder %s19, 0
    %p72 = por %p70, %p71
    %s73 = ssub.s32 %s13, %s20
    %p74 = scmp.eq.s32.totalorder %s73, 0
    %s76 = sadd.s32 %s75, 1
    %s77 = scalar_select %p74, %s75, %s76
    %p80 = pneg %p74
    %p81 = scmp.eq.s32.totalorder %s13, 1
    %p82 = por %p80, %p81
    %p83 = scmp.ne.s32.totalorder %s75, %s78
    %p84 = scmp.eq.s32.totalorder %s13, 0
    %p85 = por %p83, %p84
    %p86 = scmp.ne.s32.totalorder %s75, %s78
    %p87 = scmp.eq.s32.totalorder %s18, 1
    %p88 = por %p86, %p87
    %p89 = scmp.ne.s32.totalorder %s78, %s79
    %p90 = scmp.eq.s32.totalorder %s18, 0
    %p91 = por %p89, %p90
    %p92 = scmp.ne.s32.totalorder %s78, %s79
    %p93 = scmp.eq.s32.totalorder %s19, 1
    %p94 = por %p92, %p93
    %p96 = scmp.ne.s32.totalorder %s79, %s95
    %p97 = scmp.eq.s32.totalorder %s19, 0
    %p98 = por %p96, %p97
    %s99 = ssub.s32 %s13, %s20
    %p100 = scmp.eq.s32.totalorder %s99, 0
    %s102 = sadd.s32 %s101, 1
    %s103 = scalar_select %p100, %s101, %s102
    %p106 = pneg %p100
    %p107 = scmp.eq.s32.totalorder %s13, 1
    %p108 = por %p106, %p107
    %p109 = scmp.ne.s32.totalorder %s101, %s104
    %p110 = scmp.eq.s32.totalorder %s13, 0
    %p111 = por %p109, %p110
    %p112 = scmp.ne.s32.totalorder %s101, %s104
    %p113 = scmp.eq.s32.totalorder %s18, 1
    %p114 = por %p112, %p113
    %p115 = scmp.ne.s32.totalorder %s104, %s105
    %p116 = scmp.eq.s32.totalorder %s18, 0
    %p117 = por %p115, %p116
    %p118 = scmp.ne.s32.totalorder %s104, %s105
    %p119 = scmp.eq.s32.totalorder %s19, 1
    %p120 = por %p118, %p119
    %p122 = scmp.ne.s32.totalorder %s105, %s121
    %p123 = scmp.eq.s32.totalorder %s19, 0
    %p124 = por %p122, %p123
    %s126 = sadd.s32 %s125, 1
    %p129 = scmp.eq.s32.totalorder %s13, 1
    %p130 = scmp.ne.s32.totalorder %s125, %s127
    %p131 = scmp.eq.s32.totalorder %s13, 0
    %p132 = por %p130, %p131
    %p133 = scmp.ne.s32.totalorder %s125, %s127
    %p134 = scmp.eq.s32.totalorder %s18, 1
    %p135 = por %p133, %p134
    %p136 = scmp.ne.s32.totalorder %s127, %s128
    %p137 = scmp.eq.s32.totalorder %s18, 0
    %p138 = por %p136, %p137
    %p139 = scmp.ne.s32.totalorder %s127, %s128
    %p140 = scmp.eq.s32.totalorder %s19, 1
    %p141 = por %p139, %p140
    %p143 = scmp.ne.s32.totalorder %s128, %s142
    %p144 = scmp.eq.s32.totalorder %s19, 0
    %p145 = por %p143, %p144
    %s146 = ssub.s32 %s13, %s20
    %p147 = scmp.eq.s32.totalorder %s146, 0
    %s149 = sadd.s32 %s148, 1
    %s150 = scalar_select %p147, %s148, %s149
    %p153 = pneg %p147
    %p154 = scmp.eq.s32.totalorder %s13, 1
    %p155 = por %p153, %p154
    %p156 = scmp.ne.s32.totalorder %s148, %s151
    %p157 = scmp.eq.s32.totalorder %s13, 0
    %p158 = por %p156, %p157
    %p159 = scmp.ne.s32.totalorder %s148, %s151
    %p160 = scmp.eq.s32.totalorder %s18, 1
    %p161 = por %p159, %p160
    %p162 = scmp.ne.s32.totalorder %s151, %s152
    %p163 = scmp.eq.s32.totalorder %s18, 0
    %p164 = por %p162, %p163
    %p165 = scmp.ne.s32.totalorder %s151, %s152
    %p166 = scmp.eq.s32.totalorder %s19, 1
    %p167 = por %p165, %p166
    %p169 = scmp.ne.s32.totalorder %s152, %s168
    %p170 = scmp.eq.s32.totalorder %s19, 0
    %p171 = por %p169, %p170
    %s173 = sadd.s32 %s172, 1
    %p176 = scmp.eq.s32.totalorder %s13, 1
    %p177 = scmp.ne.s32.totalorder %s172, %s174
    %p178 = scmp.eq.s32.totalorder %s13, 0
    %p179 = por %p177, %p178
    %p180 = scmp.ne.s32.totalorder %s172, %s174
    %p181 = scmp.eq.s32.totalorder %s18, 1
    %p182 = por %p180, %p181
    %p183 = scmp.ne.s32.totalorder %s174, %s175
    %p184 = scmp.eq.s32.totalorder %s18, 0
    %p185 = por %p183, %p184
    %p186 = scmp.ne.s32.totalorder %s174, %s175
    %p187 = scmp.eq.s32.totalorder %s19, 1
    %p188 = por %p186, %p187
    %p190 = scmp.ne.s32.totalorder %s175, %s189
    %p191 = scmp.eq.s32.totalorder %s19, 0
    %p192 = por %p190, %p191
    %p193 = scmp.le.s32.totalorder 1, %s13
    %p194 = scmp.lt.s32.totalorder %s13, 3
    %p195 = pnand %p193, %p194
    %p196 = pneg %p195
    // Predicated region
    $region9: #{basic_private_block.5} parent=5 // pred_check
      _
    $region10: #{basic_private_block.5} parent=5 // pred_check_branch
      %198 = sbr.rel (%p195) target = $region12
    $region11: #{basic_private_block.5} parent=5 // pred_region
      %s199 = ssub.s32 %s13, 1
      // Predicated region
      $region13: #{basic_private_block.5} parent=11 // pred_check
        %p200 = pneg %p138
      $region14: #{basic_private_block.5} parent=11 // pred_check_branch
        %202 = sbr.rel (%p200) target = $region16
      $region15: #{basic_private_block.5} parent=11 // pred_region
        _
      $region16: #{basic_private_block.5} parent=11 // pred_fallthru
        _
    $region12: #{basic_private_block.5} parent=5 // pred_fallthru
      _
    %p203 = scmp.lt.s32.totalorder %s13, 2
    // Predicated region
    $region17: #{basic_private_block.5} parent=5 // pred_check
      %p204 = pneg %p203
    $region18: #{basic_private_block.5} parent=5 // pred_check_branch
      %206 = sbr.rel (%p204) target = $region20
    $region19: #{basic_private_block.5} parent=5 // pred_region
      // Predicated region
      $region21: #{basic_private_block.5} parent=19 // pred_check
        %p207 = pneg %p33
      $region22: #{basic_private_block.5} parent=19 // pred_check_branch
        %209 = sbr.rel (%p207) target = $region24
      $region23: #{basic_private_block.5} parent=19 // pred_region
        %p210 = scmp.lt.s32.totalorder %s13, 1
        %s211 = scalar_select %p210, %s13, 1
        %s212 = smul.addr %s211, 18
        %s213 = smul.addr %s212, 4
        %s214 = scalar_lea.vmem %s0, %s213
      $region24: #{basic_private_block.5} parent=19 // pred_fallthru
        _
      // Predicated region
      $region25: #{basic_private_block.5} parent=19 // pred_check
        %p215 = pneg %p59
      $region26: #{basic_private_block.5} parent=19 // pred_check_branch
        %217 = sbr.rel (%p215) target = $region28
      $region27: #{basic_private_block.5} parent=19 // pred_region
        %p218 = scmp.lt.s32.totalorder %s13, 1
        %s219 = scalar_select %p218, %s13, 1
        %s220 = smul.addr %s219, 18
        %s221 = smul.addr %s220, 4
        %s222 = scalar_lea.vmem %s1, %s221
      $region28: #{basic_private_block.5} parent=19 // pred_fallthru
        _
      // Predicated region
      $region29: #{basic_private_block.5} parent=19 // pred_check
        %p223 = pneg %p85
      $region30: #{basic_private_block.5} parent=19 // pred_check_branch
        %225 = sbr.rel (%p223) target = $region32
      $region31: #{basic_private_block.5} parent=19 // pred_region
        %p226 = scmp.lt.s32.totalorder %s13, 1
        %s227 = scalar_select %p226, %s13, 1
        %s228 = smul.addr %s227, 18
        %s229 = smul.addr %s228, 4
        %s230 = scalar_lea.vmem %s2, %s229
      $region32: #{basic_private_block.5} parent=19 // pred_fallthru
        _
      // Predicated region
      $region33: #{basic_private_block.5} parent=19 // pred_check
        %p231 = pneg %p111
      $region34: #{basic_private_block.5} parent=19 // pred_check_branch
        %233 = sbr.rel (%p231) target = $region36
      $region35: #{basic_private_block.5} parent=19 // pred_region
        %p234 = scmp.lt.s32.totalorder %s13, 1
        %s235 = scalar_select %p234, %s13, 1
        %s236 = smul.addr %s235, 18
        %s237 = smul.addr %s236, 4
        %s238 = scalar_lea.vmem %s3, %s237
      $region36: #{basic_private_block.5} parent=19 // pred_fallthru
        _
    $region20: #{basic_private_block.5} parent=5 // pred_fallthru
      _
    %p239 = scmp.le.s32.totalorder 1, %s13
    %p240 = scmp.lt.s32.totalorder %s13, 3
    %p241 = pnand %p239, %p240
    %p242 = pneg %p241
    // Predicated region
    $region37: #{basic_private_block.5} parent=5 // pred_check
      _
    $region38: #{basic_private_block.5} parent=5 // pred_check_branch
      %244 = sbr.rel (%p241) target = $region40
    $region39: #{basic_private_block.5} parent=5 // pred_region
      %s245 = ssub.s32 %s13, 1
      %p246 = scmp.lt.s32.totalorder %s18, 1
      %s247 = scalar_select %p246, %s18, 1
      %s248 = smul.addr %s247, 18
      %s249 = smul.addr %s248, 4
      %s250 = scalar_lea.vmem %s0, %s249
      %p251 = pneg %p39
      %p252 = pneg %p36
      %p253 = scmp.lt.s32.totalorder %s18, 1
      %s254 = scalar_select %p253, %s18, 1
      %s255 = smul.addr %s254, 18
      %s256 = smul.addr %s255, 4
      %s257 = scalar_lea.vmem %s1, %s256
      %p258 = pneg %p65
      %p259 = pneg %p62
      %p260 = scmp.lt.s32.totalorder %s18, 1
      %s261 = scalar_select %p260, %s18, 1
      %s262 = smul.addr %s261, 18
      %s263 = smul.addr %s262, 4
      %s264 = scalar_lea.vmem %s2, %s263
      %p265 = pneg %p91
      %p266 = pneg %p88
      %p267 = scmp.lt.s32.totalorder %s18, 1
      %s268 = scalar_select %p267, %s18, 1
      %s269 = smul.addr %s268, 18
      %s270 = smul.addr %s269, 4
      %s271 = scalar_lea.vmem %s3, %s270
      %p272 = pneg %p117
      %p273 = pneg %p114
      %p274 = pneg %p138
      %p275 = pneg %p135
      %p276 = pneg %p164
      %p277 = pneg %p161
      %p278 = scmp.lt.s32.totalorder %s18, 1
      %s279 = scalar_select %p278, %s18, 1
      %s280 = smul.addr %s279, 8
      %s281 = smul.addr %s280, 4
      %s282 = scalar_lea.vmem %s5, %s281
      %p283 = pneg %p185
      %p284 = pneg %p182
      %p285 = scmp.lt.s32.totalorder %s18, 1
      %s286 = scalar_select %p285, %s18, 1
      %s287 = smul.addr %s286, 18
      %s288 = smul.addr %s287, 4
      %s289 = scalar_lea.vmem %s0, %s288
      %p290 = scmp.lt.s32.totalorder %s18, 1
      %s291 = scalar_select %p290, %s18, 1
      %s292 = smul.addr %s291, 18
      %s293 = smul.addr %s292, 4
      %s294 = scalar_lea.vmem %s1, %s293
      %p295 = scmp.lt.s32.totalorder %s18, 1
      %s296 = scalar_select %p295, %s18, 1
      %s297 = smul.addr %s296, 18
      %s298 = smul.addr %s297, 4
      %s299 = scalar_lea.vmem %s2, %s298
      %p300 = scmp.lt.s32.totalorder %s18, 1
      %s301 = scalar_select %p300, %s18, 1
      %s302 = smul.addr %s301, 18
      %s303 = smul.addr %s302, 4
      %s304 = scalar_lea.vmem %s3, %s303
      %p305 = scmp.lt.s32.totalorder %s18, 1
      %s306 = scalar_select %p305, %s18, 1
      %s307 = smul.addr %s306, 8
      %s308 = smul.addr %s307, 4
      %s309 = scalar_lea.vmem %s5, %s308
      %v311 = vld [vmem:[%s289] sm:$0xf]
      %v312 = vld [vmem:[%s289 + $0x8] sm:$0xf]
      %v313 = vld [vmem:[%s289 + $0x10] sm:$0xf]
      %v314 = vld [vmem:[%s289 + $0x18] sm:$0xf]
      %v315 = vld [vmem:[%s289 + $0x20] sm:$0xf]
      %v316 = vld [vmem:[%s289 + $0x28] sm:$0xf]
      %v317 = vld [vmem:[%s289 + $0x30] sm:$0xf]
      %v318 = vld [vmem:[%s289 + $0x38] sm:$0xf]
      %v319 = vld [vmem:[%s4] sm:$0xf]
      %v320 = vld [vmem:[%s4 + $0x4] sm:$0xf]
      %v321 = vld [vmem:[%s294] sm:$0xf]
      %v322 = vld [vmem:[%s294 + $0x8] sm:$0xf]
      %v323 = vld [vmem:[%s294 + $0x10] sm:$0xf]
      %v324 = vld [vmem:[%s294 + $0x18] sm:$0xf]
      %v325 = vld [vmem:[%s294 + $0x20] sm:$0xf]
      %v326 = vld [vmem:[%s294 + $0x28] sm:$0xf]
      %v327 = vld [vmem:[%s294 + $0x30] sm:$0xf]
      %v328 = vld [vmem:[%s294 + $0x38] sm:$0xf]
      %s329 = scalar_lea.vmem %s4, 8
      %v330 = vld [vmem:[%s329] sm:$0xf]
      %v331 = vld [vmem:[%s329 + $0x4] sm:$0xf]
      %v340 = vunpack.c.l.b16 %v321
      %v341 = vunpack.c.l.b16 %v322
      %v342 = vunpack.c.l.b16 %v323
      %v343 = vunpack.c.l.b16 %v324
      %v344 = vunpack.c.l.b16 %v325
      %v345 = vunpack.c.l.b16 %v326
      %v346 = vunpack.c.l.b16 %v327
      %v347 = vunpack.c.l.b16 %v328
      %v348 = vpack.c.b16 %v341, %v340
      %v349 = vpack.c.b16 %v343, %v342
      %v350 = vpack.c.b16 %v345, %v344
      %v351 = vpack.c.b16 %v347, %v346
      %v354 = vunpack.c.l.b16 %v330
      %v355 = vunpack.c.l.b16 %v331
      %v356 = vpack.c.b16 %v355, %v354
      %vm358 = vcmask 130048
      %v360 = vsel %vm358, %v348, 0
      %v363 = vsel %vm358, %v349, 0
      %v366 = vsel %vm358, %v350, 0
      %v369 = vsel %vm358, %v351, 0
      %371 = vmatpush.bf16.msra.mxu0 0
      %372 = vmatpush.bf16.msra.mxu0 0
      %373 = vmatpush.bf16.msra.mxu0 0
      %374 = vmatpush.bf16.msra.mxu0 0
      %375 = vmatpush.bf16.msra.mxu0 0
      %376 = vmatpush.bf16.msra.mxu0 0
      %377 = vmatpush.bf16.msra.mxu0 0
      %378 = vmatpush.bf16.msra.mxu0 %v356
      %379 = vmatmul.bf16.gmra.mxu0 %v360
      %v380 = vpop.f32.mrf.mxu0
      %v381 = vadd.f32 0.0, %v380
      %v382 = vpop.f32.mrf.mxu0
      %v383 = vadd.f32 0.0, %v382
      %384 = vmatmul.bf16.gmra.mxu0 %v363
      %v385 = vpop.f32.mrf.mxu0
      %v386 = vadd.f32 0.0, %v385
      %v387 = vpop.f32.mrf.mxu0
      %v388 = vadd.f32 0.0, %v387
      %389 = vmatmul.bf16.gmra.mxu0 %v366
      %v390 = vpop.f32.mrf.mxu0
      %v391 = vadd.f32 0.0, %v390
      %v392 = vpop.f32.mrf.mxu0
      %v393 = vadd.f32 0.0, %v392
      %394 = vmatmul.bf16.gmra.mxu0 %v369
      %v395 = vpop.f32.mrf.mxu0
      %v396 = vadd.f32 0.0, %v395
      %v397 = vpop.f32.mrf.mxu0
      %v398 = vadd.f32 0.0, %v397
      %399 = vdwg.mxu0
      %v408 = vunpack.c.l.b16 %v311
      %v409 = vunpack.c.l.b16 %v312
      %v410 = vunpack.c.l.b16 %v313
      %v411 = vunpack.c.l.b16 %v314
      %v412 = vunpack.c.l.b16 %v315
      %v413 = vunpack.c.l.b16 %v316
      %v414 = vunpack.c.l.b16 %v317
      %v415 = vunpack.c.l.b16 %v318
      %v416 = vpack.c.b16 %v409, %v408
      %v417 = vpack.c.b16 %v411, %v410
      %v418 = vpack.c.b16 %v413, %v412
      %v419 = vpack.c.b16 %v415, %v414
      %v422 = vunpack.c.l.b16 %v319
      %v423 = vunpack.c.l.b16 %v320
      %v424 = vpack.c.b16 %v423, %v422
      %v427 = vsel %vm358, %v416, 0
      %v430 = vsel %vm358, %v417, 0
      %v433 = vsel %vm358, %v418, 0
      %v436 = vsel %vm358, %v419, 0
      %438 = vmatpush.bf16.msra.mxu0 0
      %439 = vmatpush.bf16.msra.mxu0 0
      %440 = vmatpush.bf16.msra.mxu0 0
      %441 = vmatpush.bf16.msra.mxu0 0
      %442 = vmatpush.bf16.msra.mxu0 0
      %443 = vmatpush.bf16.msra.mxu0 0
      %444 = vmatpush.bf16.msra.mxu0 0
      %445 = vmatpush.bf16.msra.mxu0 %v424
      %446 = vmatmul.bf16.gmra.mxu0 %v427
      %v447 = vpop.f32.mrf.mxu0
      %v448 = vadd.f32 %v381, %v447
      %v449 = vpop.f32.mrf.mxu0
      %v450 = vadd.f32 %v383, %v449
      %451 = vmatmul.bf16.gmra.mxu0 %v430
      %v452 = vpop.f32.mrf.mxu0
      %v453 = vadd.f32 %v386, %v452
      %v454 = vpop.f32.mrf.mxu0
      %v455 = vadd.f32 %v388, %v454
      %456 = vmatmul.bf16.gmra.mxu0 %v433
      %v457 = vpop.f32.mrf.mxu0
      %v458 = vadd.f32 %v391, %v457
      %v459 = vpop.f32.mrf.mxu0
      %v460 = vadd.f32 %v393, %v459
      %461 = vmatmul.bf16.gmra.mxu0 %v436
      %v462 = vpop.f32.mrf.mxu0
      %v463 = vadd.f32 %v396, %v462
      %v464 = vpop.f32.mrf.mxu0
      %v465 = vadd.f32 %v398, %v464
      %466 = vdwg.mxu0
      %v467 = vld [vmem:[%s289] sm:$0xf]
      %v468 = vld [vmem:[%s289 + $0x4] sm:$0x1]
      %v469 = vld [vmem:[%s289 + $0x8] sm:$0xf]
      %v470 = vld [vmem:[%s289 + $0xc] sm:$0x1]
      %v471 = vld [vmem:[%s289 + $0x10] sm:$0xf]
      %v472 = vld [vmem:[%s289 + $0x14] sm:$0x1]
      %v473 = vld [vmem:[%s289 + $0x18] sm:$0xf]
      %v474 = vld [vmem:[%s289 + $0x1c] sm:$0x1]
      %v475 = vld [vmem:[%s289 + $0x20] sm:$0xf]
      %v476 = vld [vmem:[%s289 + $0x24] sm:$0x1]
      %v477 = vld [vmem:[%s289 + $0x28] sm:$0xf]
      %v478 = vld [vmem:[%s289 + $0x2c] sm:$0x1]
      %v479 = vld [vmem:[%s289 + $0x30] sm:$0xf]
      %v480 = vld [vmem:[%s289 + $0x34] sm:$0x1]
      %v481 = vld [vmem:[%s289 + $0x38] sm:$0xf]
      %v482 = vld [vmem:[%s289 + $0x3c] sm:$0x1]
      %vm483 = vsmask.f32 3328
      %vm484 = vsmask.f32 7440
      %vm485 = vmor %vm483, %vm484
      %v487 = vshrl.u32 %v467, 16
      %v489 = vrot.slane %v487, 4
      %v490 = vshll.u32 %v467, 16
      %v492 = vrot.slane %v490, 5
      %v493 = vor.u32 %v489, %v492
      %v494 = vrot.slane %v493, 4
      %v496 = vshll.u32 %v468, 16
      %v498 = vrot.slane %v496, 5
      %v499 = vsel %vm485, %v494, %v498
      %v501 = vshrl.u32 %v469, 16
      %v503 = vrot.slane %v501, 4
      %v504 = vshll.u32 %v469, 16
      %v506 = vrot.slane %v504, 5
      %v507 = vor.u32 %v503, %v506
      %v508 = vrot.slane %v507, 4
      %v510 = vshll.u32 %v470, 16
      %v512 = vrot.slane %v510, 5
      %v513 = vsel %vm485, %v508, %v512
      %v515 = vshrl.u32 %v471, 16
      %v517 = vrot.slane %v515, 4
      %v518 = vshll.u32 %v471, 16
      %v520 = vrot.slane %v518, 5
      %v521 = vor.u32 %v517, %v520
      %v522 = vrot.slane %v521, 4
      %v524 = vshll.u32 %v472, 16
      %v526 = vrot.slane %v524, 5
      %v527 = vsel %vm485, %v522, %v526
      %v529 = vshrl.u32 %v473, 16
      %v531 = vrot.slane %v529, 4
      %v532 = vshll.u32 %v473, 16
      %v534 = vrot.slane %v532, 5
      %v535 = vor.u32 %v531, %v534
      %v536 = vrot.slane %v535, 4
      %v538 = vshll.u32 %v474, 16
      %v540 = vrot.slane %v538, 5
      %v541 = vsel %vm485, %v536, %v540
      %v543 = vshrl.u32 %v475, 16
      %v545 = vrot.slane %v543, 4
      %v546 = vshll.u32 %v475, 16
      %v548 = vrot.slane %v546, 5
      %v549 = vor.u32 %v545, %v548
      %v550 = vrot.slane %v549, 4
      %v552 = vshll.u32 %v476, 16
      %v554 = vrot.slane %v552, 5
      %v555 = vsel %vm485, %v550, %v554
      %v557 = vshrl.u32 %v477, 16
      %v559 = vrot.slane %v557, 4
      %v560 = vshll.u32 %v477, 16
      %v562 = vrot.slane %v560, 5
      %v563 = vor.u32 %v559, %v562
      %v564 = vrot.slane %v563, 4
      %v566 = vshll.u32 %v478, 16
      %v568 = vrot.slane %v566, 5
      %v569 = vsel %vm485, %v564, %v568
      %v571 = vshrl.u32 %v479, 16
      %v573 = vrot.slane %v571, 4
      %v574 = vshll.u32 %v479, 16
      %v576 = vrot.slane %v574, 5
      %v577 = vor.u32 %v573, %v576
      %v578 = vrot.slane %v577, 4
      %v580 = vshll.u32 %v480, 16
      %v582 = vrot.slane %v580, 5
      %v583 = vsel %vm485, %v578, %v582
      %v585 = vshrl.u32 %v481, 16
      %v587 = vrot.slane %v585, 4
      %v588 = vshll.u32 %v481, 16
      %v590 = vrot.slane %v588, 5
      %v591 = vor.u32 %v587, %v590
      %v592 = vrot.slane %v591, 4
      %v594 = vshll.u32 %v482, 16
      %v596 = vrot.slane %v594, 5
      %v597 = vsel %vm485, %v592, %v596
      %s598 = scalar_lea.vmem %s4, 16
      %v599 = vld [vmem:[%s598] sm:$0xf]
      %v600 = vld [vmem:[%s598 + $0x4] sm:$0xf]
      %v601 = vunpack.c.l.b16 %v499
      %v602 = vunpack.c.l.b16 %v513
      %v603 = vunpack.c.l.b16 %v527
      %v604 = vunpack.c.l.b16 %v541
      %v605 = vunpack.c.l.b16 %v555
      %v606 = vunpack.c.l.b16 %v569
      %v607 = vunpack.c.l.b16 %v583
      %v608 = vunpack.c.l.b16 %v597
      %v609 = vpack.c.b16 %v602, %v601
      %v610 = vpack.c.b16 %v604, %v603
      %v611 = vpack.c.b16 %v606, %v605
      %v612 = vpack.c.b16 %v608, %v607
      %v615 = vunpack.c.l.b16 %v599
      %v616 = vunpack.c.l.b16 %v600
      %v617 = vpack.c.b16 %v616, %v615
      %v620 = vsel %vm358, %v609, 0
      %v623 = vsel %vm358, %v610, 0
      %v626 = vsel %vm358, %v611, 0
      %v629 = vsel %vm358, %v612, 0
      %631 = vmatpush.bf16.msra.mxu0 0
      %632 = vmatpush.bf16.msra.mxu0 0
      %633 = vmatpush.bf16.msra.mxu0 0
      %634 = vmatpush.bf16.msra.mxu0 0
      %635 = vmatpush.bf16.msra.mxu0 0
      %636 = vmatpush.bf16.msra.mxu0 0
      %637 = vmatpush.bf16.msra.mxu0 0
      %638 = vmatpush.bf16.msra.mxu0 %v617
      %639 = vmatmul.bf16.gmra.mxu0 %v620
      %v640 = vpop.f32.mrf.mxu0
      %v641 = vadd.f32 0.0, %v640
      %v642 = vpop.f32.mrf.mxu0
      %v643 = vadd.f32 0.0, %v642
      %644 = vmatmul.bf16.gmra.mxu0 %v623
      %v645 = vpop.f32.mrf.mxu0
      %v646 = vadd.f32 0.0, %v645
      %v647 = vpop.f32.mrf.mxu0
      %v648 = vadd.f32 0.0, %v647
      %649 = vmatmul.bf16.gmra.mxu0 %v626
      %v650 = vpop.f32.mrf.mxu0
      %v651 = vadd.f32 0.0, %v650
      %v652 = vpop.f32.mrf.mxu0
      %v653 = vadd.f32 0.0, %v652
      %654 = vmatmul.bf16.gmra.mxu0 %v629
      %v655 = vpop.f32.mrf.mxu0
      %v656 = vadd.f32 0.0, %v655
      %v657 = vpop.f32.mrf.mxu0
      %v658 = vadd.f32 0.0, %v657
      %659 = vdwg.mxu0
      %v660 = vadd.f32 %v448, %v641
      %v661 = vadd.f32 %v450, %v643
      %v662 = vadd.f32 %v453, %v646
      %v663 = vadd.f32 %v455, %v648
      %v664 = vadd.f32 %v458, %v651
      %v665 = vadd.f32 %v460, %v653
      %v666 = vadd.f32 %v463, %v656
      %v667 = vadd.f32 %v465, %v658
      %v668 = vld [vmem:[%s299] sm:$0xf]
      %v669 = vld [vmem:[%s299 + $0x8] sm:$0xf]
      %v670 = vld [vmem:[%s299 + $0x10] sm:$0xf]
      %v671 = vld [vmem:[%s299 + $0x18] sm:$0xf]
      %v672 = vld [vmem:[%s299 + $0x20] sm:$0xf]
      %v673 = vld [vmem:[%s299 + $0x28] sm:$0xf]
      %v674 = vld [vmem:[%s299 + $0x30] sm:$0xf]
      %v675 = vld [vmem:[%s299 + $0x38] sm:$0xf]
      %s676 = scalar_lea.vmem %s4, 24
      %v677 = vld [vmem:[%s676] sm:$0xf]
      %v678 = vld [vmem:[%s676 + $0x4] sm:$0xf]
      %v687 = vunpack.c.l.b16 %v668
      %v688 = vunpack.c.l.b16 %v669
      %v689 = vunpack.c.l.b16 %v670
      %v690 = vunpack.c.l.b16 %v671
      %v691 = vunpack.c.l.b16 %v672
      %v692 = vunpack.c.l.b16 %v673
      %v693 = vunpack.c.l.b16 %v674
      %v694 = vunpack.c.l.b16 %v675
      %v695 = vpack.c.b16 %v688, %v687
      %v696 = vpack.c.b16 %v690, %v689
      %v697 = vpack.c.b16 %v692, %v691
      %v698 = vpack.c.b16 %v694, %v693
      %v701 = vunpack.c.l.b16 %v677
      %v702 = vunpack.c.l.b16 %v678
      %v703 = vpack.c.b16 %v702, %v701
      %v706 = vsel %vm358, %v695, 0
      %v709 = vsel %vm358, %v696, 0
      %v712 = vsel %vm358, %v697, 0
      %v715 = vsel %vm358, %v698, 0
      %717 = vmatpush.bf16.msra.mxu0 0
      %718 = vmatpush.bf16.msra.mxu0 0
      %719 = vmatpush.bf16.msra.mxu0 0
      %720 = vmatpush.bf16.msra.mxu0 0
      %721 = vmatpush.bf16.msra.mxu0 0
      %722 = vmatpush.bf16.msra.mxu0 0
      %723 = vmatpush.bf16.msra.mxu0 0
      %724 = vmatpush.bf16.msra.mxu0 %v703
      %725 = vmatmul.bf16.gmra.mxu0 %v706
      %v726 = vpop.f32.mrf.mxu0
      %v727 = vadd.f32 0.0, %v726
      %v728 = vpop.f32.mrf.mxu0
      %v729 = vadd.f32 0.0, %v728
      %730 = vmatmul.bf16.gmra.mxu0 %v709
      %v731 = vpop.f32.mrf.mxu0
      %v732 = vadd.f32 0.0, %v731
      %v733 = vpop.f32.mrf.mxu0
      %v734 = vadd.f32 0.0, %v733
      %735 = vmatmul.bf16.gmra.mxu0 %v712
      %v736 = vpop.f32.mrf.mxu0
      %v737 = vadd.f32 0.0, %v736
      %v738 = vpop.f32.mrf.mxu0
      %v739 = vadd.f32 0.0, %v738
      %740 = vmatmul.bf16.gmra.mxu0 %v715
      %v741 = vpop.f32.mrf.mxu0
      %v742 = vadd.f32 0.0, %v741
      %v743 = vpop.f32.mrf.mxu0
      %v744 = vadd.f32 0.0, %v743
      %745 = vdwg.mxu0
      %v746 = vadd.f32 %v660, %v727
      %v747 = vadd.f32 %v661, %v729
      %v748 = vadd.f32 %v662, %v732
      %v749 = vadd.f32 %v663, %v734
      %v750 = vadd.f32 %v664, %v737
      %v751 = vadd.f32 %v665, %v739
      %v752 = vadd.f32 %v666, %v742
      %v753 = vadd.f32 %v667, %v744
      %v754 = vld [vmem:[%s304] sm:$0xf]
      %v755 = vld [vmem:[%s304 + $0x8] sm:$0xf]
      %v756 = vld [vmem:[%s304 + $0x10] sm:$0xf]
      %v757 = vld [vmem:[%s304 + $0x18] sm:$0xf]
      %v758 = vld [vmem:[%s304 + $0x20] sm:$0xf]
      %v759 = vld [vmem:[%s304 + $0x28] sm:$0xf]
      %v760 = vld [vmem:[%s304 + $0x30] sm:$0xf]
      %v761 = vld [vmem:[%s304 + $0x38] sm:$0xf]
      %s762 = scalar_lea.vmem %s4, 32
      %v763 = vld [vmem:[%s762] sm:$0xf]
      %v764 = vld [vmem:[%s762 + $0x4] sm:$0xf]
      %v773 = vunpack.c.l.b16 %v754
      %v774 = vunpack.c.l.b16 %v755
      %v775 = vunpack.c.l.b16 %v756
      %v776 = vunpack.c.l.b16 %v757
      %v777 = vunpack.c.l.b16 %v758
      %v778 = vunpack.c.l.b16 %v759
      %v779 = vunpack.c.l.b16 %v760
      %v780 = vunpack.c.l.b16 %v761
      %v781 = vpack.c.b16 %v774, %v773
      %v782 = vpack.c.b16 %v776, %v775
      %v783 = vpack.c.b16 %v778, %v777
      %v784 = vpack.c.b16 %v780, %v779
      %v787 = vunpack.c.l.b16 %v763
      %v788 = vunpack.c.l.b16 %v764
      %v789 = vpack.c.b16 %v788, %v787
      %v792 = vsel %vm358, %v781, 0
      %v795 = vsel %vm358, %v782, 0
      %v798 = vsel %vm358, %v783, 0
      %v801 = vsel %vm358, %v784, 0
      %803 = vmatpush.bf16.msra.mxu0 0
      %804 = vmatpush.bf16.msra.mxu0 0
      %805 = vmatpush.bf16.msra.mxu0 0
      %806 = vmatpush.bf16.msra.mxu0 0
      %807 = vmatpush.bf16.msra.mxu0 0
      %808 = vmatpush.bf16.msra.mxu0 0
      %809 = vmatpush.bf16.msra.mxu0 0
      %810 = vmatpush.bf16.msra.mxu0 %v789
      %811 = vmatmul.bf16.gmra.mxu0 %v792
      %v812 = vpop.f32.mrf.mxu0
      %v813 = vadd.f32 0.0, %v812
      %v814 = vpop.f32.mrf.mxu0
      %v815 = vadd.f32 0.0, %v814
      %816 = vmatmul.bf16.gmra.mxu0 %v795
      %v817 = vpop.f32.mrf.mxu0
      %v818 = vadd.f32 0.0, %v817
      %v819 = vpop.f32.mrf.mxu0
      %v820 = vadd.f32 0.0, %v819
      %821 = vmatmul.bf16.gmra.mxu0 %v798
      %v822 = vpop.f32.mrf.mxu0
      %v823 = vadd.f32 0.0, %v822
      %v824 = vpop.f32.mrf.mxu0
      %v825 = vadd.f32 0.0, %v824
      %826 = vmatmul.bf16.gmra.mxu0 %v801
      %v827 = vpop.f32.mrf.mxu0
      %v828 = vadd.f32 0.0, %v827
      %v829 = vpop.f32.mrf.mxu0
      %v830 = vadd.f32 0.0, %v829
      %831 = vdwg.mxu0
      %v832 = vadd.f32 %v746, %v813
      %v833 = vadd.f32 %v747, %v815
      %v834 = vadd.f32 %v748, %v818
      %v835 = vadd.f32 %v749, %v820
      %v836 = vadd.f32 %v750, %v823
      %v837 = vadd.f32 %v751, %v825
      %v838 = vadd.f32 %v752, %v828
      %v839 = vadd.f32 %v753, %v830
      %v840 = vld [vmem:[%s299] sm:$0xf]
      %v841 = vld [vmem:[%s299 + $0x4] sm:$0x1]
      %v842 = vld [vmem:[%s299 + $0x8] sm:$0xf]
      %v843 = vld [vmem:[%s299 + $0xc] sm:$0x1]
      %v844 = vld [vmem:[%s299 + $0x10] sm:$0xf]
      %v845 = vld [vmem:[%s299 + $0x14] sm:$0x1]
      %v846 = vld [vmem:[%s299 + $0x18] sm:$0xf]
      %v847 = vld [vmem:[%s299 + $0x1c] sm:$0x1]
      %v848 = vld [vmem:[%s299 + $0x20] sm:$0xf]
      %v849 = vld [vmem:[%s299 + $0x24] sm:$0x1]
      %v850 = vld [vmem:[%s299 + $0x28] sm:$0xf]
      %v851 = vld [vmem:[%s299 + $0x2c] sm:$0x1]
      %v852 = vld [vmem:[%s299 + $0x30] sm:$0xf]
      %v853 = vld [vmem:[%s299 + $0x34] sm:$0x1]
      %v854 = vld [vmem:[%s299 + $0x38] sm:$0xf]
      %v855 = vld [vmem:[%s299 + $0x3c] sm:$0x1]
      %v857 = vshrl.u32 %v840, 16
      %v859 = vrot.slane %v857, 4
      %v860 = vshll.u32 %v840, 16
      %v862 = vrot.slane %v860, 5
      %v863 = vor.u32 %v859, %v862
      %v864 = vrot.slane %v863, 4
      %v866 = vshll.u32 %v841, 16
      %v868 = vrot.slane %v866, 5
      %v869 = vsel %vm485, %v864, %v868
      %v871 = vshrl.u32 %v842, 16
      %v873 = vrot.slane %v871, 4
      %v874 = vshll.u32 %v842, 16
      %v876 = vrot.slane %v874, 5
      %v877 = vor.u32 %v873, %v876
      %v878 = vrot.slane %v877, 4
      %v880 = vshll.u32 %v843, 16
      %v882 = vrot.slane %v880, 5
      %v883 = vsel %vm485, %v878, %v882
      %v885 = vshrl.u32 %v844, 16
      %v887 = vrot.slane %v885, 4
      %v888 = vshll.u32 %v844, 16
      %v890 = vrot.slane %v888, 5
      %v891 = vor.u32 %v887, %v890
      %v892 = vrot.slane %v891, 4
      %v894 = vshll.u32 %v845, 16
      %v896 = vrot.slane %v894, 5
      %v897 = vsel %vm485, %v892, %v896
      %v899 = vshrl.u32 %v846, 16
      %v901 = vrot.slane %v899, 4
      %v902 = vshll.u32 %v846, 16
      %v904 = vrot.slane %v902, 5
      %v905 = vor.u32 %v901, %v904
      %v906 = vrot.slane %v905, 4
      %v908 = vshll.u32 %v847, 16
      %v910 = vrot.slane %v908, 5
      %v911 = vsel %vm485, %v906, %v910
      %v913 = vshrl.u32 %v848, 16
      %v915 = vrot.slane %v913, 4
      %v916 = vshll.u32 %v848, 16
      %v918 = vrot.slane %v916, 5
      %v919 = vor.u32 %v915, %v918
      %v920 = vrot.slane %v919, 4
      %v922 = vshll.u32 %v849, 16
      %v924 = vrot.slane %v922, 5
      %v925 = vsel %vm485, %v920, %v924
      %v927 = vshrl.u32 %v850, 16
      %v929 = vrot.slane %v927, 4
      %v930 = vshll.u32 %v850, 16
      %v932 = vrot.slane %v930, 5
      %v933 = vor.u32 %v929, %v932
      %v934 = vrot.slane %v933, 4
      %v936 = vshll.u32 %v851, 16
      %v938 = vrot.slane %v936, 5
      %v939 = vsel %vm485, %v934, %v938
      %v941 = vshrl.u32 %v852, 16
      %v943 = vrot.slane %v941, 4
      %v944 = vshll.u32 %v852, 16
      %v946 = vrot.slane %v944, 5
      %v947 = vor.u32 %v943, %v946
      %v948 = vrot.slane %v947, 4
      %v950 = vshll.u32 %v853, 16
      %v952 = vrot.slane %v950, 5
      %v953 = vsel %vm485, %v948, %v952
      %v955 = vshrl.u32 %v854, 16
      %v957 = vrot.slane %v955, 4
      %v958 = vshll.u32 %v854, 16
      %v960 = vrot.slane %v958, 5
      %v961 = vor.u32 %v957, %v960
      %v962 = vrot.slane %v961, 4
      %v964 = vshll.u32 %v855, 16
      %v966 = vrot.slane %v964, 5
      %v967 = vsel %vm485, %v962, %v966
      %s968 = scalar_lea.vmem %s4, 40
      %v969 = vld [vmem:[%s968] sm:$0xf]
      %v970 = vld [vmem:[%s968 + $0x4] sm:$0xf]
      %v971 = vunpack.c.l.b16 %v869
      %v972 = vunpack.c.l.b16 %v883
      %v973 = vunpack.c.l.b16 %v897
      %v974 = vunpack.c.l.b16 %v911
      %v975 = vunpack.c.l.b16 %v925
      %v976 = vunpack.c.l.b16 %v939
      %v977 = vunpack.c.l.b16 %v953
      %v978 = vunpack.c.l.b16 %v967
      %v979 = vpack.c.b16 %v972, %v971
      %v980 = vpack.c.b16 %v974, %v973
      %v981 = vpack.c.b16 %v976, %v975
      %v982 = vpack.c.b16 %v978, %v977
      %v985 = vunpack.c.l.b16 %v969
      %v986 = vunpack.c.l.b16 %v970
      %v987 = vpack.c.b16 %v986, %v985
      %v990 = vsel %vm358, %v979, 0
      %v993 = vsel %vm358, %v980, 0
      %v996 = vsel %vm358, %v981, 0
      %v999 = vsel %vm358, %v982, 0
      %1001 = vmatpush.bf16.msra.mxu0 0
      %1002 = vmatpush.bf16.msra.mxu0 0
      %1003 = vmatpush.bf16.msra.mxu0 0
      %1004 = vmatpush.bf16.msra.mxu0 0
      %1005 = vmatpush.bf16.msra.mxu0 0
      %1006 = vmatpush.bf16.msra.mxu0 0
      %1007 = vmatpush.bf16.msra.mxu0 0
      %1008 = vmatpush.bf16.msra.mxu0 %v987
      %1009 = vmatmul.bf16.gmra.mxu0 %v990
      %v1010 = vpop.f32.mrf.mxu0
      %v1011 = vadd.f32 0.0, %v1010
      %v1012 = vpop.f32.mrf.mxu0
      %v1013 = vadd.f32 0.0, %v1012
      %1014 = vmatmul.bf16.gmra.mxu0 %v993
      %v1015 = vpop.f32.mrf.mxu0
      %v1016 = vadd.f32 0.0, %v1015
      %v1017 = vpop.f32.mrf.mxu0
      %v1018 = vadd.f32 0.0, %v1017
      %1019 = vmatmul.bf16.gmra.mxu0 %v996
      %v1020 = vpop.f32.mrf.mxu0
      %v1021 = vadd.f32 0.0, %v1020
      %v1022 = vpop.f32.mrf.mxu0
      %v1023 = vadd.f32 0.0, %v1022
      %1024 = vmatmul.bf16.gmra.mxu0 %v999
      %v1025 = vpop.f32.mrf.mxu0
      %v1026 = vadd.f32 0.0, %v1025
      %v1027 = vpop.f32.mrf.mxu0
      %v1028 = vadd.f32 0.0, %v1027
      %1029 = vdwg.mxu0
      %v1030 = vadd.f32 %v832, %v1011
      %v1031 = vadd.f32 %v833, %v1013
      %v1032 = vadd.f32 %v834, %v1016
      %v1033 = vadd.f32 %v835, %v1018
      %v1034 = vadd.f32 %v836, %v1021
      %v1035 = vadd.f32 %v837, %v1023
      %v1036 = vadd.f32 %v838, %v1026
      %v1037 = vadd.f32 %v839, %v1028
      %s1038 = scalar_lea.vmem %s289, 8
      %v1039 = vld [vmem:[%s1038] sm:$0xf]
      %v1040 = vld [vmem:[%s1038 + $0x8] sm:$0xf]
      %v1041 = vld [vmem:[%s1038 + $0x10] sm:$0xf]
      %v1042 = vld [vmem:[%s1038 + $0x18] sm:$0xf]
      %v1043 = vld [vmem:[%s1038 + $0x20] sm:$0xf]
      %v1044 = vld [vmem:[%s1038 + $0x28] sm:$0xf]
      %v1045 = vld [vmem:[%s1038 + $0x30] sm:$0xf]
      %v1046 = vld [vmem:[%s1038 + $0x38] sm:$0xf]
      %s1047 = scalar_lea.vmem %s4, 48
      %v1048 = vld [vmem:[%s1047] sm:$0xf]
      %v1049 = vld [vmem:[%s1047 + $0x4] sm:$0xf]
      %v1058 = vunpack.c.l.b16 %v1039
      %v1059 = vunpack.c.l.b16 %v1040
      %v1060 = vunpack.c.l.b16 %v1041
      %v1061 = vunpack.c.l.b16 %v1042
      %v1062 = vunpack.c.l.b16 %v1043
      %v1063 = vunpack.c.l.b16 %v1044
      %v1064 = vunpack.c.l.b16 %v1045
      %v1065 = vunpack.c.l.b16 %v1046
      %v1066 = vpack.c.b16 %v1059, %v1058
      %v1067 = vpack.c.b16 %v1061, %v1060
      %v1068 = vpack.c.b16 %v1063, %v1062
      %v1069 = vpack.c.b16 %v1065, %v1064
      %v1072 = vunpack.c.l.b16 %v1048
      %v1073 = vunpack.c.l.b16 %v1049
      %v1074 = vpack.c.b16 %v1073, %v1072
      %v1077 = vsel %vm358, %v1066, 0
      %v1080 = vsel %vm358, %v1067, 0
      %v1083 = vsel %vm358, %v1068, 0
      %v1086 = vsel %vm358, %v1069, 0
      %1088 = vmatpush.bf16.msra.mxu0 0
      %1089 = vmatpush.bf16.msra.mxu0 0
      %1090 = vmatpush.bf16.msra.mxu0 0
      %1091 = vmatpush.bf16.msra.mxu0 0
      %1092 = vmatpush.bf16.msra.mxu0 0
      %1093 = vmatpush.bf16.msra.mxu0 0
      %1094 = vmatpush.bf16.msra.mxu0 0
      %1095 = vmatpush.bf16.msra.mxu0 %v1074
      %1096 = vmatmul.bf16.gmra.mxu0 %v1077
      %v1097 = vpop.f32.mrf.mxu0
      %v1098 = vadd.f32 0.0, %v1097
      %v1099 = vpop.f32.mrf.mxu0
      %v1100 = vadd.f32 0.0, %v1099
      %1101 = vmatmul.bf16.gmra.mxu0 %v1080
      %v1102 = vpop.f32.mrf.mxu0
      %v1103 = vadd.f32 0.0, %v1102
      %v1104 = vpop.f32.mrf.mxu0
      %v1105 = vadd.f32 0.0, %v1104
      %1106 = vmatmul.bf16.gmra.mxu0 %v1083
      %v1107 = vpop.f32.mrf.mxu0
      %v1108 = vadd.f32 0.0, %v1107
      %v1109 = vpop.f32.mrf.mxu0
      %v1110 = vadd.f32 0.0, %v1109
      %1111 = vmatmul.bf16.gmra.mxu0 %v1086
      %v1112 = vpop.f32.mrf.mxu0
      %v1113 = vadd.f32 0.0, %v1112
      %v1114 = vpop.f32.mrf.mxu0
      %v1115 = vadd.f32 0.0, %v1114
      %1116 = vdwg.mxu0
      %v1117 = vadd.f32 %v1030, %v1098
      %v1118 = vadd.f32 %v1031, %v1100
      %v1119 = vadd.f32 %v1032, %v1103
      %v1120 = vadd.f32 %v1033, %v1105
      %v1121 = vadd.f32 %v1034, %v1108
      %v1122 = vadd.f32 %v1035, %v1110
      %v1123 = vadd.f32 %v1036, %v1113
      %v1124 = vadd.f32 %v1037, %v1115
      %s1125 = scalar_lea.vmem %s294, 8
      %v1126 = vld [vmem:[%s1125] sm:$0xf]
      %v1127 = vld [vmem:[%s1125 + $0x8] sm:$0xf]
      %v1128 = vld [vmem:[%s1125 + $0x10] sm:$0xf]
      %v1129 = vld [vmem:[%s1125 + $0x18] sm:$0xf]
      %v1130 = vld [vmem:[%s1125 + $0x20] sm:$0xf]
      %v1131 = vld [vmem:[%s1125 + $0x28] sm:$0xf]
      %v1132 = vld [vmem:[%s1125 + $0x30] sm:$0xf]
      %v1133 = vld [vmem:[%s1125 + $0x38] sm:$0xf]
      %s1134 = scalar_lea.vmem %s4, 56
      %v1135 = vld [vmem:[%s1134] sm:$0xf]
      %v1136 = vld [vmem:[%s1134 + $0x4] sm:$0xf]
      %v1145 = vunpack.c.l.b16 %v1126
      %v1146 = vunpack.c.l.b16 %v1127
      %v1147 = vunpack.c.l.b16 %v1128
      %v1148 = vunpack.c.l.b16 %v1129
      %v1149 = vunpack.c.l.b16 %v1130
      %v1150 = vunpack.c.l.b16 %v1131
      %v1151 = vunpack.c.l.b16 %v1132
      %v1152 = vunpack.c.l.b16 %v1133
      %v1153 = vpack.c.b16 %v1146, %v1145
      %v1154 = vpack.c.b16 %v1148, %v1147
      %v1155 = vpack.c.b16 %v1150, %v1149
      %v1156 = vpack.c.b16 %v1152, %v1151
      %v1159 = vunpack.c.l.b16 %v1135
      %v1160 = vunpack.c.l.b16 %v1136
      %v1161 = vpack.c.b16 %v1160, %v1159
      %v1164 = vsel %vm358, %v1153, 0
      %v1167 = vsel %vm358, %v1154, 0
      %v1170 = vsel %vm358, %v1155, 0
      %v1173 = vsel %vm358, %v1156, 0
      %1175 = vmatpush.bf16.msra.mxu0 0
      %1176 = vmatpush.bf16.msra.mxu0 0
      %1177 = vmatpush.bf16.msra.mxu0 0
      %1178 = vmatpush.bf16.msra.mxu0 0
      %1179 = vmatpush.bf16.msra.mxu0 0
      %1180 = vmatpush.bf16.msra.mxu0 0
      %1181 = vmatpush.bf16.msra.mxu0 0
      %1182 = vmatpush.bf16.msra.mxu0 %v1161
      %1183 = vmatmul.bf16.gmra.mxu0 %v1164
      %v1184 = vpop.f32.mrf.mxu0
      %v1185 = vadd.f32 0.0, %v1184
      %v1186 = vpop.f32.mrf.mxu0
      %v1187 = vadd.f32 0.0, %v1186
      %1188 = vmatmul.bf16.gmra.mxu0 %v1167
      %v1189 = vpop.f32.mrf.mxu0
      %v1190 = vadd.f32 0.0, %v1189
      %v1191 = vpop.f32.mrf.mxu0
      %v1192 = vadd.f32 0.0, %v1191
      %1193 = vmatmul.bf16.gmra.mxu0 %v1170
      %v1194 = vpop.f32.mrf.mxu0
      %v1195 = vadd.f32 0.0, %v1194
      %v1196 = vpop.f32.mrf.mxu0
      %v1197 = vadd.f32 0.0, %v1196
      %1198 = vmatmul.bf16.gmra.mxu0 %v1173
      %v1199 = vpop.f32.mrf.mxu0
      %v1200 = vadd.f32 0.0, %v1199
      %v1201 = vpop.f32.mrf.mxu0
      %v1202 = vadd.f32 0.0, %v1201
      %1203 = vdwg.mxu0
      %v1204 = vadd.f32 %v1117, %v1185
      %v1205 = vadd.f32 %v1118, %v1187
      %v1206 = vadd.f32 %v1119, %v1190
      %v1207 = vadd.f32 %v1120, %v1192
      %v1208 = vadd.f32 %v1121, %v1195
      %v1209 = vadd.f32 %v1122, %v1197
      %v1210 = vadd.f32 %v1123, %v1200
      %v1211 = vadd.f32 %v1124, %v1202
      %v1212 = vld [vmem:[%s1038] sm:$0xf]
      %v1213 = vld [vmem:[%s1038 + $0x4] sm:$0x1]
      %v1214 = vld [vmem:[%s1038 + $0x8] sm:$0xf]
      %v1215 = vld [vmem:[%s1038 + $0xc] sm:$0x1]
      %v1216 = vld [vmem:[%s1038 + $0x10] sm:$0xf]
      %v1217 = vld [vmem:[%s1038 + $0x14] sm:$0x1]
      %v1218 = vld [vmem:[%s1038 + $0x18] sm:$0xf]
      %v1219 = vld [vmem:[%s1038 + $0x1c] sm:$0x1]
      %v1220 = vld [vmem:[%s1038 + $0x20] sm:$0xf]
      %v1221 = vld [vmem:[%s1038 + $0x24] sm:$0x1]
      %v1222 = vld [vmem:[%s1038 + $0x28] sm:$0xf]
      %v1223 = vld [vmem:[%s1038 + $0x2c] sm:$0x1]
      %v1224 = vld [vmem:[%s1038 + $0x30] sm:$0xf]
      %v1225 = vld [vmem:[%s1038 + $0x34] sm:$0x1]
      %v1226 = vld [vmem:[%s1038 + $0x38] sm:$0xf]
      %v1227 = vld [vmem:[%s1038 + $0x3c] sm:$0x1]
      %v1229 = vshrl.u32 %v1212, 16
      %v1231 = vrot.slane %v1229, 4
      %v1232 = vshll.u32 %v1212, 16
      %v1234 = vrot.slane %v1232, 5
      %v1235 = vor.u32 %v1231, %v1234
      %v1236 = vrot.slane %v1235, 4
      %v1238 = vshll.u32 %v1213, 16
      %v1240 = vrot.slane %v1238, 5
      %v1241 = vsel %vm485, %v1236, %v1240
      %v1243 = vshrl.u32 %v1214, 16
      %v1245 = vrot.slane %v1243, 4
      %v1246 = vshll.u32 %v1214, 16
      %v1248 = vrot.slane %v1246, 5
      %v1249 = vor.u32 %v1245, %v1248
      %v1250 = vrot.slane %v1249, 4
      %v1252 = vshll.u32 %v1215, 16
      %v1254 = vrot.slane %v1252, 5
      %v1255 = vsel %vm485, %v1250, %v1254
      %v1257 = vshrl.u32 %v1216, 16
      %v1259 = vrot.slane %v1257, 4
      %v1260 = vshll.u32 %v1216, 16
      %v1262 = vrot.slane %v1260, 5
      %v1263 = vor.u32 %v1259, %v1262
      %v1264 = vrot.slane %v1263, 4
      %v1266 = vshll.u32 %v1217, 16
      %v1268 = vrot.slane %v1266, 5
      %v1269 = vsel %vm485, %v1264, %v1268
      %v1271 = vshrl.u32 %v1218, 16
      %v1273 = vrot.slane %v1271, 4
      %v1274 = vshll.u32 %v1218, 16
      %v1276 = vrot.slane %v1274, 5
      %v1277 = vor.u32 %v1273, %v1276
      %v1278 = vrot.slane %v1277, 4
      %v1280 = vshll.u32 %v1219, 16
      %v1282 = vrot.slane %v1280, 5
      %v1283 = vsel %vm485, %v1278, %v1282
      %v1285 = vshrl.u32 %v1220, 16
      %v1287 = vrot.slane %v1285, 4
      %v1288 = vshll.u32 %v1220, 16
      %v1290 = vrot.slane %v1288, 5
      %v1291 = vor.u32 %v1287, %v1290
      %v1292 = vrot.slane %v1291, 4
      %v1294 = vshll.u32 %v1221, 16
      %v1296 = vrot.slane %v1294, 5
      %v1297 = vsel %vm485, %v1292, %v1296
      %v1299 = vshrl.u32 %v1222, 16
      %v1301 = vrot.slane %v1299, 4
      %v1302 = vshll.u32 %v1222, 16
      %v1304 = vrot.slane %v1302, 5
      %v1305 = vor.u32 %v1301, %v1304
      %v1306 = vrot.slane %v1305, 4
      %v1308 = vshll.u32 %v1223, 16
      %v1310 = vrot.slane %v1308, 5
      %v1311 = vsel %vm485, %v1306, %v1310
      %v1313 = vshrl.u32 %v1224, 16
      %v1315 = vrot.slane %v1313, 4
      %v1316 = vshll.u32 %v1224, 16
      %v1318 = vrot.slane %v1316, 5
      %v1319 = vor.u32 %v1315, %v1318
      %v1320 = vrot.slane %v1319, 4
      %v1322 = vshll.u32 %v1225, 16
      %v1324 = vrot.slane %v1322, 5
      %v1325 = vsel %vm485, %v1320, %v1324
      %v1327 = vshrl.u32 %v1226, 16
      %v1329 = vrot.slane %v1327, 4
      %v1330 = vshll.u32 %v1226, 16
      %v1332 = vrot.slane %v1330, 5
      %v1333 = vor.u32 %v1329, %v1332
      %v1334 = vrot.slane %v1333, 4
      %v1336 = vshll.u32 %v1227, 16
      %v1338 = vrot.slane %v1336, 5
      %v1339 = vsel %vm485, %v1334, %v1338
      %s1340 = scalar_lea.vmem %s4, 64
      %v1341 = vld [vmem:[%s1340] sm:$0xf]
      %v1342 = vld [vmem:[%s1340 + $0x4] sm:$0xf]
      %v1343 = vunpack.c.l.b16 %v1241
      %v1344 = vunpack.c.l.b16 %v1255
      %v1345 = vunpack.c.l.b16 %v1269
      %v1346 = vunpack.c.l.b16 %v1283
      %v1347 = vunpack.c.l.b16 %v1297
      %v1348 = vunpack.c.l.b16 %v1311
      %v1349 = vunpack.c.l.b16 %v1325
      %v1350 = vunpack.c.l.b16 %v1339
      %v1351 = vpack.c.b16 %v1344, %v1343
      %v1352 = vpack.c.b16 %v1346, %v1345
      %v1353 = vpack.c.b16 %v1348, %v1347
      %v1354 = vpack.c.b16 %v1350, %v1349
      %v1357 = vunpack.c.l.b16 %v1341
      %v1358 = vunpack.c.l.b16 %v1342
      %v1359 = vpack.c.b16 %v1358, %v1357
      %v1362 = vsel %vm358, %v1351, 0
      %v1365 = vsel %vm358, %v1352, 0
      %v1368 = vsel %vm358, %v1353, 0
      %v1371 = vsel %vm358, %v1354, 0
      %1373 = vmatpush.bf16.msra.mxu0 0
      %1374 = vmatpush.bf16.msra.mxu0 0
      %1375 = vmatpush.bf16.msra.mxu0 0
      %1376 = vmatpush.bf16.msra.mxu0 0
      %1377 = vmatpush.bf16.msra.mxu0 0
      %1378 = vmatpush.bf16.msra.mxu0 0
      %1379 = vmatpush.bf16.msra.mxu0 0
      %1380 = vmatpush.bf16.msra.mxu0 %v1359
      %1381 = vmatmul.bf16.gmra.mxu0 %v1362
      %v1382 = vpop.f32.mrf.mxu0
      %v1383 = vadd.f32 0.0, %v1382
      %v1384 = vpop.f32.mrf.mxu0
      %v1385 = vadd.f32 0.0, %v1384
      %1386 = vmatmul.bf16.gmra.mxu0 %v1365
      %v1387 = vpop.f32.mrf.mxu0
      %v1388 = vadd.f32 0.0, %v1387
      %v1389 = vpop.f32.mrf.mxu0
      %v1390 = vadd.f32 0.0, %v1389
      %1391 = vmatmul.bf16.gmra.mxu0 %v1368
      %v1392 = vpop.f32.mrf.mxu0
      %v1393 = vadd.f32 0.0, %v1392
      %v1394 = vpop.f32.mrf.mxu0
      %v1395 = vadd.f32 0.0, %v1394
      %1396 = vmatmul.bf16.gmra.mxu0 %v1371
      %v1397 = vpop.f32.mrf.mxu0
      %v1398 = vadd.f32 0.0, %v1397
      %v1399 = vpop.f32.mrf.mxu0
      %v1400 = vadd.f32 0.0, %v1399
      %1401 = vdwg.mxu0
      %v1402 = vadd.f32 %v1204, %v1383
      %v1403 = vadd.f32 %v1205, %v1385
      %v1404 = vadd.f32 %v1206, %v1388
      %v1405 = vadd.f32 %v1207, %v1390
      %v1406 = vadd.f32 %v1208, %v1393
      %v1407 = vadd.f32 %v1209, %v1395
      %v1408 = vadd.f32 %v1210, %v1398
      %v1409 = vadd.f32 %v1211, %v1400
      %v1410 = vpack.c.bf16 %v1402, %v1402
      %v1411 = vpack.c.bf16 %v1403, %v1403
      %v1412 = vpack.c.bf16 %v1404, %v1404
      %v1413 = vpack.c.bf16 %v1405, %v1405
      %v1414 = vpack.c.bf16 %v1406, %v1406
      %v1415 = vpack.c.bf16 %v1407, %v1407
      %v1416 = vpack.c.bf16 %v1408, %v1408
      %v1417 = vpack.c.bf16 %v1409, %v1409
      %1418 = vst [vmem:[%s309] sm:$0xf] %v1410
      %1419 = vst [vmem:[%s309 + $0x4] sm:$0xf] %v1411
      %1420 = vst [vmem:[%s309 + $0x8] sm:$0xf] %v1412
      %1421 = vst [vmem:[%s309 + $0xc] sm:$0xf] %v1413
      %1422 = vst [vmem:[%s309 + $0x10] sm:$0xf] %v1414
      %1423 = vst [vmem:[%s309 + $0x14] sm:$0xf] %v1415
      %1424 = vst [vmem:[%s309 + $0x18] sm:$0xf] %v1416
      %1425 = vst [vmem:[%s309 + $0x1c] sm:$0xf] %v1417
      %p1426 = scmp.eq.s32.totalorder %s18, 0
      // Predicated region
      $region41: #{basic_private_block.5} parent=39 // pred_check
        %p1427 = pneg %p1426
      $region42: #{basic_private_block.5} parent=39 // pred_check_branch
        %1429 = sbr.rel (%p1427) target = $region44
      $region43: #{basic_private_block.5} parent=39 // pred_region
        %1430 = vst [vmem:[%s6] sm:$0xff] 0.0
      $region44: #{basic_private_block.5} parent=39 // pred_fallthru
        _
      %v1431 = vadd.f32 %v1402, %v1403
      %v1432 = vadd.f32 %v1431, %v1404
      %v1433 = vadd.f32 %v1432, %v1405
      %v1434 = vadd.f32 %v1433, %v1406
      %v1435 = vadd.f32 %v1434, %v1407
      %v1436 = vadd.f32 %v1435, %v1408
      %v1437 = vadd.f32 %v1436, %v1409
      %v1438 = vrot.slane %v1437, 4
      %v1439 = vadd.f32 %v1437, %v1438
      %v1440 = vrot.slane %v1439, 2
      %v1441 = vadd.f32 %v1439, %v1440
      %v1442 = vrot.slane %v1441, 1
      %v1443 = vadd.f32 %v1441, %v1442
      %v1444 = vmul.f32 %v1402, %v1402
      %v1445 = vmul.f32 %v1403, %v1403
      %v1446 = vmul.f32 %v1404, %v1404
      %v1447 = vmul.f32 %v1405, %v1405
      %v1448 = vmul.f32 %v1406, %v1406
      %v1449 = vmul.f32 %v1407, %v1407
      %v1450 = vmul.f32 %v1408, %v1408
      %v1451 = vmul.f32 %v1409, %v1409
      %v1452 = vadd.f32 %v1444, %v1445
      %v1453 = vadd.f32 %v1452, %v1446
      %v1454 = vadd.f32 %v1453, %v1447
      %v1455 = vadd.f32 %v1454, %v1448
      %v1456 = vadd.f32 %v1455, %v1449
      %v1457 = vadd.f32 %v1456, %v1450
      %v1458 = vadd.f32 %v1457, %v1451
      %v1459 = vrot.slane %v1458, 4
      %v1460 = vadd.f32 %v1458, %v1459
      %v1461 = vrot.slane %v1460, 2
      %v1462 = vadd.f32 %v1460, %v1461
      %v1463 = vrot.slane %v1462, 1
      %v1464 = vadd.f32 %v1462, %v1463
      %v1465 = vld [vmem:[%s6] sm:$0xff]
      %vm1466 = vcmask 1040384
      %v1467 = vsel %vm1466, %v1443, %v1464
      %vm1468 = vcmask 1041408
      %v1469 = vsel %vm1468, %v1467, 0.0
      %v1470 = vadd.f32 %v1465, %v1469
      %1471 = vst [vmem:[%s6] sm:$0xff] %v1470
      %p1472 = scmp.lt.s32.totalorder %s18, 1
      %s1473 = scalar_select %p1472, %s18, 1
      %s1474 = smul.addr %s1473, 8
      %s1475 = smul.addr %s1474, 4
      %s1476 = scalar_lea.vmem %s5, %s1475
      // Predicated region
      $region45: #{basic_private_block.5} parent=39 // pred_check
        %p1477 = pneg %p161
      $region46: #{basic_private_block.5} parent=39 // pred_check_branch
        %1479 = sbr.rel (%p1477) target = $region48
      $region47: #{basic_private_block.5} parent=39 // pred_region
        _
      $region48: #{basic_private_block.5} parent=39 // pred_fallthru
        _
      // Predicated region
      $region49: #{basic_private_block.5} parent=39 // pred_check
        %p1480 = pneg %p182
      $region50: #{basic_private_block.5} parent=39 // pred_check_branch
        %1482 = sbr.rel (%p1480) target = $region52
      $region51: #{basic_private_block.5} parent=39 // pred_region
        _
      $region52: #{basic_private_block.5} parent=39 // pred_fallthru
        _
      // Predicated region
      $region53: #{basic_private_block.5} parent=39 // pred_check
        %p1483 = pneg %p182
      $region54: #{basic_private_block.5} parent=39 // pred_check_branch
        %1485 = sbr.rel (%p1483) target = $region56
      $region55: #{basic_private_block.5} parent=39 // pred_region
        _
      $region56: #{basic_private_block.5} parent=39 // pred_fallthru
        _
    $region40: #{basic_private_block.5} parent=5 // pred_fallthru
      _
    %p1486 = scmp.le.s32.totalorder 2, %s13
    // Predicated region
    $region57: #{basic_private_block.5} parent=5 // pred_check
      %p1487 = pneg %p1486
    $region58: #{basic_private_block.5} parent=5 // pred_check_branch
      %1489 = sbr.rel (%p1487) target = $region60
    $region59: #{basic_private_block.5} parent=5 // pred_region
      %s1490 = ssub.s32 %s13, 2
      // Predicated region
      $region61: #{basic_private_block.5} parent=59 // pred_check
        %p1491 = pneg %p167
      $region62: #{basic_private_block.5} parent=59 // pred_check_branch
        %1493 = sbr.rel (%p1491) target = $region64
      $region63: #{basic_private_block.5} parent=59 // pred_region
        %p1494 = scmp.lt.s32.totalorder %s19, 1
        %s1495 = scalar_select %p1494, %s19, 1
        %s1496 = smul.addr %s1495, 8
        %s1497 = smul.addr %s1496, 4
        %s1498 = scalar_lea.vmem %s5, %s1497
      $region64: #{basic_private_block.5} parent=59 // pred_fallthru
        _
    $region60: #{basic_private_block.5} parent=5 // pred_fallthru
      _
  $region6: #{basic_private_block.5} parent=0 // loop_footer
    %s17 = sadd.s32 1, %s13
  $region7: #{basic_private_block.5} parent=0 // loop_footer_branch
    %12 = sbr.rel target = $region3
  $region8: #{basic_private_block.5} parent=0 // loop_exit
    _

// kernel: basic_private_block.9
$region0: #{basic_private_block.9}
  #allocation0 [shape = 'u32[]', space=smem, size = 0x4, offset = 0x4, fixed_abs, tag = 'smem constant byte address 0x4 - core index']
  #allocation1 [shape = 'u32[72,128]{1,0:T(1,128)}', space=vmem, size = 0x9000, scoped, tag = 'internal scratch']
  %s0 = inlined_call_operand.vmem [shape: bf16[128,128], index: 0, kind: input, shape index: {}]
  %s1 = inlined_call_operand.vmem [shape: f32[1,128], index: 1, kind: input, shape index: {}]
  %s2 = inlined_call_operand.vmem [shape: f32[1,128], index: 2, kind: input, shape index: {}]
  %s3 = inlined_call_operand.vmem [shape: bf16[128,128], index: 3, kind: input, shape index: {}]
  %s4 = inlined_call_operand.vmem [shape: f32[1,128], index: 4, kind: input, shape index: {}]
  %s5 = inlined_call_operand.vmem [shape: f32[1,128], index: 5, kind: input, shape index: {}]
  %s6 = inlined_call_operand.vmem [shape: f32[128,128], index: 6, kind: output, shape index: {}]
  %s7 = sld [smem:[#allocation0]]
  $region34: #{basic_private_block.9} parent=0
    _
  %s9 = ssub.s32 1, %s7
  %s10 = scalar_select 0, %s9, %s7
  // Predicated region
  $region2: #{basic_private_block.9} parent=0 // pred_check
    _
  $region3: #{basic_private_block.9} parent=0 // pred_check_branch
    %12 = sbr.rel (0) target = $region5
  $region4: #{basic_private_block.9} parent=0 // pred_region
    _
  $region5: #{basic_private_block.9} parent=0 // pred_fallthru
    _
  // Predicated region
  $region6: #{basic_private_block.9} parent=0 // pred_check
    _
  $region7: #{basic_private_block.9} parent=0 // pred_check_branch
    %14 = sbr.rel (0) target = $region9
  $region8: #{basic_private_block.9} parent=0 // pred_region
    _
  $region9: #{basic_private_block.9} parent=0 // pred_fallthru
    _
  // Predicated region
  $region10: #{basic_private_block.9} parent=0 // pred_check
    _
  $region11: #{basic_private_block.9} parent=0 // pred_check_branch
    %16 = sbr.rel (0) target = $region13
  $region12: #{basic_private_block.9} parent=0 // pred_region
    _
  $region13: #{basic_private_block.9} parent=0 // pred_fallthru
    _
  // Predicated region
  $region14: #{basic_private_block.9} parent=0 // pred_check
    _
  $region15: #{basic_private_block.9} parent=0 // pred_check_branch
    %18 = sbr.rel (0) target = $region17
  $region16: #{basic_private_block.9} parent=0 // pred_region
    _
  $region17: #{basic_private_block.9} parent=0 // pred_fallthru
    _
  // Predicated region
  $region18: #{basic_private_block.9} parent=0 // pred_check
    _
  $region19: #{basic_private_block.9} parent=0 // pred_check_branch
    %20 = sbr.rel (0) target = $region21
  $region20: #{basic_private_block.9} parent=0 // pred_region
    _
  $region21: #{basic_private_block.9} parent=0 // pred_fallthru
    _
  // Predicated region
  $region22: #{basic_private_block.9} parent=0 // pred_check
    _
  $region23: #{basic_private_block.9} parent=0 // pred_check_branch
    %22 = sbr.rel (0) target = $region25
  $region24: #{basic_private_block.9} parent=0 // pred_region
    _
  $region25: #{basic_private_block.9} parent=0 // pred_fallthru
    _
  %v23 = vld [vmem:[%s0] sm:$0xf]
  %v24 = vld [vmem:[%s0 + $0x4] sm:$0xf]
  %v25 = vld [vmem:[%s0 + $0x8] sm:$0xf]
  %v26 = vld [vmem:[%s0 + $0xc] sm:$0xf]
  %v27 = vld [vmem:[%s0 + $0x10] sm:$0xf]
  %v28 = vld [vmem:[%s0 + $0x14] sm:$0xf]
  %v29 = vld [vmem:[%s0 + $0x18] sm:$0xf]
  %v30 = vld [vmem:[%s0 + $0x1c] sm:$0xf]
  %v31 = vld [vmem:[%s0 + $0x20] sm:$0xf]
  %v32 = vld [vmem:[%s0 + $0x24] sm:$0xf]
  %v33 = vld [vmem:[%s0 + $0x28] sm:$0xf]
  %v34 = vld [vmem:[%s0 + $0x2c] sm:$0xf]
  %v35 = vld [vmem:[%s0 + $0x30] sm:$0xf]
  %v36 = vld [vmem:[%s0 + $0x34] sm:$0xf]
  %v37 = vld [vmem:[%s0 + $0x38] sm:$0xf]
  %v38 = vld [vmem:[%s0 + $0x3c] sm:$0xf]
  %v39 = vunpack.c.l.bf16 %v23
  %v40 = vunpack.c.l.bf16 %v24
  %v41 = vunpack.c.l.bf16 %v25
  %v42 = vunpack.c.l.bf16 %v26
  %v43 = vunpack.c.l.bf16 %v27
  %v44 = vunpack.c.l.bf16 %v28
  %v45 = vunpack.c.l.bf16 %v29
  %v46 = vunpack.c.l.bf16 %v30
  %v47 = vunpack.c.l.bf16 %v31
  %v48 = vunpack.c.l.bf16 %v32
  %v49 = vunpack.c.l.bf16 %v33
  %v50 = vunpack.c.l.bf16 %v34
  %v51 = vunpack.c.l.bf16 %v35
  %v52 = vunpack.c.l.bf16 %v36
  %v53 = vunpack.c.l.bf16 %v37
  %v54 = vunpack.c.l.bf16 %v38
  %v55 = vld [vmem:[%s1] sm:$0x1]
  %v57 = vperm.slane %v55, 0
  %v59 = vmul.f32 %v39, %v57
  %v60 = vmul.f32 %v40, %v57
  %v61 = vmul.f32 %v41, %v57
  %v62 = vmul.f32 %v42, %v57
  %v63 = vmul.f32 %v43, %v57
  %v64 = vmul.f32 %v44, %v57
  %v65 = vmul.f32 %v45, %v57
  %v66 = vmul.f32 %v46, %v57
  %v67 = vmul.f32 %v47, %v57
  %v68 = vmul.f32 %v48, %v57
  %v69 = vmul.f32 %v49, %v57
  %v70 = vmul.f32 %v50, %v57
  %v71 = vmul.f32 %v51, %v57
  %v72 = vmul.f32 %v52, %v57
  %v73 = vmul.f32 %v53, %v57
  %v74 = vmul.f32 %v54, %v57
  %v75 = vld [vmem:[%s2] sm:$0x1]
  %v77 = vperm.slane %v75, 0
  %v79 = vadd.f32 %v59, %v77
  %v80 = vadd.f32 %v60, %v77
  %v81 = vadd.f32 %v61, %v77
  %v82 = vadd.f32 %v62, %v77
  %v83 = vadd.f32 %v63, %v77
  %v84 = vadd.f32 %v64, %v77
  %v85 = vadd.f32 %v65, %v77
  %v86 = vadd.f32 %v66, %v77
  %v87 = vadd.f32 %v67, %v77
  %v88 = vadd.f32 %v68, %v77
  %v89 = vadd.f32 %v69, %v77
  %v90 = vadd.f32 %v70, %v77
  %v91 = vadd.f32 %v71, %v77
  %v92 = vadd.f32 %v72, %v77
  %v93 = vadd.f32 %v73, %v77
  %v94 = vadd.f32 %v74, %v77
  %v95 = vld [vmem:[%s3] sm:$0xf]
  %v96 = vld [vmem:[%s3 + $0x4] sm:$0xf]
  %v97 = vld [vmem:[%s3 + $0x8] sm:$0xf]
  %v98 = vld [vmem:[%s3 + $0xc] sm:$0xf]
  %v99 = vld [vmem:[%s3 + $0x10] sm:$0xf]
  %v100 = vld [vmem:[%s3 + $0x14] sm:$0xf]
  %v101 = vld [vmem:[%s3 + $0x18] sm:$0xf]
  %v102 = vld [vmem:[%s3 + $0x1c] sm:$0xf]
  %v103 = vld [vmem:[%s3 + $0x20] sm:$0xf]
  %v104 = vld [vmem:[%s3 + $0x24] sm:$0xf]
  %v105 = vld [vmem:[%s3 + $0x28] sm:$0xf]
  %v106 = vld [vmem:[%s3 + $0x2c] sm:$0xf]
  %v107 = vld [vmem:[%s3 + $0x30] sm:$0xf]
  %v108 = vld [vmem:[%s3 + $0x34] sm:$0xf]
  %v109 = vld [vmem:[%s3 + $0x38] sm:$0xf]
  %v110 = vld [vmem:[%s3 + $0x3c] sm:$0xf]
  %v111 = vunpack.c.l.bf16 %v95
  %v112 = vunpack.c.l.bf16 %v96
  %v113 = vunpack.c.l.bf16 %v97
  %v114 = vunpack.c.l.bf16 %v98
  %v115 = vunpack.c.l.bf16 %v99
  %v116 = vunpack.c.l.bf16 %v100
  %v117 = vunpack.c.l.bf16 %v101
  %v118 = vunpack.c.l.bf16 %v102
  %v119 = vunpack.c.l.bf16 %v103
  %v120 = vunpack.c.l.bf16 %v104
  %v121 = vunpack.c.l.bf16 %v105
  %v122 = vunpack.c.l.bf16 %v106
  %v123 = vunpack.c.l.bf16 %v107
  %v124 = vunpack.c.l.bf16 %v108
  %v125 = vunpack.c.l.bf16 %v109
  %v126 = vunpack.c.l.bf16 %v110
  %v127 = vld [vmem:[%s4] sm:$0x1]
  %v129 = vperm.slane %v127, 0
  %v131 = vmul.f32 %v111, %v129
  %v132 = vmul.f32 %v112, %v129
  %v133 = vmul.f32 %v113, %v129
  %v134 = vmul.f32 %v114, %v129
  %v135 = vmul.f32 %v115, %v129
  %v136 = vmul.f32 %v116, %v129
  %v137 = vmul.f32 %v117, %v129
  %v138 = vmul.f32 %v118, %v129
  %v139 = vmul.f32 %v119, %v129
  %v140 = vmul.f32 %v120, %v129
  %v141 = vmul.f32 %v121, %v129
  %v142 = vmul.f32 %v122, %v129
  %v143 = vmul.f32 %v123, %v129
  %v144 = vmul.f32 %v124, %v129
  %v145 = vmul.f32 %v125, %v129
  %v146 = vmul.f32 %v126, %v129
  %v147 = vld [vmem:[%s5] sm:$0x1]
  %v149 = vperm.slane %v147, 0
  %v151 = vadd.f32 %v131, %v149
  %v152 = vadd.f32 %v132, %v149
  %v153 = vadd.f32 %v133, %v149
  %v154 = vadd.f32 %v134, %v149
  %v155 = vadd.f32 %v135, %v149
  %v156 = vadd.f32 %v136, %v149
  %v157 = vadd.f32 %v137, %v149
  %v158 = vadd.f32 %v138, %v149
  %v159 = vadd.f32 %v139, %v149
  %v160 = vadd.f32 %v140, %v149
  %v161 = vadd.f32 %v141, %v149
  %v162 = vadd.f32 %v142, %v149
  %v163 = vadd.f32 %v143, %v149
  %v164 = vadd.f32 %v144, %v149
  %v165 = vadd.f32 %v145, %v149
  %v166 = vadd.f32 %v146, %v149
  %v167 = vadd.f32 %v79, %v151
  %v168 = vadd.f32 %v80, %v152
  %v169 = vadd.f32 %v81, %v153
  %v170 = vadd.f32 %v82, %v154
  %v171 = vadd.f32 %v83, %v155
  %v172 = vadd.f32 %v84, %v156
  %v173 = vadd.f32 %v85, %v157
  %v174 = vadd.f32 %v86, %v158
  %v175 = vadd.f32 %v87, %v159
  %v176 = vadd.f32 %v88, %v160
  %v177 = vadd.f32 %v89, %v161
  %v178 = vadd.f32 %v90, %v162
  %v179 = vadd.f32 %v91, %v163
  %v180 = vadd.f32 %v92, %v164
  %v181 = vadd.f32 %v93, %v165
  %v182 = vadd.f32 %v94, %v166
  %v183 = vmax.f32 %v167, 0.0
  %v184 = vmax.f32 %v168, 0.0
  %v185 = vmax.f32 %v169, 0.0
  %v186 = vmax.f32 %v170, 0.0
  %v187 = vmax.f32 %v171, 0.0
  %v188 = vmax.f32 %v172, 0.0
  %v189 = vmax.f32 %v173, 0.0
  %v190 = vmax.f32 %v174, 0.0
  %v191 = vmax.f32 %v175, 0.0
  %v192 = vmax.f32 %v176, 0.0
  %v193 = vmax.f32 %v177, 0.0
  %v194 = vmax.f32 %v178, 0.0
  %v195 = vmax.f32 %v179, 0.0
  %v196 = vmax.f32 %v180, 0.0
  %v197 = vmax.f32 %v181, 0.0
  %v198 = vmax.f32 %v182, 0.0
  %199 = vst [vmem:[%s6] sm:$0xff] %v183
  %200 = vst [vmem:[%s6 + $0x8] sm:$0xff] %v184
  %201 = vst [vmem:[%s6 + $0x10] sm:$0xff] %v185
  %202 = vst [vmem:[%s6 + $0x18] sm:$0xff] %v186
  %203 = vst [vmem:[%s6 + $0x20] sm:$0xff] %v187
  %204 = vst [vmem:[%s6 + $0x28] sm:$0xff] %v188
  %205 = vst [vmem:[%s6 + $0x30] sm:$0xff] %v189
  %206 = vst [vmem:[%s6 + $0x38] sm:$0xff] %v190
  %207 = vst [vmem:[%s6 + $0x40] sm:$0xff] %v191
  %208 = vst [vmem:[%s6 + $0x48] sm:$0xff] %v192
  %209 = vst [vmem:[%s6 + $0x50] sm:$0xff] %v193
  %210 = vst [vmem:[%s6 + $0x58] sm:$0xff] %v194
  %211 = vst [vmem:[%s6 + $0x60] sm:$0xff] %v195
  %212 = vst [vmem:[%s6 + $0x68] sm:$0xff] %v196
  %213 = vst [vmem:[%s6 + $0x70] sm:$0xff] %v197
  %214 = vst [vmem:[%s6 + $0x78] sm:$0xff] %v198
  // Predicated region
  $region26: #{basic_private_block.9} parent=0 // pred_check
    _
  $region27: #{basic_private_block.9} parent=0 // pred_check_branch
    %216 = sbr.rel (0) target = $region29
  $region28: #{basic_private_block.9} parent=0 // pred_region
    _
  $region29: #{basic_private_block.9} parent=0 // pred_fallthru
    _
  // Predicated region
  $region30: #{basic_private_block.9} parent=0 // pred_check
    _
  $region31: #{basic_private_block.9} parent=0 // pred_check_branch
    %218 = sbr.rel (0) target = $region33
  $region32: #{basic_private_block.9} parent=0 // pred_region
    _
  $region33: #{basic_private_block.9} parent=0 // pred_fallthru
    _

// kernel: basic_private_block.7
$region0: #{basic_private_block.7}
  #allocation0 [shape = 'u32[]', space=smem, size = 0x4, offset = 0x4, fixed_abs, tag = 'smem constant byte address 0x4 - core index']
  #allocation1 [shape = 'u32[72,128]{1,0:T(1,128)}', space=vmem, size = 0x9000, scoped, tag = 'internal scratch']
  %s0 = inlined_call_operand.vmem [shape: bf16[2,10,10,128], index: 0, kind: input, shape index: {}]
  %s1 = inlined_call_operand.vmem [shape: bf16[9,128,128], index: 1, kind: input, shape index: {}]
  %s2 = inlined_call_operand.vmem [shape: bf16[2,64,128], index: 2, kind: output, shape index: {0}]
  %s3 = inlined_call_operand.vmem [shape: f32[8,128], index: 3, kind: output, shape index: {1}]
  %4 = xla_tuple %s2, %s3
  %s5 = sld [smem:[#allocation0]]
  $region53: #{basic_private_block.7} parent=0
    _
  %s7 = ssub.s32 1, %s5
  %s8 = scalar_select 0, %s7, %s5
  loop: start=0, step=1, limit=4
  $region2: #{basic_private_block.7} parent=0 // loop_pre_header
    _
  $region3: #{basic_private_block.7} parent=0 // loop_header
    %s10 = sphi 0, %s14
    %p11 = scmp.ge.s32.totalorder %s10, 4
    %s20 = sphi 0, %s22
    %s23 = sphi 0, %s20
    %s24 = sphi 0, %s23
    %s40 = sphi 0, %s24
    %s44 = sphi 0, %s44
    %s46 = sphi 0, %s44
    %s47 = sphi 0, %s46
    %s61 = sphi 0, %s47
    %s67 = sphi 0, %s69
    %s70 = sphi 0, %s67
    %s71 = sphi 0, %s70
    %s87 = sphi 0, %s71
    %s91 = sphi 0, %s91
    %s93 = sphi 0, %s91
    %s94 = sphi 0, %s93
    %s108 = sphi 0, %s94
  $region4: #{basic_private_block.7} parent=0 // loop_header_branch
    %13 = sbr.rel (%p11) target = $region8
  $region5: #{basic_private_block.7} parent=0 // loop_body
    %s15 = ssub.s32 %s10, 1
    %s16 = ssub.s32 %s10, 2
    %s17 = sadd.s32 %s10, 1
    %s18 = ssub.s32 %s10, %s17
    %p19 = scmp.eq.s32.totalorder %s18, 0
    %s21 = sadd.s32 %s20, 1
    %s22 = scalar_select %p19, %s20, %s21
    %p25 = pneg %p19
    %p26 = scmp.eq.s32.totalorder %s10, 1
    %p27 = por %p25, %p26
    %p28 = scmp.ne.s32.totalorder %s20, %s23
    %p29 = scmp.eq.s32.totalorder %s10, 0
    %p30 = por %p28, %p29
    %p31 = scmp.ne.s32.totalorder %s20, %s23
    %p32 = scmp.eq.s32.totalorder %s15, 1
    %p33 = por %p31, %p32
    %p34 = scmp.ne.s32.totalorder %s23, %s24
    %p35 = scmp.eq.s32.totalorder %s15, 0
    %p36 = por %p34, %p35
    %p37 = scmp.ne.s32.totalorder %s23, %s24
    %p38 = scmp.eq.s32.totalorder %s16, 1
    %p39 = por %p37, %p38
    %p41 = scmp.ne.s32.totalorder %s24, %s40
    %p42 = scmp.eq.s32.totalorder %s16, 0
    %p43 = por %p41, %p42
    %s45 = sadd.s32 %s44, 1
    %p48 = scmp.eq.s32.totalorder %s10, 1
    %p49 = scmp.ne.s32.totalorder %s44, %s46
    %p50 = scmp.eq.s32.totalorder %s10, 0
    %p51 = por %p49, %p50
    %p52 = scmp.ne.s32.totalorder %s44, %s46
    %p53 = scmp.eq.s32.totalorder %s15, 1
    %p54 = por %p52, %p53
    %p55 = scmp.ne.s32.totalorder %s46, %s47
    %p56 = scmp.eq.s32.totalorder %s15, 0
    %p57 = por %p55, %p56
    %p58 = scmp.ne.s32.totalorder %s46, %s47
    %p59 = scmp.eq.s32.totalorder %s16, 1
    %p60 = por %p58, %p59
    %p62 = scmp.ne.s32.totalorder %s47, %s61
    %p63 = scmp.eq.s32.totalorder %s16, 0
    %p64 = por %p62, %p63
    %s65 = ssub.s32 %s10, %s17
    %p66 = scmp.eq.s32.totalorder %s65, 0
    %s68 = sadd.s32 %s67, 1
    %s69 = scalar_select %p66, %s67, %s68
    %p72 = pneg %p66
    %p73 = scmp.eq.s32.totalorder %s10, 1
    %p74 = por %p72, %p73
    %p75 = scmp.ne.s32.totalorder %s67, %s70
    %p76 = scmp.eq.s32.totalorder %s10, 0
    %p77 = por %p75, %p76
    %p78 = scmp.ne.s32.totalorder %s67, %s70
    %p79 = scmp.eq.s32.totalorder %s15, 1
    %p80 = por %p78, %p79
    %p81 = scmp.ne.s32.totalorder %s70, %s71
    %p82 = scmp.eq.s32.totalorder %s15, 0
    %p83 = por %p81, %p82
    %p84 = scmp.ne.s32.totalorder %s70, %s71
    %p85 = scmp.eq.s32.totalorder %s16, 1
    %p86 = por %p84, %p85
    %p88 = scmp.ne.s32.totalorder %s71, %s87
    %p89 = scmp.eq.s32.totalorder %s16, 0
    %p90 = por %p88, %p89
    %s92 = sadd.s32 %s91, 1
    %p95 = scmp.eq.s32.totalorder %s10, 1
    %p96 = scmp.ne.s32.totalorder %s91, %s93
    %p97 = scmp.eq.s32.totalorder %s10, 0
    %p98 = por %p96, %p97
    %p99 = scmp.ne.s32.totalorder %s91, %s93
    %p100 = scmp.eq.s32.totalorder %s15, 1
    %p101 = por %p99, %p100
    %p102 = scmp.ne.s32.totalorder %s93, %s94
    %p103 = scmp.eq.s32.totalorder %s15, 0
    %p104 = por %p102, %p103
    %p105 = scmp.ne.s32.totalorder %s93, %s94
    %p106 = scmp.eq.s32.totalorder %s16, 1
    %p107 = por %p105, %p106
    %p109 = scmp.ne.s32.totalorder %s94, %s108
    %p110 = scmp.eq.s32.totalorder %s16, 0
    %p111 = por %p109, %p110
    %p112 = scmp.le.s32.totalorder 1, %s10
    %p113 = scmp.lt.s32.totalorder %s10, 3
    %p114 = pnand %p112, %p113
    %p115 = pneg %p114
    // Predicated region
    $region9: #{basic_private_block.7} parent=5 // pred_check
      _
    $region10: #{basic_private_block.7} parent=5 // pred_check_branch
      %117 = sbr.rel (%p114) target = $region12
    $region11: #{basic_private_block.7} parent=5 // pred_region
      %s118 = ssub.s32 %s10, 1
      // Predicated region
      $region13: #{basic_private_block.7} parent=11 // pred_check
        %p119 = pneg %p57
      $region14: #{basic_private_block.7} parent=11 // pred_check_branch
        %121 = sbr.rel (%p119) target = $region16
      $region15: #{basic_private_block.7} parent=11 // pred_region
        _
      $region16: #{basic_private_block.7} parent=11 // pred_fallthru
        _
    $region12: #{basic_private_block.7} parent=5 // pred_fallthru
      _
    %p122 = scmp.lt.s32.totalorder %s10, 2
    // Predicated region
    $region17: #{basic_private_block.7} parent=5 // pred_check
      %p123 = pneg %p122
    $region18: #{basic_private_block.7} parent=5 // pred_check_branch
      %125 = sbr.rel (%p123) target = $region20
    $region19: #{basic_private_block.7} parent=5 // pred_region
      // Predicated region
      $region21: #{basic_private_block.7} parent=19 // pred_check
        %p126 = pneg %p30
      $region22: #{basic_private_block.7} parent=19 // pred_check_branch
        %128 = sbr.rel (%p126) target = $region24
      $region23: #{basic_private_block.7} parent=19 // pred_region
        %p129 = scmp.lt.s32.totalorder %s10, 1
        %s130 = scalar_select %p129, %s10, 1
        %s131 = smul.addr %s130, 20
        %s132 = smul.addr %s131, 4
        %s133 = scalar_lea.vmem %s0, %s132
      $region24: #{basic_private_block.7} parent=19 // pred_fallthru
        _
    $region20: #{basic_private_block.7} parent=5 // pred_fallthru
      _
    %p134 = scmp.le.s32.totalorder 1, %s10
    %p135 = scmp.lt.s32.totalorder %s10, 3
    %p136 = pnand %p134, %p135
    %p137 = pneg %p136
    // Predicated region
    $region25: #{basic_private_block.7} parent=5 // pred_check
      _
    $region26: #{basic_private_block.7} parent=5 // pred_check_branch
      %139 = sbr.rel (%p136) target = $region28
    $region27: #{basic_private_block.7} parent=5 // pred_region
      %s140 = ssub.s32 %s10, 1
      %p141 = scmp.lt.s32.totalorder %s15, 1
      %s142 = scalar_select %p141, %s15, 1
      %s143 = smul.addr %s142, 20
      %s144 = smul.addr %s143, 4
      %s145 = scalar_lea.vmem %s0, %s144
      %p146 = pneg %p36
      %p147 = pneg %p33
      %p148 = pneg %p57
      %p149 = pneg %p54
      %p150 = pneg %p83
      %p151 = pneg %p80
      %p152 = scmp.lt.s32.totalorder %s15, 1
      %s153 = scalar_select %p152, %s15, 1
      %s154 = smul.addr %s153, 8
      %s155 = smul.addr %s154, 4
      %s156 = scalar_lea.vmem %s2, %s155
      %p157 = pneg %p104
      %p158 = pneg %p101
      %p159 = scmp.lt.s32.totalorder %s15, 1
      %s160 = scalar_select %p159, %s15, 1
      %s161 = smul.addr %s160, 20
      %s162 = smul.addr %s161, 4
      %s163 = scalar_lea.vmem %s0, %s162
      %p164 = scmp.lt.s32.totalorder %s15, 1
      %s165 = scalar_select %p164, %s15, 1
      %s166 = smul.addr %s165, 8
      %s167 = smul.addr %s166, 4
      %s168 = scalar_lea.vmem %s2, %s167
      %v169 = vld [vmem:[%s163] sm:$0xf]
      %v170 = vld [vmem:[%s163 + $0x8] sm:$0xf]
      %v171 = vld [vmem:[%s163 + $0x10] sm:$0xf]
      %v172 = vld [vmem:[%s163 + $0x18] sm:$0xf]
      %v173 = vld [vmem:[%s163 + $0x20] sm:$0xf]
      %v174 = vld [vmem:[%s163 + $0x28] sm:$0xf]
      %v175 = vld [vmem:[%s163 + $0x30] sm:$0xf]
      %v176 = vld [vmem:[%s163 + $0x38] sm:$0xf]
      %v177 = vld [vmem:[%s1] sm:$0xf]
      %v178 = vld [vmem:[%s1 + $0x4] sm:$0xf]
      %v179 = vld [vmem:[%s1 + $0x8] sm:$0xf]
      %v180 = vld [vmem:[%s1 + $0xc] sm:$0xf]
      %v181 = vld [vmem:[%s1 + $0x10] sm:$0xf]
      %v182 = vld [vmem:[%s1 + $0x14] sm:$0xf]
      %v183 = vld [vmem:[%s1 + $0x18] sm:$0xf]
      %v184 = vld [vmem:[%s1 + $0x1c] sm:$0xf]
      %v185 = vld [vmem:[%s1 + $0x20] sm:$0xf]
      %v186 = vld [vmem:[%s1 + $0x24] sm:$0xf]
      %v187 = vld [vmem:[%s1 + $0x28] sm:$0xf]
      %v188 = vld [vmem:[%s1 + $0x2c] sm:$0xf]
      %v189 = vld [vmem:[%s1 + $0x30] sm:$0xf]
      %v190 = vld [vmem:[%s1 + $0x34] sm:$0xf]
      %v191 = vld [vmem:[%s1 + $0x38] sm:$0xf]
      %v192 = vld [vmem:[%s1 + $0x3c] sm:$0xf]
      %v193 = vld [vmem:[%s163 + $0x4] sm:$0x1]
      %v194 = vld [vmem:[%s163 + $0xc] sm:$0x1]
      %v195 = vld [vmem:[%s163 + $0x14] sm:$0x1]
      %v196 = vld [vmem:[%s163 + $0x1c] sm:$0x1]
      %v197 = vld [vmem:[%s163 + $0x24] sm:$0x1]
      %v198 = vld [vmem:[%s163 + $0x2c] sm:$0x1]
      %v199 = vld [vmem:[%s163 + $0x34] sm:$0x1]
      %v200 = vld [vmem:[%s163 + $0x3c] sm:$0x1]
      %vm201 = vsmask.f32 3328
      %vm202 = vsmask.f32 7440
      %vm203 = vmor %vm201, %vm202
      %v205 = vshrl.u32 %v169, 16
      %v207 = vrot.slane %v205, 4
      %v208 = vshll.u32 %v169, 16
      %v210 = vrot.slane %v208, 5
      %v211 = vor.u32 %v207, %v210
      %v212 = vrot.slane %v211, 4
      %v214 = vshll.u32 %v193, 16
      %v216 = vrot.slane %v214, 5
      %v217 = vsel %vm203, %v212, %v216
      %v219 = vshrl.u32 %v170, 16
      %v221 = vrot.slane %v219, 4
      %v222 = vshll.u32 %v170, 16
      %v224 = vrot.slane %v222, 5
      %v225 = vor.u32 %v221, %v224
      %v226 = vrot.slane %v225, 4
      %v228 = vshll.u32 %v194, 16
      %v230 = vrot.slane %v228, 5
      %v231 = vsel %vm203, %v226, %v230
      %v233 = vshrl.u32 %v171, 16
      %v235 = vrot.slane %v233, 4
      %v236 = vshll.u32 %v171, 16
      %v238 = vrot.slane %v236, 5
      %v239 = vor.u32 %v235, %v238
      %v240 = vrot.slane %v239, 4
      %v242 = vshll.u32 %v195, 16
      %v244 = vrot.slane %v242, 5
      %v245 = vsel %vm203, %v240, %v244
      %v247 = vshrl.u32 %v172, 16
      %v249 = vrot.slane %v247, 4
      %v250 = vshll.u32 %v172, 16
      %v252 = vrot.slane %v250, 5
      %v253 = vor.u32 %v249, %v252
      %v254 = vrot.slane %v253, 4
      %v256 = vshll.u32 %v196, 16
      %v258 = vrot.slane %v256, 5
      %v259 = vsel %vm203, %v254, %v258
      %v261 = vshrl.u32 %v173, 16
      %v263 = vrot.slane %v261, 4
      %v264 = vshll.u32 %v173, 16
      %v266 = vrot.slane %v264, 5
      %v267 = vor.u32 %v263, %v266
      %v268 = vrot.slane %v267, 4
      %v270 = vshll.u32 %v197, 16
      %v272 = vrot.slane %v270, 5
      %v273 = vsel %vm203, %v268, %v272
      %v275 = vshrl.u32 %v174, 16
      %v277 = vrot.slane %v275, 4
      %v278 = vshll.u32 %v174, 16
      %v280 = vrot.slane %v278, 5
      %v281 = vor.u32 %v277, %v280
      %v282 = vrot.slane %v281, 4
      %v284 = vshll.u32 %v198, 16
      %v286 = vrot.slane %v284, 5
      %v287 = vsel %vm203, %v282, %v286
      %v289 = vshrl.u32 %v175, 16
      %v291 = vrot.slane %v289, 4
      %v292 = vshll.u32 %v175, 16
      %v294 = vrot.slane %v292, 5
      %v295 = vor.u32 %v291, %v294
      %v296 = vrot.slane %v295, 4
      %v298 = vshll.u32 %v199, 16
      %v300 = vrot.slane %v298, 5
      %v301 = vsel %vm203, %v296, %v300
      %v303 = vshrl.u32 %v176, 16
      %v305 = vrot.slane %v303, 4
      %v306 = vshll.u32 %v176, 16
      %v308 = vrot.slane %v306, 5
      %v309 = vor.u32 %v305, %v308
      %v310 = vrot.slane %v309, 4
      %v312 = vshll.u32 %v200, 16
      %v314 = vrot.slane %v312, 5
      %v315 = vsel %vm203, %v310, %v314
      %s316 = scalar_lea.vmem %s1, 64
      %v317 = vld [vmem:[%s316] sm:$0xf]
      %v318 = vld [vmem:[%s316 + $0x4] sm:$0xf]
      %v319 = vld [vmem:[%s316 + $0x8] sm:$0xf]
      %v320 = vld [vmem:[%s316 + $0xc] sm:$0xf]
      %v321 = vld [vmem:[%s316 + $0x10] sm:$0xf]
      %v322 = vld [vmem:[%s316 + $0x14] sm:$0xf]
      %v323 = vld [vmem:[%s316 + $0x18] sm:$0xf]
      %v324 = vld [vmem:[%s316 + $0x1c] sm:$0xf]
      %v325 = vld [vmem:[%s316 + $0x20] sm:$0xf]
      %v326 = vld [vmem:[%s316 + $0x24] sm:$0xf]
      %v327 = vld [vmem:[%s316 + $0x28] sm:$0xf]
      %v328 = vld [vmem:[%s316 + $0x2c] sm:$0xf]
      %v329 = vld [vmem:[%s316 + $0x30] sm:$0xf]
      %v330 = vld [vmem:[%s316 + $0x34] sm:$0xf]
      %v331 = vld [vmem:[%s316 + $0x38] sm:$0xf]
      %v332 = vld [vmem:[%s316 + $0x3c] sm:$0xf]
      %v333 = vunpack.c.l.b16 %v217
      %v334 = vunpack.c.l.b16 %v231
      %v335 = vunpack.c.l.b16 %v245
      %v336 = vunpack.c.l.b16 %v259
      %v337 = vunpack.c.l.b16 %v273
      %v338 = vunpack.c.l.b16 %v287
      %v339 = vunpack.c.l.b16 %v301
      %v340 = vunpack.c.l.b16 %v315
      %v341 = vpack.c.b16 %v334, %v333
      %v342 = vpack.c.b16 %v336, %v335
      %v343 = vpack.c.b16 %v338, %v337
      %v344 = vpack.c.b16 %v340, %v339
      %v365 = vunpack.c.l.b16 %v317
      %v366 = vunpack.c.l.b16 %v318
      %v367 = vunpack.c.l.b16 %v319
      %v368 = vunpack.c.l.b16 %v320
      %v369 = vunpack.c.l.b16 %v321
      %v370 = vunpack.c.l.b16 %v322
      %v371 = vunpack.c.l.b16 %v323
      %v372 = vunpack.c.l.b16 %v324
      %v373 = vunpack.c.l.b16 %v325
      %v374 = vunpack.c.l.b16 %v326
      %v375 = vunpack.c.l.b16 %v327
      %v376 = vunpack.c.l.b16 %v328
      %v377 = vunpack.c.l.b16 %v329
      %v378 = vunpack.c.l.b16 %v330
      %v379 = vunpack.c.l.b16 %v331
      %v380 = vunpack.c.l.b16 %v332
      %v381 = vpack.c.b16 %v366, %v365
      %v382 = vpack.c.b16 %v368, %v367
      %v383 = vpack.c.b16 %v370, %v369
      %v384 = vpack.c.b16 %v372, %v371
      %v385 = vpack.c.b16 %v374, %v373
      %v386 = vpack.c.b16 %v376, %v375
      %v387 = vpack.c.b16 %v378, %v377
      %v388 = vpack.c.b16 %v380, %v379
      %397 = vmatpush.bf16.msra.mxu0 %v388
      %398 = vmatpush.bf16.msra.mxu0 %v387
      %399 = vmatpush.bf16.msra.mxu0 %v386
      %400 = vmatpush.bf16.msra.mxu0 %v385
      %401 = vmatpush.bf16.msra.mxu0 %v384
      %402 = vmatpush.bf16.msra.mxu0 %v383
      %403 = vmatpush.bf16.msra.mxu0 %v382
      %404 = vmatpush.bf16.msra.mxu0 %v381
      %405 = vmatmul.bf16.gmra.mxu0 %v341
      %v406 = vpop.f32.mrf.mxu0
      %v407 = vadd.f32 0.0, %v406
      %v408 = vpop.f32.mrf.mxu0
      %v409 = vadd.f32 0.0, %v408
      %410 = vmatmul.bf16.gmra.mxu0 %v342
      %v411 = vpop.f32.mrf.mxu0
      %v412 = vadd.f32 0.0, %v411
      %v413 = vpop.f32.mrf.mxu0
      %v414 = vadd.f32 0.0, %v413
      %415 = vmatmul.bf16.gmra.mxu0 %v343
      %v416 = vpop.f32.mrf.mxu0
      %v417 = vadd.f32 0.0, %v416
      %v418 = vpop.f32.mrf.mxu0
      %v419 = vadd.f32 0.0, %v418
      %420 = vmatmul.bf16.gmra.mxu0 %v344
      %v421 = vpop.f32.mrf.mxu0
      %v422 = vadd.f32 0.0, %v421
      %v423 = vpop.f32.mrf.mxu0
      %v424 = vadd.f32 0.0, %v423
      %425 = vdwg.mxu0
      %v434 = vunpack.c.l.b16 %v169
      %v435 = vunpack.c.l.b16 %v170
      %v436 = vunpack.c.l.b16 %v171
      %v437 = vunpack.c.l.b16 %v172
      %v438 = vunpack.c.l.b16 %v173
      %v439 = vunpack.c.l.b16 %v174
      %v440 = vunpack.c.l.b16 %v175
      %v441 = vunpack.c.l.b16 %v176
      %v442 = vpack.c.b16 %v435, %v434
      %v443 = vpack.c.b16 %v437, %v436
      %v444 = vpack.c.b16 %v439, %v438
      %v445 = vpack.c.b16 %v441, %v440
      %v466 = vunpack.c.l.b16 %v177
      %v467 = vunpack.c.l.b16 %v178
      %v468 = vunpack.c.l.b16 %v179
      %v469 = vunpack.c.l.b16 %v180
      %v470 = vunpack.c.l.b16 %v181
      %v471 = vunpack.c.l.b16 %v182
      %v472 = vunpack.c.l.b16 %v183
      %v473 = vunpack.c.l.b16 %v184
      %v474 = vunpack.c.l.b16 %v185
      %v475 = vunpack.c.l.b16 %v186
      %v476 = vunpack.c.l.b16 %v187
      %v477 = vunpack.c.l.b16 %v188
      %v478 = vunpack.c.l.b16 %v189
      %v479 = vunpack.c.l.b16 %v190
      %v480 = vunpack.c.l.b16 %v191
      %v481 = vunpack.c.l.b16 %v192
      %v482 = vpack.c.b16 %v467, %v466
      %v483 = vpack.c.b16 %v469, %v468
      %v484 = vpack.c.b16 %v471, %v470
      %v485 = vpack.c.b16 %v473, %v472
      %v486 = vpack.c.b16 %v475, %v474
      %v487 = vpack.c.b16 %v477, %v476
      %v488 = vpack.c.b16 %v479, %v478
      %v489 = vpack.c.b16 %v481, %v480
      %498 = vmatpush.bf16.msra.mxu0 %v489
      %499 = vmatpush.bf16.msra.mxu0 %v488
      %500 = vmatpush.bf16.msra.mxu0 %v487
      %501 = vmatpush.bf16.msra.mxu0 %v486
      %502 = vmatpush.bf16.msra.mxu0 %v485
      %503 = vmatpush.bf16.msra.mxu0 %v484
      %504 = vmatpush.bf16.msra.mxu0 %v483
      %505 = vmatpush.bf16.msra.mxu0 %v482
      %506 = vmatmul.bf16.gmra.mxu0 %v442
      %v507 = vpop.f32.mrf.mxu0
      %v508 = vadd.f32 %v407, %v507
      %v509 = vpop.f32.mrf.mxu0
      %v510 = vadd.f32 %v409, %v509
      %511 = vmatmul.bf16.gmra.mxu0 %v443
      %v512 = vpop.f32.mrf.mxu0
      %v513 = vadd.f32 %v412, %v512
      %v514 = vpop.f32.mrf.mxu0
      %v515 = vadd.f32 %v414, %v514
      %516 = vmatmul.bf16.gmra.mxu0 %v444
      %v517 = vpop.f32.mrf.mxu0
      %v518 = vadd.f32 %v417, %v517
      %v519 = vpop.f32.mrf.mxu0
      %v520 = vadd.f32 %v419, %v519
      %521 = vmatmul.bf16.gmra.mxu0 %v445
      %v522 = vpop.f32.mrf.mxu0
      %v523 = vadd.f32 %v422, %v522
      %v524 = vpop.f32.mrf.mxu0
      %v525 = vadd.f32 %v424, %v524
      %526 = vdwg.mxu0
      %v527 = vld [vmem:[%s163] sm:$0xe]
      %v528 = vld [vmem:[%s163 + $0x8] sm:$0xe]
      %v529 = vld [vmem:[%s163 + $0x10] sm:$0xe]
      %v530 = vld [vmem:[%s163 + $0x18] sm:$0xe]
      %v531 = vld [vmem:[%s163 + $0x20] sm:$0xe]
      %v532 = vld [vmem:[%s163 + $0x28] sm:$0xe]
      %v533 = vld [vmem:[%s163 + $0x30] sm:$0xe]
      %v534 = vld [vmem:[%s163 + $0x38] sm:$0xe]
      %vm551 = vcmask 1042432
      %vm552 = vcmask 1046532
      %vm553 = vmor %vm551, %vm552
      %v554 = vrot.slane %v527, 5
      %v555 = vrot.slane %v554, 4
      %v556 = vrot.slane %v193, 5
      %v557 = vsel %vm553, %v555, %v556
      %v558 = vrot.slane %v528, 5
      %v559 = vrot.slane %v558, 4
      %v560 = vrot.slane %v194, 5
      %v561 = vsel %vm553, %v559, %v560
      %v562 = vrot.slane %v529, 5
      %v563 = vrot.slane %v562, 4
      %v564 = vrot.slane %v195, 5
      %v565 = vsel %vm553, %v563, %v564
      %v566 = vrot.slane %v530, 5
      %v567 = vrot.slane %v566, 4
      %v568 = vrot.slane %v196, 5
      %v569 = vsel %vm553, %v567, %v568
      %v570 = vrot.slane %v531, 5
      %v571 = vrot.slane %v570, 4
      %v572 = vrot.slane %v197, 5
      %v573 = vsel %vm553, %v571, %v572
      %v574 = vrot.slane %v532, 5
      %v575 = vrot.slane %v574, 4
      %v576 = vrot.slane %v198, 5
      %v577 = vsel %vm553, %v575, %v576
      %v578 = vrot.slane %v533, 5
      %v579 = vrot.slane %v578, 4
      %v580 = vrot.slane %v199, 5
      %v581 = vsel %vm553, %v579, %v580
      %v582 = vrot.slane %v534, 5
      %v583 = vrot.slane %v582, 4
      %v584 = vrot.slane %v200, 5
      %v585 = vsel %vm553, %v583, %v584
      %s586 = scalar_lea.vmem %s1, 128
      %v587 = vld [vmem:[%s586] sm:$0xf]
      %v588 = vld [vmem:[%s586 + $0x4] sm:$0xf]
      %v589 = vld [vmem:[%s586 + $0x8] sm:$0xf]
      %v590 = vld [vmem:[%s586 + $0xc] sm:$0xf]
      %v591 = vld [vmem:[%s586 + $0x10] sm:$0xf]
      %v592 = vld [vmem:[%s586 + $0x14] sm:$0xf]
      %v593 = vld [vmem:[%s586 + $0x18] sm:$0xf]
      %v594 = vld [vmem:[%s586 + $0x1c] sm:$0xf]
      %v595 = vld [vmem:[%s586 + $0x20] sm:$0xf]
      %v596 = vld [vmem:[%s586 + $0x24] sm:$0xf]
      %v597 = vld [vmem:[%s586 + $0x28] sm:$0xf]
      %v598 = vld [vmem:[%s586 + $0x2c] sm:$0xf]
      %v599 = vld [vmem:[%s586 + $0x30] sm:$0xf]
      %v600 = vld [vmem:[%s586 + $0x34] sm:$0xf]
      %v601 = vld [vmem:[%s586 + $0x38] sm:$0xf]
      %v602 = vld [vmem:[%s586 + $0x3c] sm:$0xf]
      %v603 = vunpack.c.l.b16 %v557
      %v604 = vunpack.c.l.b16 %v561
      %v605 = vunpack.c.l.b16 %v565
      %v606 = vunpack.c.l.b16 %v569
      %v607 = vunpack.c.l.b16 %v573
      %v608 = vunpack.c.l.b16 %v577
      %v609 = vunpack.c.l.b16 %v581
      %v610 = vunpack.c.l.b16 %v585
      %v611 = vpack.c.b16 %v604, %v603
      %v612 = vpack.c.b16 %v606, %v605
      %v613 = vpack.c.b16 %v608, %v607
      %v614 = vpack.c.b16 %v610, %v609
      %v635 = vunpack.c.l.b16 %v587
      %v636 = vunpack.c.l.b16 %v588
      %v637 = vunpack.c.l.b16 %v589
      %v638 = vunpack.c.l.b16 %v590
      %v639 = vunpack.c.l.b16 %v591
      %v640 = vunpack.c.l.b16 %v592
      %v641 = vunpack.c.l.b16 %v593
      %v642 = vunpack.c.l.b16 %v594
      %v643 = vunpack.c.l.b16 %v595
      %v644 = vunpack.c.l.b16 %v596
      %v645 = vunpack.c.l.b16 %v597
      %v646 = vunpack.c.l.b16 %v598
      %v647 = vunpack.c.l.b16 %v599
      %v648 = vunpack.c.l.b16 %v600
      %v649 = vunpack.c.l.b16 %v601
      %v650 = vunpack.c.l.b16 %v602
      %v651 = vpack.c.b16 %v636, %v635
      %v652 = vpack.c.b16 %v638, %v637
      %v653 = vpack.c.b16 %v640, %v639
      %v654 = vpack.c.b16 %v642, %v641
      %v655 = vpack.c.b16 %v644, %v643
      %v656 = vpack.c.b16 %v646, %v645
      %v657 = vpack.c.b16 %v648, %v647
      %v658 = vpack.c.b16 %v650, %v649
      %667 = vmatpush.bf16.msra.mxu0 %v658
      %668 = vmatpush.bf16.msra.mxu0 %v657
      %669 = vmatpush.bf16.msra.mxu0 %v656
      %670 = vmatpush.bf16.msra.mxu0 %v655
      %671 = vmatpush.bf16.msra.mxu0 %v654
      %672 = vmatpush.bf16.msra.mxu0 %v653
      %673 = vmatpush.bf16.msra.mxu0 %v652
      %674 = vmatpush.bf16.msra.mxu0 %v651
      %675 = vmatmul.bf16.gmra.mxu0 %v611
      %v676 = vpop.f32.mrf.mxu0
      %v677 = vadd.f32 0.0, %v676
      %v678 = vpop.f32.mrf.mxu0
      %v679 = vadd.f32 0.0, %v678
      %680 = vmatmul.bf16.gmra.mxu0 %v612
      %v681 = vpop.f32.mrf.mxu0
      %v682 = vadd.f32 0.0, %v681
      %v683 = vpop.f32.mrf.mxu0
      %v684 = vadd.f32 0.0, %v683
      %685 = vmatmul.bf16.gmra.mxu0 %v613
      %v686 = vpop.f32.mrf.mxu0
      %v687 = vadd.f32 0.0, %v686
      %v688 = vpop.f32.mrf.mxu0
      %v689 = vadd.f32 0.0, %v688
      %690 = vmatmul.bf16.gmra.mxu0 %v614
      %v691 = vpop.f32.mrf.mxu0
      %v692 = vadd.f32 0.0, %v691
      %v693 = vpop.f32.mrf.mxu0
      %v694 = vadd.f32 0.0, %v693
      %695 = vdwg.mxu0
      %v696 = vadd.f32 %v508, %v677
      %v697 = vadd.f32 %v510, %v679
      %v698 = vadd.f32 %v513, %v682
      %v699 = vadd.f32 %v515, %v684
      %v700 = vadd.f32 %v518, %v687
      %v701 = vadd.f32 %v520, %v689
      %v702 = vadd.f32 %v523, %v692
      %v703 = vadd.f32 %v525, %v694
      %s704 = scalar_lea.vmem %s163, 8
      %v705 = vld [vmem:[%s704] sm:$0xf]
      %v706 = vld [vmem:[%s704 + $0x8] sm:$0xf]
      %v707 = vld [vmem:[%s704 + $0x10] sm:$0xf]
      %v708 = vld [vmem:[%s704 + $0x18] sm:$0xf]
      %v709 = vld [vmem:[%s704 + $0x20] sm:$0xf]
      %v710 = vld [vmem:[%s704 + $0x28] sm:$0xf]
      %v711 = vld [vmem:[%s704 + $0x30] sm:$0xf]
      %v712 = vld [vmem:[%s704 + $0x38] sm:$0xf]
      %s713 = scalar_lea.vmem %s1, 192
      %v714 = vld [vmem:[%s713] sm:$0xf]
      %v715 = vld [vmem:[%s713 + $0x4] sm:$0xf]
      %v716 = vld [vmem:[%s713 + $0x8] sm:$0xf]
      %v717 = vld [vmem:[%s713 + $0xc] sm:$0xf]
      %v718 = vld [vmem:[%s713 + $0x10] sm:$0xf]
      %v719 = vld [vmem:[%s713 + $0x14] sm:$0xf]
      %v720 = vld [vmem:[%s713 + $0x18] sm:$0xf]
      %v721 = vld [vmem:[%s713 + $0x1c] sm:$0xf]
      %v722 = vld [vmem:[%s713 + $0x20] sm:$0xf]
      %v723 = vld [vmem:[%s713 + $0x24] sm:$0xf]
      %v724 = vld [vmem:[%s713 + $0x28] sm:$0xf]
      %v725 = vld [vmem:[%s713 + $0x2c] sm:$0xf]
      %v726 = vld [vmem:[%s713 + $0x30] sm:$0xf]
      %v727 = vld [vmem:[%s713 + $0x34] sm:$0xf]
      %v728 = vld [vmem:[%s713 + $0x38] sm:$0xf]
      %v729 = vld [vmem:[%s713 + $0x3c] sm:$0xf]
      %v738 = vunpack.c.l.b16 %v705
      %v739 = vunpack.c.l.b16 %v706
      %v740 = vunpack.c.l.b16 %v707
      %v741 = vunpack.c.l.b16 %v708
      %v742 = vunpack.c.l.b16 %v709
      %v743 = vunpack.c.l.b16 %v710
      %v744 = vunpack.c.l.b16 %v711
      %v745 = vunpack.c.l.b16 %v712
      %v746 = vpack.c.b16 %v739, %v738
      %v747 = vpack.c.b16 %v741, %v740
      %v748 = vpack.c.b16 %v743, %v742
      %v749 = vpack.c.b16 %v745, %v744
      %v770 = vunpack.c.l.b16 %v714
      %v771 = vunpack.c.l.b16 %v715
      %v772 = vunpack.c.l.b16 %v716
      %v773 = vunpack.c.l.b16 %v717
      %v774 = vunpack.c.l.b16 %v718
      %v775 = vunpack.c.l.b16 %v719
      %v776 = vunpack.c.l.b16 %v720
      %v777 = vunpack.c.l.b16 %v721
      %v778 = vunpack.c.l.b16 %v722
      %v779 = vunpack.c.l.b16 %v723
      %v780 = vunpack.c.l.b16 %v724
      %v781 = vunpack.c.l.b16 %v725
      %v782 = vunpack.c.l.b16 %v726
      %v783 = vunpack.c.l.b16 %v727
      %v784 = vunpack.c.l.b16 %v728
      %v785 = vunpack.c.l.b16 %v729
      %v786 = vpack.c.b16 %v771, %v770
      %v787 = vpack.c.b16 %v773, %v772
      %v788 = vpack.c.b16 %v775, %v774
      %v789 = vpack.c.b16 %v777, %v776
      %v790 = vpack.c.b16 %v779, %v778
      %v791 = vpack.c.b16 %v781, %v780
      %v792 = vpack.c.b16 %v783, %v782
      %v793 = vpack.c.b16 %v785, %v784
      %802 = vmatpush.bf16.msra.mxu0 %v793
      %803 = vmatpush.bf16.msra.mxu0 %v792
      %804 = vmatpush.bf16.msra.mxu0 %v791
      %805 = vmatpush.bf16.msra.mxu0 %v790
      %806 = vmatpush.bf16.msra.mxu0 %v789
      %807 = vmatpush.bf16.msra.mxu0 %v788
      %808 = vmatpush.bf16.msra.mxu0 %v787
      %809 = vmatpush.bf16.msra.mxu0 %v786
      %810 = vmatmul.bf16.gmra.mxu0 %v746
      %v811 = vpop.f32.mrf.mxu0
      %v812 = vadd.f32 0.0, %v811
      %v813 = vpop.f32.mrf.mxu0
      %v814 = vadd.f32 0.0, %v813
      %815 = vmatmul.bf16.gmra.mxu0 %v747
      %v816 = vpop.f32.mrf.mxu0
      %v817 = vadd.f32 0.0, %v816
      %v818 = vpop.f32.mrf.mxu0
      %v819 = vadd.f32 0.0, %v818
      %820 = vmatmul.bf16.gmra.mxu0 %v748
      %v821 = vpop.f32.mrf.mxu0
      %v822 = vadd.f32 0.0, %v821
      %v823 = vpop.f32.mrf.mxu0
      %v824 = vadd.f32 0.0, %v823
      %825 = vmatmul.bf16.gmra.mxu0 %v749
      %v826 = vpop.f32.mrf.mxu0
      %v827 = vadd.f32 0.0, %v826
      %v828 = vpop.f32.mrf.mxu0
      %v829 = vadd.f32 0.0, %v828
      %830 = vdwg.mxu0
      %v831 = vadd.f32 %v696, %v812
      %v832 = vadd.f32 %v697, %v814
      %v833 = vadd.f32 %v698, %v817
      %v834 = vadd.f32 %v699, %v819
      %v835 = vadd.f32 %v700, %v822
      %v836 = vadd.f32 %v701, %v824
      %v837 = vadd.f32 %v702, %v827
      %v838 = vadd.f32 %v703, %v829
      %v839 = vld [vmem:[%s704] sm:$0xf]
      %v840 = vld [vmem:[%s704 + $0x4] sm:$0x1]
      %v841 = vld [vmem:[%s704 + $0x8] sm:$0xf]
      %v842 = vld [vmem:[%s704 + $0xc] sm:$0x1]
      %v843 = vld [vmem:[%s704 + $0x10] sm:$0xf]
      %v844 = vld [vmem:[%s704 + $0x14] sm:$0x1]
      %v845 = vld [vmem:[%s704 + $0x18] sm:$0xf]
      %v846 = vld [vmem:[%s704 + $0x1c] sm:$0x1]
      %v847 = vld [vmem:[%s704 + $0x20] sm:$0xf]
      %v848 = vld [vmem:[%s704 + $0x24] sm:$0x1]
      %v849 = vld [vmem:[%s704 + $0x28] sm:$0xf]
      %v850 = vld [vmem:[%s704 + $0x2c] sm:$0x1]
      %v851 = vld [vmem:[%s704 + $0x30] sm:$0xf]
      %v852 = vld [vmem:[%s704 + $0x34] sm:$0x1]
      %v853 = vld [vmem:[%s704 + $0x38] sm:$0xf]
      %v854 = vld [vmem:[%s704 + $0x3c] sm:$0x1]
      %v856 = vshrl.u32 %v839, 16
      %v858 = vrot.slane %v856, 4
      %v859 = vshll.u32 %v839, 16
      %v861 = vrot.slane %v859, 5
      %v862 = vor.u32 %v858, %v861
      %v863 = vrot.slane %v862, 4
      %v865 = vshll.u32 %v840, 16
      %v867 = vrot.slane %v865, 5
      %v868 = vsel %vm203, %v863, %v867
      %v870 = vshrl.u32 %v841, 16
      %v872 = vrot.slane %v870, 4
      %v873 = vshll.u32 %v841, 16
      %v875 = vrot.slane %v873, 5
      %v876 = vor.u32 %v872, %v875
      %v877 = vrot.slane %v876, 4
      %v879 = vshll.u32 %v842, 16
      %v881 = vrot.slane %v879, 5
      %v882 = vsel %vm203, %v877, %v881
      %v884 = vshrl.u32 %v843, 16
      %v886 = vrot.slane %v884, 4
      %v887 = vshll.u32 %v843, 16
      %v889 = vrot.slane %v887, 5
      %v890 = vor.u32 %v886, %v889
      %v891 = vrot.slane %v890, 4
      %v893 = vshll.u32 %v844, 16
      %v895 = vrot.slane %v893, 5
      %v896 = vsel %vm203, %v891, %v895
      %v898 = vshrl.u32 %v845, 16
      %v900 = vrot.slane %v898, 4
      %v901 = vshll.u32 %v845, 16
      %v903 = vrot.slane %v901, 5
      %v904 = vor.u32 %v900, %v903
      %v905 = vrot.slane %v904, 4
      %v907 = vshll.u32 %v846, 16
      %v909 = vrot.slane %v907, 5
      %v910 = vsel %vm203, %v905, %v909
      %v912 = vshrl.u32 %v847, 16
      %v914 = vrot.slane %v912, 4
      %v915 = vshll.u32 %v847, 16
      %v917 = vrot.slane %v915, 5
      %v918 = vor.u32 %v914, %v917
      %v919 = vrot.slane %v918, 4
      %v921 = vshll.u32 %v848, 16
      %v923 = vrot.slane %v921, 5
      %v924 = vsel %vm203, %v919, %v923
      %v926 = vshrl.u32 %v849, 16
      %v928 = vrot.slane %v926, 4
      %v929 = vshll.u32 %v849, 16
      %v931 = vrot.slane %v929, 5
      %v932 = vor.u32 %v928, %v931
      %v933 = vrot.slane %v932, 4
      %v935 = vshll.u32 %v850, 16
      %v937 = vrot.slane %v935, 5
      %v938 = vsel %vm203, %v933, %v937
      %v940 = vshrl.u32 %v851, 16
      %v942 = vrot.slane %v940, 4
      %v943 = vshll.u32 %v851, 16
      %v945 = vrot.slane %v943, 5
      %v946 = vor.u32 %v942, %v945
      %v947 = vrot.slane %v946, 4
      %v949 = vshll.u32 %v852, 16
      %v951 = vrot.slane %v949, 5
      %v952 = vsel %vm203, %v947, %v951
      %v954 = vshrl.u32 %v853, 16
      %v956 = vrot.slane %v954, 4
      %v957 = vshll.u32 %v853, 16
      %v959 = vrot.slane %v957, 5
      %v960 = vor.u32 %v956, %v959
      %v961 = vrot.slane %v960, 4
      %v963 = vshll.u32 %v854, 16
      %v965 = vrot.slane %v963, 5
      %v966 = vsel %vm203, %v961, %v965
      %s967 = scalar_lea.vmem %s1, 256
      %v968 = vld [vmem:[%s967] sm:$0xf]
      %v969 = vld [vmem:[%s967 + $0x4] sm:$0xf]
      %v970 = vld [vmem:[%s967 + $0x8] sm:$0xf]
      %v971 = vld [vmem:[%s967 + $0xc] sm:$0xf]
      %v972 = vld [vmem:[%s967 + $0x10] sm:$0xf]
      %v973 = vld [vmem:[%s967 + $0x14] sm:$0xf]
      %v974 = vld [vmem:[%s967 + $0x18] sm:$0xf]
      %v975 = vld [vmem:[%s967 + $0x1c] sm:$0xf]
      %v976 = vld [vmem:[%s967 + $0x20] sm:$0xf]
      %v977 = vld [vmem:[%s967 + $0x24] sm:$0xf]
      %v978 = vld [vmem:[%s967 + $0x28] sm:$0xf]
      %v979 = vld [vmem:[%s967 + $0x2c] sm:$0xf]
      %v980 = vld [vmem:[%s967 + $0x30] sm:$0xf]
      %v981 = vld [vmem:[%s967 + $0x34] sm:$0xf]
      %v982 = vld [vmem:[%s967 + $0x38] sm:$0xf]
      %v983 = vld [vmem:[%s967 + $0x3c] sm:$0xf]
      %v984 = vunpack.c.l.b16 %v868
      %v985 = vunpack.c.l.b16 %v882
      %v986 = vunpack.c.l.b16 %v896
      %v987 = vunpack.c.l.b16 %v910
      %v988 = vunpack.c.l.b16 %v924
      %v989 = vunpack.c.l.b16 %v938
      %v990 = vunpack.c.l.b16 %v952
      %v991 = vunpack.c.l.b16 %v966
      %v992 = vpack.c.b16 %v985, %v984
      %v993 = vpack.c.b16 %v987, %v986
      %v994 = vpack.c.b16 %v989, %v988
      %v995 = vpack.c.b16 %v991, %v990
      %v1016 = vunpack.c.l.b16 %v968
      %v1017 = vunpack.c.l.b16 %v969
      %v1018 = vunpack.c.l.b16 %v970
      %v1019 = vunpack.c.l.b16 %v971
      %v1020 = vunpack.c.l.b16 %v972
      %v1021 = vunpack.c.l.b16 %v973
      %v1022 = vunpack.c.l.b16 %v974
      %v1023 = vunpack.c.l.b16 %v975
      %v1024 = vunpack.c.l.b16 %v976
      %v1025 = vunpack.c.l.b16 %v977
      %v1026 = vunpack.c.l.b16 %v978
      %v1027 = vunpack.c.l.b16 %v979
      %v1028 = vunpack.c.l.b16 %v980
      %v1029 = vunpack.c.l.b16 %v981
      %v1030 = vunpack.c.l.b16 %v982
      %v1031 = vunpack.c.l.b16 %v983
      %v1032 = vpack.c.b16 %v1017, %v1016
      %v1033 = vpack.c.b16 %v1019, %v1018
      %v1034 = vpack.c.b16 %v1021, %v1020
      %v1035 = vpack.c.b16 %v1023, %v1022
      %v1036 = vpack.c.b16 %v1025, %v1024
      %v1037 = vpack.c.b16 %v1027, %v1026
      %v1038 = vpack.c.b16 %v1029, %v1028
      %v1039 = vpack.c.b16 %v1031, %v1030
      %1048 = vmatpush.bf16.msra.mxu0 %v1039
      %1049 = vmatpush.bf16.msra.mxu0 %v1038
      %1050 = vmatpush.bf16.msra.mxu0 %v1037
      %1051 = vmatpush.bf16.msra.mxu0 %v1036
      %1052 = vmatpush.bf16.msra.mxu0 %v1035
      %1053 = vmatpush.bf16.msra.mxu0 %v1034
      %1054 = vmatpush.bf16.msra.mxu0 %v1033
      %1055 = vmatpush.bf16.msra.mxu0 %v1032
      %1056 = vmatmul.bf16.gmra.mxu0 %v992
      %v1057 = vpop.f32.mrf.mxu0
      %v1058 = vadd.f32 0.0, %v1057
      %v1059 = vpop.f32.mrf.mxu0
      %v1060 = vadd.f32 0.0, %v1059
      %1061 = vmatmul.bf16.gmra.mxu0 %v993
      %v1062 = vpop.f32.mrf.mxu0
      %v1063 = vadd.f32 0.0, %v1062
      %v1064 = vpop.f32.mrf.mxu0
      %v1065 = vadd.f32 0.0, %v1064
      %1066 = vmatmul.bf16.gmra.mxu0 %v994
      %v1067 = vpop.f32.mrf.mxu0
      %v1068 = vadd.f32 0.0, %v1067
      %v1069 = vpop.f32.mrf.mxu0
      %v1070 = vadd.f32 0.0, %v1069
      %1071 = vmatmul.bf16.gmra.mxu0 %v995
      %v1072 = vpop.f32.mrf.mxu0
      %v1073 = vadd.f32 0.0, %v1072
      %v1074 = vpop.f32.mrf.mxu0
      %v1075 = vadd.f32 0.0, %v1074
      %1076 = vdwg.mxu0
      %v1077 = vadd.f32 %v831, %v1058
      %v1078 = vadd.f32 %v832, %v1060
      %v1079 = vadd.f32 %v833, %v1063
      %v1080 = vadd.f32 %v834, %v1065
      %v1081 = vadd.f32 %v835, %v1068
      %v1082 = vadd.f32 %v836, %v1070
      %v1083 = vadd.f32 %v837, %v1073
      %v1084 = vadd.f32 %v838, %v1075
      %v1085 = vld [vmem:[%s704] sm:$0xe]
      %v1086 = vld [vmem:[%s704 + $0x8] sm:$0xe]
      %v1087 = vld [vmem:[%s704 + $0x10] sm:$0xe]
      %v1088 = vld [vmem:[%s704 + $0x18] sm:$0xe]
      %v1089 = vld [vmem:[%s704 + $0x20] sm:$0xe]
      %v1090 = vld [vmem:[%s704 + $0x28] sm:$0xe]
      %v1091 = vld [vmem:[%s704 + $0x30] sm:$0xe]
      %v1092 = vld [vmem:[%s704 + $0x38] sm:$0xe]
      %v1109 = vrot.slane %v1085, 5
      %v1110 = vrot.slane %v1109, 4
      %v1111 = vrot.slane %v840, 5
      %v1112 = vsel %vm553, %v1110, %v1111
      %v1113 = vrot.slane %v1086, 5
      %v1114 = vrot.slane %v1113, 4
      %v1115 = vrot.slane %v842, 5
      %v1116 = vsel %vm553, %v1114, %v1115
      %v1117 = vrot.slane %v1087, 5
      %v1118 = vrot.slane %v1117, 4
      %v1119 = vrot.slane %v844, 5
      %v1120 = vsel %vm553, %v1118, %v1119
      %v1121 = vrot.slane %v1088, 5
      %v1122 = vrot.slane %v1121, 4
      %v1123 = vrot.slane %v846, 5
      %v1124 = vsel %vm553, %v1122, %v1123
      %v1125 = vrot.slane %v1089, 5
      %v1126 = vrot.slane %v1125, 4
      %v1127 = vrot.slane %v848, 5
      %v1128 = vsel %vm553, %v1126, %v1127
      %v1129 = vrot.slane %v1090, 5
      %v1130 = vrot.slane %v1129, 4
      %v1131 = vrot.slane %v850, 5
      %v1132 = vsel %vm553, %v1130, %v1131
      %v1133 = vrot.slane %v1091, 5
      %v1134 = vrot.slane %v1133, 4
      %v1135 = vrot.slane %v852, 5
      %v1136 = vsel %vm553, %v1134, %v1135
      %v1137 = vrot.slane %v1092, 5
      %v1138 = vrot.slane %v1137, 4
      %v1139 = vrot.slane %v854, 5
      %v1140 = vsel %vm553, %v1138, %v1139
      %s1141 = scalar_lea.vmem %s1, 320
      %v1142 = vld [vmem:[%s1141] sm:$0xf]
      %v1143 = vld [vmem:[%s1141 + $0x4] sm:$0xf]
      %v1144 = vld [vmem:[%s1141 + $0x8] sm:$0xf]
      %v1145 = vld [vmem:[%s1141 + $0xc] sm:$0xf]
      %v1146 = vld [vmem:[%s1141 + $0x10] sm:$0xf]
      %v1147 = vld [vmem:[%s1141 + $0x14] sm:$0xf]
      %v1148 = vld [vmem:[%s1141 + $0x18] sm:$0xf]
      %v1149 = vld [vmem:[%s1141 + $0x1c] sm:$0xf]
      %v1150 = vld [vmem:[%s1141 + $0x20] sm:$0xf]
      %v1151 = vld [vmem:[%s1141 + $0x24] sm:$0xf]
      %v1152 = vld [vmem:[%s1141 + $0x28] sm:$0xf]
      %v1153 = vld [vmem:[%s1141 + $0x2c] sm:$0xf]
      %v1154 = vld [vmem:[%s1141 + $0x30] sm:$0xf]
      %v1155 = vld [vmem:[%s1141 + $0x34] sm:$0xf]
      %v1156 = vld [vmem:[%s1141 + $0x38] sm:$0xf]
      %v1157 = vld [vmem:[%s1141 + $0x3c] sm:$0xf]
      %v1158 = vunpack.c.l.b16 %v1112
      %v1159 = vunpack.c.l.b16 %v1116
      %v1160 = vunpack.c.l.b16 %v1120
      %v1161 = vunpack.c.l.b16 %v1124
      %v1162 = vunpack.c.l.b16 %v1128
      %v1163 = vunpack.c.l.b16 %v1132
      %v1164 = vunpack.c.l.b16 %v1136
      %v1165 = vunpack.c.l.b16 %v1140
      %v1166 = vpack.c.b16 %v1159, %v1158
      %v1167 = vpack.c.b16 %v1161, %v1160
      %v1168 = vpack.c.b16 %v1163, %v1162
      %v1169 = vpack.c.b16 %v1165, %v1164
      %v1190 = vunpack.c.l.b16 %v1142
      %v1191 = vunpack.c.l.b16 %v1143
      %v1192 = vunpack.c.l.b16 %v1144
      %v1193 = vunpack.c.l.b16 %v1145
      %v1194 = vunpack.c.l.b16 %v1146
      %v1195 = vunpack.c.l.b16 %v1147
      %v1196 = vunpack.c.l.b16 %v1148
      %v1197 = vunpack.c.l.b16 %v1149
      %v1198 = vunpack.c.l.b16 %v1150
      %v1199 = vunpack.c.l.b16 %v1151
      %v1200 = vunpack.c.l.b16 %v1152
      %v1201 = vunpack.c.l.b16 %v1153
      %v1202 = vunpack.c.l.b16 %v1154
      %v1203 = vunpack.c.l.b16 %v1155
      %v1204 = vunpack.c.l.b16 %v1156
      %v1205 = vunpack.c.l.b16 %v1157
      %v1206 = vpack.c.b16 %v1191, %v1190
      %v1207 = vpack.c.b16 %v1193, %v1192
      %v1208 = vpack.c.b16 %v1195, %v1194
      %v1209 = vpack.c.b16 %v1197, %v1196
      %v1210 = vpack.c.b16 %v1199, %v1198
      %v1211 = vpack.c.b16 %v1201, %v1200
      %v1212 = vpack.c.b16 %v1203, %v1202
      %v1213 = vpack.c.b16 %v1205, %v1204
      %1222 = vmatpush.bf16.msra.mxu0 %v1213
      %1223 = vmatpush.bf16.msra.mxu0 %v1212
      %1224 = vmatpush.bf16.msra.mxu0 %v1211
      %1225 = vmatpush.bf16.msra.mxu0 %v1210
      %1226 = vmatpush.bf16.msra.mxu0 %v1209
      %1227 = vmatpush.bf16.msra.mxu0 %v1208
      %1228 = vmatpush.bf16.msra.mxu0 %v1207
      %1229 = vmatpush.bf16.msra.mxu0 %v1206
      %1230 = vmatmul.bf16.gmra.mxu0 %v1166
      %v1231 = vpop.f32.mrf.mxu0
      %v1232 = vadd.f32 0.0, %v1231
      %v1233 = vpop.f32.mrf.mxu0
      %v1234 = vadd.f32 0.0, %v1233
      %1235 = vmatmul.bf16.gmra.mxu0 %v1167
      %v1236 = vpop.f32.mrf.mxu0
      %v1237 = vadd.f32 0.0, %v1236
      %v1238 = vpop.f32.mrf.mxu0
      %v1239 = vadd.f32 0.0, %v1238
      %1240 = vmatmul.bf16.gmra.mxu0 %v1168
      %v1241 = vpop.f32.mrf.mxu0
      %v1242 = vadd.f32 0.0, %v1241
      %v1243 = vpop.f32.mrf.mxu0
      %v1244 = vadd.f32 0.0, %v1243
      %1245 = vmatmul.bf16.gmra.mxu0 %v1169
      %v1246 = vpop.f32.mrf.mxu0
      %v1247 = vadd.f32 0.0, %v1246
      %v1248 = vpop.f32.mrf.mxu0
      %v1249 = vadd.f32 0.0, %v1248
      %1250 = vdwg.mxu0
      %v1251 = vadd.f32 %v1077, %v1232
      %v1252 = vadd.f32 %v1078, %v1234
      %v1253 = vadd.f32 %v1079, %v1237
      %v1254 = vadd.f32 %v1080, %v1239
      %v1255 = vadd.f32 %v1081, %v1242
      %v1256 = vadd.f32 %v1082, %v1244
      %v1257 = vadd.f32 %v1083, %v1247
      %v1258 = vadd.f32 %v1084, %v1249
      %s1259 = scalar_lea.vmem %s163, 16
      %v1260 = vld [vmem:[%s1259] sm:$0xf]
      %v1261 = vld [vmem:[%s1259 + $0x8] sm:$0xf]
      %v1262 = vld [vmem:[%s1259 + $0x10] sm:$0xf]
      %v1263 = vld [vmem:[%s1259 + $0x18] sm:$0xf]
      %v1264 = vld [vmem:[%s1259 + $0x20] sm:$0xf]
      %v1265 = vld [vmem:[%s1259 + $0x28] sm:$0xf]
      %v1266 = vld [vmem:[%s1259 + $0x30] sm:$0xf]
      %v1267 = vld [vmem:[%s1259 + $0x38] sm:$0xf]
      %s1268 = scalar_lea.vmem %s1, 384
      %v1269 = vld [vmem:[%s1268] sm:$0xf]
      %v1270 = vld [vmem:[%s1268 + $0x4] sm:$0xf]
      %v1271 = vld [vmem:[%s1268 + $0x8] sm:$0xf]
      %v1272 = vld [vmem:[%s1268 + $0xc] sm:$0xf]
      %v1273 = vld [vmem:[%s1268 + $0x10] sm:$0xf]
      %v1274 = vld [vmem:[%s1268 + $0x14] sm:$0xf]
      %v1275 = vld [vmem:[%s1268 + $0x18] sm:$0xf]
      %v1276 = vld [vmem:[%s1268 + $0x1c] sm:$0xf]
      %v1277 = vld [vmem:[%s1268 + $0x20] sm:$0xf]
      %v1278 = vld [vmem:[%s1268 + $0x24] sm:$0xf]
      %v1279 = vld [vmem:[%s1268 + $0x28] sm:$0xf]
      %v1280 = vld [vmem:[%s1268 + $0x2c] sm:$0xf]
      %v1281 = vld [vmem:[%s1268 + $0x30] sm:$0xf]
      %v1282 = vld [vmem:[%s1268 + $0x34] sm:$0xf]
      %v1283 = vld [vmem:[%s1268 + $0x38] sm:$0xf]
      %v1284 = vld [vmem:[%s1268 + $0x3c] sm:$0xf]
      %v1293 = vunpack.c.l.b16 %v1260
      %v1294 = vunpack.c.l.b16 %v1261
      %v1295 = vunpack.c.l.b16 %v1262
      %v1296 = vunpack.c.l.b16 %v1263
      %v1297 = vunpack.c.l.b16 %v1264
      %v1298 = vunpack.c.l.b16 %v1265
      %v1299 = vunpack.c.l.b16 %v1266
      %v1300 = vunpack.c.l.b16 %v1267
      %v1301 = vpack.c.b16 %v1294, %v1293
      %v1302 = vpack.c.b16 %v1296, %v1295
      %v1303 = vpack.c.b16 %v1298, %v1297
      %v1304 = vpack.c.b16 %v1300, %v1299
      %v1325 = vunpack.c.l.b16 %v1269
      %v1326 = vunpack.c.l.b16 %v1270
      %v1327 = vunpack.c.l.b16 %v1271
      %v1328 = vunpack.c.l.b16 %v1272
      %v1329 = vunpack.c.l.b16 %v1273
      %v1330 = vunpack.c.l.b16 %v1274
      %v1331 = vunpack.c.l.b16 %v1275
      %v1332 = vunpack.c.l.b16 %v1276
      %v1333 = vunpack.c.l.b16 %v1277
      %v1334 = vunpack.c.l.b16 %v1278
      %v1335 = vunpack.c.l.b16 %v1279
      %v1336 = vunpack.c.l.b16 %v1280
      %v1337 = vunpack.c.l.b16 %v1281
      %v1338 = vunpack.c.l.b16 %v1282
      %v1339 = vunpack.c.l.b16 %v1283
      %v1340 = vunpack.c.l.b16 %v1284
      %v1341 = vpack.c.b16 %v1326, %v1325
      %v1342 = vpack.c.b16 %v1328, %v1327
      %v1343 = vpack.c.b16 %v1330, %v1329
      %v1344 = vpack.c.b16 %v1332, %v1331
      %v1345 = vpack.c.b16 %v1334, %v1333
      %v1346 = vpack.c.b16 %v1336, %v1335
      %v1347 = vpack.c.b16 %v1338, %v1337
      %v1348 = vpack.c.b16 %v1340, %v1339
      %1357 = vmatpush.bf16.msra.mxu0 %v1348
      %1358 = vmatpush.bf16.msra.mxu0 %v1347
      %1359 = vmatpush.bf16.msra.mxu0 %v1346
      %1360 = vmatpush.bf16.msra.mxu0 %v1345
      %1361 = vmatpush.bf16.msra.mxu0 %v1344
      %1362 = vmatpush.bf16.msra.mxu0 %v1343
      %1363 = vmatpush.bf16.msra.mxu0 %v1342
      %1364 = vmatpush.bf16.msra.mxu0 %v1341
      %1365 = vmatmul.bf16.gmra.mxu0 %v1301
      %v1366 = vpop.f32.mrf.mxu0
      %v1367 = vadd.f32 0.0, %v1366
      %v1368 = vpop.f32.mrf.mxu0
      %v1369 = vadd.f32 0.0, %v1368
      %1370 = vmatmul.bf16.gmra.mxu0 %v1302
      %v1371 = vpop.f32.mrf.mxu0
      %v1372 = vadd.f32 0.0, %v1371
      %v1373 = vpop.f32.mrf.mxu0
      %v1374 = vadd.f32 0.0, %v1373
      %1375 = vmatmul.bf16.gmra.mxu0 %v1303
      %v1376 = vpop.f32.mrf.mxu0
      %v1377 = vadd.f32 0.0, %v1376
      %v1378 = vpop.f32.mrf.mxu0
      %v1379 = vadd.f32 0.0, %v1378
      %1380 = vmatmul.bf16.gmra.mxu0 %v1304
      %v1381 = vpop.f32.mrf.mxu0
      %v1382 = vadd.f32 0.0, %v1381
      %v1383 = vpop.f32.mrf.mxu0
      %v1384 = vadd.f32 0.0, %v1383
      %1385 = vdwg.mxu0
      %v1386 = vadd.f32 %v1251, %v1367
      %v1387 = vadd.f32 %v1252, %v1369
      %v1388 = vadd.f32 %v1253, %v1372
      %v1389 = vadd.f32 %v1254, %v1374
      %v1390 = vadd.f32 %v1255, %v1377
      %v1391 = vadd.f32 %v1256, %v1379
      %v1392 = vadd.f32 %v1257, %v1382
      %v1393 = vadd.f32 %v1258, %v1384
      %v1394 = vld [vmem:[%s1259] sm:$0xf]
      %v1395 = vld [vmem:[%s1259 + $0x4] sm:$0x1]
      %v1396 = vld [vmem:[%s1259 + $0x8] sm:$0xf]
      %v1397 = vld [vmem:[%s1259 + $0xc] sm:$0x1]
      %v1398 = vld [vmem:[%s1259 + $0x10] sm:$0xf]
      %v1399 = vld [vmem:[%s1259 + $0x14] sm:$0x1]
      %v1400 = vld [vmem:[%s1259 + $0x18] sm:$0xf]
      %v1401 = vld [vmem:[%s1259 + $0x1c] sm:$0x1]
      %v1402 = vld [vmem:[%s1259 + $0x20] sm:$0xf]
      %v1403 = vld [vmem:[%s1259 + $0x24] sm:$0x1]
      %v1404 = vld [vmem:[%s1259 + $0x28] sm:$0xf]
      %v1405 = vld [vmem:[%s1259 + $0x2c] sm:$0x1]
      %v1406 = vld [vmem:[%s1259 + $0x30] sm:$0xf]
      %v1407 = vld [vmem:[%s1259 + $0x34] sm:$0x1]
      %v1408 = vld [vmem:[%s1259 + $0x38] sm:$0xf]
      %v1409 = vld [vmem:[%s1259 + $0x3c] sm:$0x1]
      %v1411 = vshrl.u32 %v1394, 16
      %v1413 = vrot.slane %v1411, 4
      %v1414 = vshll.u32 %v1394, 16
      %v1416 = vrot.slane %v1414, 5
      %v1417 = vor.u32 %v1413, %v1416
      %v1418 = vrot.slane %v1417, 4
      %v1420 = vshll.u32 %v1395, 16
      %v1422 = vrot.slane %v1420, 5
      %v1423 = vsel %vm203, %v1418, %v1422
      %v1425 = vshrl.u32 %v1396, 16
      %v1427 = vrot.slane %v1425, 4
      %v1428 = vshll.u32 %v1396, 16
      %v1430 = vrot.slane %v1428, 5
      %v1431 = vor.u32 %v1427, %v1430
      %v1432 = vrot.slane %v1431, 4
      %v1434 = vshll.u32 %v1397, 16
      %v1436 = vrot.slane %v1434, 5
      %v1437 = vsel %vm203, %v1432, %v1436
      %v1439 = vshrl.u32 %v1398, 16
      %v1441 = vrot.slane %v1439, 4
      %v1442 = vshll.u32 %v1398, 16
      %v1444 = vrot.slane %v1442, 5
      %v1445 = vor.u32 %v1441, %v1444
      %v1446 = vrot.slane %v1445, 4
      %v1448 = vshll.u32 %v1399, 16
      %v1450 = vrot.slane %v1448, 5
      %v1451 = vsel %vm203, %v1446, %v1450
      %v1453 = vshrl.u32 %v1400, 16
      %v1455 = vrot.slane %v1453, 4
      %v1456 = vshll.u32 %v1400, 16
      %v1458 = vrot.slane %v1456, 5
      %v1459 = vor.u32 %v1455, %v1458
      %v1460 = vrot.slane %v1459, 4
      %v1462 = vshll.u32 %v1401, 16
      %v1464 = vrot.slane %v1462, 5
      %v1465 = vsel %vm203, %v1460, %v1464
      %v1467 = vshrl.u32 %v1402, 16
      %v1469 = vrot.slane %v1467, 4
      %v1470 = vshll.u32 %v1402, 16
      %v1472 = vrot.slane %v1470, 5
      %v1473 = vor.u32 %v1469, %v1472
      %v1474 = vrot.slane %v1473, 4
      %v1476 = vshll.u32 %v1403, 16
      %v1478 = vrot.slane %v1476, 5
      %v1479 = vsel %vm203, %v1474, %v1478
      %v1481 = vshrl.u32 %v1404, 16
      %v1483 = vrot.slane %v1481, 4
      %v1484 = vshll.u32 %v1404, 16
      %v1486 = vrot.slane %v1484, 5
      %v1487 = vor.u32 %v1483, %v1486
      %v1488 = vrot.slane %v1487, 4
      %v1490 = vshll.u32 %v1405, 16
      %v1492 = vrot.slane %v1490, 5
      %v1493 = vsel %vm203, %v1488, %v1492
      %v1495 = vshrl.u32 %v1406, 16
      %v1497 = vrot.slane %v1495, 4
      %v1498 = vshll.u32 %v1406, 16
      %v1500 = vrot.slane %v1498, 5
      %v1501 = vor.u32 %v1497, %v1500
      %v1502 = vrot.slane %v1501, 4
      %v1504 = vshll.u32 %v1407, 16
      %v1506 = vrot.slane %v1504, 5
      %v1507 = vsel %vm203, %v1502, %v1506
      %v1509 = vshrl.u32 %v1408, 16
      %v1511 = vrot.slane %v1509, 4
      %v1512 = vshll.u32 %v1408, 16
      %v1514 = vrot.slane %v1512, 5
      %v1515 = vor.u32 %v1511, %v1514
      %v1516 = vrot.slane %v1515, 4
      %v1518 = vshll.u32 %v1409, 16
      %v1520 = vrot.slane %v1518, 5
      %v1521 = vsel %vm203, %v1516, %v1520
      %s1522 = scalar_lea.vmem %s1, 448
      %v1523 = vld [vmem:[%s1522] sm:$0xf]
      %v1524 = vld [vmem:[%s1522 + $0x4] sm:$0xf]
      %v1525 = vld [vmem:[%s1522 + $0x8] sm:$0xf]
      %v1526 = vld [vmem:[%s1522 + $0xc] sm:$0xf]
      %v1527 = vld [vmem:[%s1522 + $0x10] sm:$0xf]
      %v1528 = vld [vmem:[%s1522 + $0x14] sm:$0xf]
      %v1529 = vld [vmem:[%s1522 + $0x18] sm:$0xf]
      %v1530 = vld [vmem:[%s1522 + $0x1c] sm:$0xf]
      %v1531 = vld [vmem:[%s1522 + $0x20] sm:$0xf]
      %v1532 = vld [vmem:[%s1522 + $0x24] sm:$0xf]
      %v1533 = vld [vmem:[%s1522 + $0x28] sm:$0xf]
      %v1534 = vld [vmem:[%s1522 + $0x2c] sm:$0xf]
      %v1535 = vld [vmem:[%s1522 + $0x30] sm:$0xf]
      %v1536 = vld [vmem:[%s1522 + $0x34] sm:$0xf]
      %v1537 = vld [vmem:[%s1522 + $0x38] sm:$0xf]
      %v1538 = vld [vmem:[%s1522 + $0x3c] sm:$0xf]
      %v1539 = vunpack.c.l.b16 %v1423
      %v1540 = vunpack.c.l.b16 %v1437
      %v1541 = vunpack.c.l.b16 %v1451
      %v1542 = vunpack.c.l.b16 %v1465
      %v1543 = vunpack.c.l.b16 %v1479
      %v1544 = vunpack.c.l.b16 %v1493
      %v1545 = vunpack.c.l.b16 %v1507
      %v1546 = vunpack.c.l.b16 %v1521
      %v1547 = vpack.c.b16 %v1540, %v1539
      %v1548 = vpack.c.b16 %v1542, %v1541
      %v1549 = vpack.c.b16 %v1544, %v1543
      %v1550 = vpack.c.b16 %v1546, %v1545
      %v1571 = vunpack.c.l.b16 %v1523
      %v1572 = vunpack.c.l.b16 %v1524
      %v1573 = vunpack.c.l.b16 %v1525
      %v1574 = vunpack.c.l.b16 %v1526
      %v1575 = vunpack.c.l.b16 %v1527
      %v1576 = vunpack.c.l.b16 %v1528
      %v1577 = vunpack.c.l.b16 %v1529
      %v1578 = vunpack.c.l.b16 %v1530
      %v1579 = vunpack.c.l.b16 %v1531
      %v1580 = vunpack.c.l.b16 %v1532
      %v1581 = vunpack.c.l.b16 %v1533
      %v1582 = vunpack.c.l.b16 %v1534
      %v1583 = vunpack.c.l.b16 %v1535
      %v1584 = vunpack.c.l.b16 %v1536
      %v1585 = vunpack.c.l.b16 %v1537
      %v1586 = vunpack.c.l.b16 %v1538
      %v1587 = vpack.c.b16 %v1572, %v1571
      %v1588 = vpack.c.b16 %v1574, %v1573
      %v1589 = vpack.c.b16 %v1576, %v1575
      %v1590 = vpack.c.b16 %v1578, %v1577
      %v1591 = vpack.c.b16 %v1580, %v1579
      %v1592 = vpack.c.b16 %v1582, %v1581
      %v1593 = vpack.c.b16 %v1584, %v1583
      %v1594 = vpack.c.b16 %v1586, %v1585
      %1603 = vmatpush.bf16.msra.mxu0 %v1594
      %1604 = vmatpush.bf16.msra.mxu0 %v1593
      %1605 = vmatpush.bf16.msra.mxu0 %v1592
      %1606 = vmatpush.bf16.msra.mxu0 %v1591
      %1607 = vmatpush.bf16.msra.mxu0 %v1590
      %1608 = vmatpush.bf16.msra.mxu0 %v1589
      %1609 = vmatpush.bf16.msra.mxu0 %v1588
      %1610 = vmatpush.bf16.msra.mxu0 %v1587
      %1611 = vmatmul.bf16.gmra.mxu0 %v1547
      %v1612 = vpop.f32.mrf.mxu0
      %v1613 = vadd.f32 0.0, %v1612
      %v1614 = vpop.f32.mrf.mxu0
      %v1615 = vadd.f32 0.0, %v1614
      %1616 = vmatmul.bf16.gmra.mxu0 %v1548
      %v1617 = vpop.f32.mrf.mxu0
      %v1618 = vadd.f32 0.0, %v1617
      %v1619 = vpop.f32.mrf.mxu0
      %v1620 = vadd.f32 0.0, %v1619
      %1621 = vmatmul.bf16.gmra.mxu0 %v1549
      %v1622 = vpop.f32.mrf.mxu0
      %v1623 = vadd.f32 0.0, %v1622
      %v1624 = vpop.f32.mrf.mxu0
      %v1625 = vadd.f32 0.0, %v1624
      %1626 = vmatmul.bf16.gmra.mxu0 %v1550
      %v1627 = vpop.f32.mrf.mxu0
      %v1628 = vadd.f32 0.0, %v1627
      %v1629 = vpop.f32.mrf.mxu0
      %v1630 = vadd.f32 0.0, %v1629
      %1631 = vdwg.mxu0
      %v1632 = vadd.f32 %v1386, %v1613
      %v1633 = vadd.f32 %v1387, %v1615
      %v1634 = vadd.f32 %v1388, %v1618
      %v1635 = vadd.f32 %v1389, %v1620
      %v1636 = vadd.f32 %v1390, %v1623
      %v1637 = vadd.f32 %v1391, %v1625
      %v1638 = vadd.f32 %v1392, %v1628
      %v1639 = vadd.f32 %v1393, %v1630
      %v1640 = vld [vmem:[%s1259] sm:$0xe]
      %v1641 = vld [vmem:[%s1259 + $0x8] sm:$0xe]
      %v1642 = vld [vmem:[%s1259 + $0x10] sm:$0xe]
      %v1643 = vld [vmem:[%s1259 + $0x18] sm:$0xe]
      %v1644 = vld [vmem:[%s1259 + $0x20] sm:$0xe]
      %v1645 = vld [vmem:[%s1259 + $0x28] sm:$0xe]
      %v1646 = vld [vmem:[%s1259 + $0x30] sm:$0xe]
      %v1647 = vld [vmem:[%s1259 + $0x38] sm:$0xe]
      %v1664 = vrot.slane %v1640, 5
      %v1665 = vrot.slane %v1664, 4
      %v1666 = vrot.slane %v1395, 5
      %v1667 = vsel %vm553, %v1665, %v1666
      %v1668 = vrot.slane %v1641, 5
      %v1669 = vrot.slane %v1668, 4
      %v1670 = vrot.slane %v1397, 5
      %v1671 = vsel %vm553, %v1669, %v1670
      %v1672 = vrot.slane %v1642, 5
      %v1673 = vrot.slane %v1672, 4
      %v1674 = vrot.slane %v1399, 5
      %v1675 = vsel %vm553, %v1673, %v1674
      %v1676 = vrot.slane %v1643, 5
      %v1677 = vrot.slane %v1676, 4
      %v1678 = vrot.slane %v1401, 5
      %v1679 = vsel %vm553, %v1677, %v1678
      %v1680 = vrot.slane %v1644, 5
      %v1681 = vrot.slane %v1680, 4
      %v1682 = vrot.slane %v1403, 5
      %v1683 = vsel %vm553, %v1681, %v1682
      %v1684 = vrot.slane %v1645, 5
      %v1685 = vrot.slane %v1684, 4
      %v1686 = vrot.slane %v1405, 5
      %v1687 = vsel %vm553, %v1685, %v1686
      %v1688 = vrot.slane %v1646, 5
      %v1689 = vrot.slane %v1688, 4
      %v1690 = vrot.slane %v1407, 5
      %v1691 = vsel %vm553, %v1689, %v1690
      %v1692 = vrot.slane %v1647, 5
      %v1693 = vrot.slane %v1692, 4
      %v1694 = vrot.slane %v1409, 5
      %v1695 = vsel %vm553, %v1693, %v1694
      %s1696 = scalar_lea.vmem %s1, 512
      %v1697 = vld [vmem:[%s1696] sm:$0xf]
      %v1698 = vld [vmem:[%s1696 + $0x4] sm:$0xf]
      %v1699 = vld [vmem:[%s1696 + $0x8] sm:$0xf]
      %v1700 = vld [vmem:[%s1696 + $0xc] sm:$0xf]
      %v1701 = vld [vmem:[%s1696 + $0x10] sm:$0xf]
      %v1702 = vld [vmem:[%s1696 + $0x14] sm:$0xf]
      %v1703 = vld [vmem:[%s1696 + $0x18] sm:$0xf]
      %v1704 = vld [vmem:[%s1696 + $0x1c] sm:$0xf]
      %v1705 = vld [vmem:[%s1696 + $0x20] sm:$0xf]
      %v1706 = vld [vmem:[%s1696 + $0x24] sm:$0xf]
      %v1707 = vld [vmem:[%s1696 + $0x28] sm:$0xf]
      %v1708 = vld [vmem:[%s1696 + $0x2c] sm:$0xf]
      %v1709 = vld [vmem:[%s1696 + $0x30] sm:$0xf]
      %v1710 = vld [vmem:[%s1696 + $0x34] sm:$0xf]
      %v1711 = vld [vmem:[%s1696 + $0x38] sm:$0xf]
      %v1712 = vld [vmem:[%s1696 + $0x3c] sm:$0xf]
      %v1713 = vunpack.c.l.b16 %v1667
      %v1714 = vunpack.c.l.b16 %v1671
      %v1715 = vunpack.c.l.b16 %v1675
      %v1716 = vunpack.c.l.b16 %v1679
      %v1717 = vunpack.c.l.b16 %v1683
      %v1718 = vunpack.c.l.b16 %v1687
      %v1719 = vunpack.c.l.b16 %v1691
      %v1720 = vunpack.c.l.b16 %v1695
      %v1721 = vpack.c.b16 %v1714, %v1713
      %v1722 = vpack.c.b16 %v1716, %v1715
      %v1723 = vpack.c.b16 %v1718, %v1717
      %v1724 = vpack.c.b16 %v1720, %v1719
      %v1745 = vunpack.c.l.b16 %v1697
      %v1746 = vunpack.c.l.b16 %v1698
      %v1747 = vunpack.c.l.b16 %v1699
      %v1748 = vunpack.c.l.b16 %v1700
      %v1749 = vunpack.c.l.b16 %v1701
      %v1750 = vunpack.c.l.b16 %v1702
      %v1751 = vunpack.c.l.b16 %v1703
      %v1752 = vunpack.c.l.b16 %v1704
      %v1753 = vunpack.c.l.b16 %v1705
      %v1754 = vunpack.c.l.b16 %v1706
      %v1755 = vunpack.c.l.b16 %v1707
      %v1756 = vunpack.c.l.b16 %v1708
      %v1757 = vunpack.c.l.b16 %v1709
      %v1758 = vunpack.c.l.b16 %v1710
      %v1759 = vunpack.c.l.b16 %v1711
      %v1760 = vunpack.c.l.b16 %v1712
      %v1761 = vpack.c.b16 %v1746, %v1745
      %v1762 = vpack.c.b16 %v1748, %v1747
      %v1763 = vpack.c.b16 %v1750, %v1749
      %v1764 = vpack.c.b16 %v1752, %v1751
      %v1765 = vpack.c.b16 %v1754, %v1753
      %v1766 = vpack.c.b16 %v1756, %v1755
      %v1767 = vpack.c.b16 %v1758, %v1757
      %v1768 = vpack.c.b16 %v1760, %v1759
      %1777 = vmatpush.bf16.msra.mxu0 %v1768
      %1778 = vmatpush.bf16.msra.mxu0 %v1767
      %1779 = vmatpush.bf16.msra.mxu0 %v1766
      %1780 = vmatpush.bf16.msra.mxu0 %v1765
      %1781 = vmatpush.bf16.msra.mxu0 %v1764
      %1782 = vmatpush.bf16.msra.mxu0 %v1763
      %1783 = vmatpush.bf16.msra.mxu0 %v1762
      %1784 = vmatpush.bf16.msra.mxu0 %v1761
      %1785 = vmatmul.bf16.gmra.mxu0 %v1721
      %v1786 = vpop.f32.mrf.mxu0
      %v1787 = vadd.f32 0.0, %v1786
      %v1788 = vpop.f32.mrf.mxu0
      %v1789 = vadd.f32 0.0, %v1788
      %1790 = vmatmul.bf16.gmra.mxu0 %v1722
      %v1791 = vpop.f32.mrf.mxu0
      %v1792 = vadd.f32 0.0, %v1791
      %v1793 = vpop.f32.mrf.mxu0
      %v1794 = vadd.f32 0.0, %v1793
      %1795 = vmatmul.bf16.gmra.mxu0 %v1723
      %v1796 = vpop.f32.mrf.mxu0
      %v1797 = vadd.f32 0.0, %v1796
      %v1798 = vpop.f32.mrf.mxu0
      %v1799 = vadd.f32 0.0, %v1798
      %1800 = vmatmul.bf16.gmra.mxu0 %v1724
      %v1801 = vpop.f32.mrf.mxu0
      %v1802 = vadd.f32 0.0, %v1801
      %v1803 = vpop.f32.mrf.mxu0
      %v1804 = vadd.f32 0.0, %v1803
      %1805 = vdwg.mxu0
      %v1806 = vadd.f32 %v1632, %v1787
      %v1807 = vadd.f32 %v1633, %v1789
      %v1808 = vadd.f32 %v1634, %v1792
      %v1809 = vadd.f32 %v1635, %v1794
      %v1810 = vadd.f32 %v1636, %v1797
      %v1811 = vadd.f32 %v1637, %v1799
      %v1812 = vadd.f32 %v1638, %v1802
      %v1813 = vadd.f32 %v1639, %v1804
      %v1814 = vpack.c.bf16 %v1806, %v1806
      %v1815 = vpack.c.bf16 %v1807, %v1807
      %v1816 = vpack.c.bf16 %v1808, %v1808
      %v1817 = vpack.c.bf16 %v1809, %v1809
      %v1818 = vpack.c.bf16 %v1810, %v1810
      %v1819 = vpack.c.bf16 %v1811, %v1811
      %v1820 = vpack.c.bf16 %v1812, %v1812
      %v1821 = vpack.c.bf16 %v1813, %v1813
      %1822 = vst [vmem:[%s168] sm:$0xf] %v1814
      %1823 = vst [vmem:[%s168 + $0x4] sm:$0xf] %v1815
      %1824 = vst [vmem:[%s168 + $0x8] sm:$0xf] %v1816
      %1825 = vst [vmem:[%s168 + $0xc] sm:$0xf] %v1817
      %1826 = vst [vmem:[%s168 + $0x10] sm:$0xf] %v1818
      %1827 = vst [vmem:[%s168 + $0x14] sm:$0xf] %v1819
      %1828 = vst [vmem:[%s168 + $0x18] sm:$0xf] %v1820
      %1829 = vst [vmem:[%s168 + $0x1c] sm:$0xf] %v1821
      %p1830 = scmp.eq.s32.totalorder %s15, 0
      // Predicated region
      $region29: #{basic_private_block.7} parent=27 // pred_check
        %p1831 = pneg %p1830
      $region30: #{basic_private_block.7} parent=27 // pred_check_branch
        %1833 = sbr.rel (%p1831) target = $region32
      $region31: #{basic_private_block.7} parent=27 // pred_region
        %1834 = vst [vmem:[%s3] sm:$0xff] 0.0
      $region32: #{basic_private_block.7} parent=27 // pred_fallthru
        _
      %v1835 = vadd.f32 %v1806, %v1807
      %v1836 = vadd.f32 %v1835, %v1808
      %v1837 = vadd.f32 %v1836, %v1809
      %v1838 = vadd.f32 %v1837, %v1810
      %v1839 = vadd.f32 %v1838, %v1811
      %v1840 = vadd.f32 %v1839, %v1812
      %v1841 = vadd.f32 %v1840, %v1813
      %v1842 = vrot.slane %v1841, 4
      %v1843 = vadd.f32 %v1841, %v1842
      %v1844 = vrot.slane %v1843, 2
      %v1845 = vadd.f32 %v1843, %v1844
      %v1846 = vrot.slane %v1845, 1
      %v1847 = vadd.f32 %v1845, %v1846
      %v1848 = vmul.f32 %v1806, %v1806
      %v1849 = vmul.f32 %v1807, %v1807
      %v1850 = vmul.f32 %v1808, %v1808
      %v1851 = vmul.f32 %v1809, %v1809
      %v1852 = vmul.f32 %v1810, %v1810
      %v1853 = vmul.f32 %v1811, %v1811
      %v1854 = vmul.f32 %v1812, %v1812
      %v1855 = vmul.f32 %v1813, %v1813
      %v1856 = vadd.f32 %v1848, %v1849
      %v1857 = vadd.f32 %v1856, %v1850
      %v1858 = vadd.f32 %v1857, %v1851
      %v1859 = vadd.f32 %v1858, %v1852
      %v1860 = vadd.f32 %v1859, %v1853
      %v1861 = vadd.f32 %v1860, %v1854
      %v1862 = vadd.f32 %v1861, %v1855
      %v1863 = vrot.slane %v1862, 4
      %v1864 = vadd.f32 %v1862, %v1863
      %v1865 = vrot.slane %v1864, 2
      %v1866 = vadd.f32 %v1864, %v1865
      %v1867 = vrot.slane %v1866, 1
      %v1868 = vadd.f32 %v1866, %v1867
      %v1869 = vld [vmem:[%s3] sm:$0xff]
      %vm1870 = vcmask 1040384
      %v1871 = vsel %vm1870, %v1847, %v1868
      %vm1872 = vcmask 1041408
      %v1873 = vsel %vm1872, %v1871, 0.0
      %v1874 = vadd.f32 %v1869, %v1873
      %1875 = vst [vmem:[%s3] sm:$0xff] %v1874
      %p1876 = scmp.lt.s32.totalorder %s15, 1
      %s1877 = scalar_select %p1876, %s15, 1
      %s1878 = smul.addr %s1877, 8
      %s1879 = smul.addr %s1878, 4
      %s1880 = scalar_lea.vmem %s2, %s1879
      // Predicated region
      $region33: #{basic_private_block.7} parent=27 // pred_check
        %p1881 = pneg %p80
      $region34: #{basic_private_block.7} parent=27 // pred_check_branch
        %1883 = sbr.rel (%p1881) target = $region36
      $region35: #{basic_private_block.7} parent=27 // pred_region
        _
      $region36: #{basic_private_block.7} parent=27 // pred_fallthru
        _
      // Predicated region
      $region37: #{basic_private_block.7} parent=27 // pred_check
        %p1884 = pneg %p101
      $region38: #{basic_private_block.7} parent=27 // pred_check_branch
        %1886 = sbr.rel (%p1884) target = $region40
      $region39: #{basic_private_block.7} parent=27 // pred_region
        _
      $region40: #{basic_private_block.7} parent=27 // pred_fallthru
        _
      // Predicated region
      $region41: #{basic_private_block.7} parent=27 // pred_check
        %p1887 = pneg %p101
      $region42: #{basic_private_block.7} parent=27 // pred_check_branch
        %1889 = sbr.rel (%p1887) target = $region44
      $region43: #{basic_private_block.7} parent=27 // pred_region
        _
      $region44: #{basic_private_block.7} parent=27 // pred_fallthru
        _
    $region28: #{basic_private_block.7} parent=5 // pred_fallthru
      _
    %p1890 = scmp.le.s32.totalorder 2, %s10
    // Predicated region
    $region45: #{basic_private_block.7} parent=5 // pred_check
      %p1891 = pneg %p1890
    $region46: #{basic_private_block.7} parent=5 // pred_check_branch
      %1893 = sbr.rel (%p1891) target = $region48
    $region47: #{basic_private_block.7} parent=5 // pred_region
      %s1894 = ssub.s32 %s10, 2
      // Predicated region
      $region49: #{basic_private_block.7} parent=47 // pred_check
        %p1895 = pneg %p86
      $region50: #{basic_private_block.7} parent=47 // pred_check_branch
        %1897 = sbr.rel (%p1895) target = $region52
      $region51: #{basic_private_block.7} parent=47 // pred_region
        %p1898 = scmp.lt.s32.totalorder %s16, 1
        %s1899 = scalar_select %p1898, %s16, 1
        %s1900 = smul.addr %s1899, 8
        %s1901 = smul.addr %s1900, 4
        %s1902 = scalar_lea.vmem %s2, %s1901
      $region52: #{basic_private_block.7} parent=47 // pred_fallthru
        _
    $region48: #{basic_private_block.7} parent=5 // pred_fallthru
      _
  $region6: #{basic_private_block.7} parent=0 // loop_footer
    %s14 = sadd.s32 1, %s10
  $region7: #{basic_private_block.7} parent=0 // loop_footer_branch
    %9 = sbr.rel target = $region3
  $region8: #{basic_private_block.7} parent=0 // loop_exit
    _

</llo_original>
